<compile_context>
chip_gen: v7x
topology: tpu7x:2x2x1
jax: 0.10.0
libtpu: 0.0.40
codegen_flags: <defaults>
</compile_context>

<pallas_src>
import jax
import jax.numpy as jnp
from jax import lax
from jax.experimental import pallas as pl
from jax.experimental.pallas import tpu as pltpu

DIM_X = 3
FILTER = 128
LAYER_SIZE = 8                 # Linear layers before the final projection
NUM_HIDDEN = LAYER_SIZE - 1    # 7 hidden 128->128 layers
CHUNK = 256                    # rows per inner iteration (bounds vreg pressure)
TM_MAX = 1024                  # max point rows per grid step


def mlp_kernel(x_ref, w1_ref, b1_ref, wh_ref, bh_ref, wo_ref, bo_ref, o_ref):
    tm = x_ref.shape[0]
    n_chunks = tm // CHUNK      # static

    def body(c, carry):
        off = pl.multiple_of(c * CHUNK, CHUNK)
        x = x_ref[pl.ds(off, CHUNK), :]                          # (CHUNK, 3) f32

        # first layer, K=3: three VPU broadcast-FMAs (MXU pass would be ~97% wasted)
        h = (x[:, 0:1] * w1_ref[0:1, :]
             + x[:, 1:2] * w1_ref[1:2, :]
             + x[:, 2:3] * w1_ref[2:3, :]
             + b1_ref[...])
        h = jnp.maximum(h, 0.0)                                   # (CHUNK, 128) f32

        # 7 hidden layers: bf16 MXU matmuls, f32 accumulation, f32 bias+ReLU
        for i in range(NUM_HIDDEN):
            h = jnp.dot(h.astype(jnp.bfloat16), wh_ref[i],
                        preferred_element_type=jnp.float32)
            h = jnp.maximum(h + bh_ref[pl.ds(i, 1), :], 0.0)

        # output projection, N=3: per-lane multiply + cross-lane reduce (VPU+XLU)
        cols = [jnp.sum(h * wo_ref[pl.ds(j, 1), :], axis=-1, keepdims=True)
                for j in range(DIM_X)]
        out = jnp.concatenate(cols, axis=-1) + bo_ref[...]        # (CHUNK, 3) f32

        o_ref[pl.ds(off, CHUNK), :] = out.astype(o_ref.dtype)
        return carry

    lax.fori_loop(0, n_chunks, body, 0)


def init_params(key):
    """Deterministic params matching the nn.Linear layers of Neural_Prior."""
    ks = jax.random.split(key, 6)

    def uniform(k, shape, fan_in):
        bound = 1.0 / jnp.sqrt(float(fan_in))
        return jax.random.uniform(k, shape, jnp.float32, -bound, bound)

    w1 = uniform(ks[0], (DIM_X, FILTER), DIM_X)                  # Linear(3,128).weight^T, f32
    b1 = uniform(ks[1], (1, FILTER), DIM_X)                      # Linear(3,128).bias, f32
    wh = uniform(ks[2], (NUM_HIDDEN, FILTER, FILTER), FILTER)    # 7x Linear(128,128).weight^T
    wh = wh.astype(jnp.bfloat16)                                 # bf16 for MXU
    bh = uniform(ks[3], (NUM_HIDDEN, FILTER), FILTER)            # 7x Linear(128,128).bias, f32
    wo = uniform(ks[4], (DIM_X, FILTER), FILTER)                 # Linear(128,3).weight, f32
    bo = uniform(ks[5], (1, DIM_X), FILTER)                      # Linear(128,3).bias, f32
    return w1, b1, wh, bh, wo, bo


def neural_prior_forward(x, params):
    """x: [B, N, 3] float32 -> [B, N, 3] float32"""
    w1, b1, wh, bh, wo, bo = params
    B, N, _ = x.shape
    M = B * N
    x2 = x.reshape(M, DIM_X).astype(jnp.float32)

    # point tile: as large as possible (<= TM_MAX), multiple of CHUNK; pad M up.
    tm = min(TM_MAX, pl.cdiv(M, CHUNK) * CHUNK)
    m_pad = pl.cdiv(M, tm) * tm
    if m_pad != M:
        x2 = jnp.pad(x2, ((0, m_pad - M), (0, 0)))
    grid = (m_pad // tm,)

    flops = 2 * m_pad * (DIM_X * FILTER + NUM_HIDDEN * FILTER * FILTER
                         + FILTER * DIM_X)
    bytes_accessed = (x2.size * 4 + m_pad * DIM_X * 4
                      + w1.size * 4 + b1.size * 4 + wh.size * 2 + bh.size * 4
                      + wo.size * 4 + bo.size * 4)

    out = pl.pallas_call(
        mlp_kernel,
        out_shape=jax.ShapeDtypeStruct((m_pad, DIM_X), jnp.float32),
        grid_spec=pltpu.PrefetchScalarGridSpec(
            num_scalar_prefetch=0,
            grid=grid,
            in_specs=[
                pl.BlockSpec((tm, DIM_X), lambda i: (i, 0)),               # x tile
                pl.BlockSpec((DIM_X, FILTER), lambda i: (0, 0)),           # w1 (3,128) f32
                pl.BlockSpec((1, FILTER), lambda i: (0, 0)),               # b1
                pl.BlockSpec((NUM_HIDDEN, FILTER, FILTER),
                             lambda i: (0, 0, 0)),                         # wh bf16
                pl.BlockSpec((NUM_HIDDEN, FILTER), lambda i: (0, 0)),      # bh
                pl.BlockSpec((DIM_X, FILTER), lambda i: (0, 0)),           # wo (3,128) f32
                pl.BlockSpec((1, DIM_X), lambda i: (0, 0)),                # bo
            ],
            out_specs=pl.BlockSpec((tm, DIM_X), lambda i: (i, 0)),
        ),
        compiler_params=pltpu.CompilerParams(
            dimension_semantics=("parallel",)),
        cost_estimate=pl.CostEstimate(flops=flops, transcendentals=0,
                                      bytes_accessed=bytes_accessed),
    )(x2, w1, b1, wh, bh, wo, bo)

    return out[:M].reshape(B, N, DIM_X)


def neural_prior_ref(x, params):
    """Pure-JAX reference mirroring the kernel's numerics (bf16 hidden matmuls)."""
    w1, b1, wh, bh, wo, bo = params
    h = (x[..., 0:1] * w1[0] + x[..., 1:2] * w1[1] + x[..., 2:3] * w1[2] + b1[0])
    h = jnp.maximum(h, 0.0)
    for i in range(NUM_HIDDEN):
        h = jnp.dot(h.astype(jnp.bfloat16), wh[i],
                    preferred_element_type=jnp.float32)
        h = jnp.maximum(h + bh[i], 0.0)
    out = jnp.sum(h[..., None, :] * wo, axis=-1) + bo[0]
    return out


if __name__ == "__main__":
    key = jax.random.PRNGKey(0)
    kx, kp = jax.random.split(key)

    B, N = 2, 128   # small demo: 2 batches of 128 points with 3 coords each
    x = jax.random.normal(kx, (B, N, DIM_X), jnp.float32)
    params = init_params(kp)

    y = neural_prior_forward(x, params)
    y = jax.block_until_ready(y)

    y_ref = neural_prior_ref(x, params)
    assert y.shape == (B, N, DIM_X)
    assert jnp.allclose(y, y_ref, atol=1e-2, rtol=1e-2)

    print("KERNEL_OK")
</pallas_src>

<mosaic_0001>
module attributes {stable_mosaic.version = 11 : i64} {
  func.func @mlp_kernel(%arg0: i32, %arg1: memref<256x3xf32, #tpu.memory_space<vmem>>, %arg2: memref<3x128xf32, #tpu.memory_space<vmem>>, %arg3: memref<1x128xf32, #tpu.memory_space<vmem>>, %arg4: memref<7x128x128xbf16, #tpu.memory_space<vmem>>, %arg5: memref<7x128xf32, #tpu.memory_space<vmem>>, %arg6: memref<3x128xf32, #tpu.memory_space<vmem>>, %arg7: memref<1x3xf32, #tpu.memory_space<vmem>>, %arg8: memref<256x3xf32, #tpu.memory_space<vmem>>) attributes {dimension_semantics = [#tpu.dimension_semantics<parallel>], iteration_bounds = array<i64: 1>, scalar_prefetch = 0 : i64, scratch_operands = 0 : i64, tpu.core_type = #tpu.core_type<tc>, window_params = [{transform_indices = @transform_0, window_bounds = array<i64: 256, 3>}, {pipeline_mode = #tpu.pipeline_mode<synchronous>, transform_indices = @transform_1, window_bounds = array<i64: 3, 128>}, {pipeline_mode = #tpu.pipeline_mode<synchronous>, transform_indices = @transform_2, window_bounds = array<i64: 1, 128>}, {pipeline_mode = #tpu.pipeline_mode<synchronous>, transform_indices = @transform_3, window_bounds = array<i64: 7, 128, 128>}, {pipeline_mode = #tpu.pipeline_mode<synchronous>, transform_indices = @transform_4, window_bounds = array<i64: 7, 128>}, {pipeline_mode = #tpu.pipeline_mode<synchronous>, transform_indices = @transform_5, window_bounds = array<i64: 3, 128>}, {pipeline_mode = #tpu.pipeline_mode<synchronous>, transform_indices = @transform_6, window_bounds = array<i64: 1, 3>}, {transform_indices = @transform_7, window_bounds = array<i64: 256, 3>}]} {
    %c0_i32 = arith.constant 0 : i32
    %c256_i32 = arith.constant 256 : i32
    %0 = arith.muli %c0_i32, %c256_i32 : i32
    %1 = tpu.assume_multiple %0, 256 : i32
    %2 = arith.index_cast %1 : i32 to index
    %c0 = arith.constant 0 : index
    %3 = vector.load %arg1[%2, %c0] : memref<256x3xf32, #tpu.memory_space<vmem>>, vector<256x3xf32>
    %4 = vector.extract_strided_slice %3 {offsets = [0, 0], sizes = [256, 1], strides = [1, 1]} : vector<256x3xf32> to vector<256x1xf32>
    %c0_0 = arith.constant 0 : index
    %c0_1 = arith.constant 0 : index
    %5 = vector.load %arg2[%c0_0, %c0_1] : memref<3x128xf32, #tpu.memory_space<vmem>>, vector<1x128xf32>
    %6 = vector.broadcast %4 : vector<256x1xf32> to vector<256x128xf32>
    %7 = vector.broadcast %5 : vector<1x128xf32> to vector<256x128xf32>
    %8 = arith.mulf %6, %7 : vector<256x128xf32>
    %9 = vector.extract_strided_slice %3 {offsets = [0, 1], sizes = [256, 1], strides = [1, 1]} : vector<256x3xf32> to vector<256x1xf32>
    %c1 = arith.constant 1 : index
    %c0_2 = arith.constant 0 : index
    %10 = vector.load %arg2[%c1, %c0_2] : memref<3x128xf32, #tpu.memory_space<vmem>>, vector<1x128xf32>
    %11 = vector.broadcast %9 : vector<256x1xf32> to vector<256x128xf32>
    %12 = vector.broadcast %10 : vector<1x128xf32> to vector<256x128xf32>
    %13 = arith.mulf %11, %12 : vector<256x128xf32>
    %14 = arith.addf %8, %13 : vector<256x128xf32>
    %15 = vector.extract_strided_slice %3 {offsets = [0, 2], sizes = [256, 1], strides = [1, 1]} : vector<256x3xf32> to vector<256x1xf32>
    %c2 = arith.constant 2 : index
    %c0_3 = arith.constant 0 : index
    %16 = vector.load %arg2[%c2, %c0_3] : memref<3x128xf32, #tpu.memory_space<vmem>>, vector<1x128xf32>
    %17 = vector.broadcast %15 : vector<256x1xf32> to vector<256x128xf32>
    %18 = vector.broadcast %16 : vector<1x128xf32> to vector<256x128xf32>
    %19 = arith.mulf %17, %18 : vector<256x128xf32>
    %20 = arith.addf %14, %19 : vector<256x128xf32>
    %c0_4 = arith.constant 0 : index
    %c0_5 = arith.constant 0 : index
    %21 = vector.load %arg3[%c0_4, %c0_5] : memref<1x128xf32, #tpu.memory_space<vmem>>, vector<1x128xf32>
    %22 = vector.broadcast %21 : vector<1x128xf32> to vector<256x128xf32>
    %23 = arith.addf %20, %22 : vector<256x128xf32>
    %cst = arith.constant 0.000000e+00 : f32
    %24 = vector.broadcast %cst : f32 to vector<256x128xf32>
    %25 = arith.maximumf %23, %24 : vector<256x128xf32>
    %26 = arith.truncf %25 : vector<256x128xf32> to vector<256x128xbf16>
    %c0_6 = arith.constant 0 : index
    %c0_7 = arith.constant 0 : index
    %c0_8 = arith.constant 0 : index
    %27 = vector.load %arg4[%c0_6, %c0_7, %c0_8] : memref<7x128x128xbf16, #tpu.memory_space<vmem>>, vector<1x128x128xbf16>
    %28 = vector.shape_cast %27 : vector<1x128x128xbf16> to vector<128x128xbf16>
    %cst_9 = arith.constant dense<0.000000e+00> : vector<256x128xf32>
    %29 = tpu.matmul %26, %28, %cst_9 {dimension_numbers = #tpu.dot_dimension_numbers<[1], [0], [0], [1], [0, 0, 1, 1], [], []>} : vector<256x128xbf16>, vector<128x128xbf16>, vector<256x128xf32> -> vector<256x128xf32>
    %c0_10 = arith.constant 0 : index
    %c0_11 = arith.constant 0 : index
    %30 = vector.load %arg5[%c0_10, %c0_11] : memref<7x128xf32, #tpu.memory_space<vmem>>, vector<1x128xf32>
    %31 = vector.broadcast %30 : vector<1x128xf32> to vector<256x128xf32>
    %32 = arith.addf %29, %31 : vector<256x128xf32>
    %cst_12 = arith.constant 0.000000e+00 : f32
    %33 = vector.broadcast %cst_12 : f32 to vector<256x128xf32>
    %34 = arith.maximumf %32, %33 : vector<256x128xf32>
    %35 = arith.truncf %34 : vector<256x128xf32> to vector<256x128xbf16>
    %c1_13 = arith.constant 1 : index
    %c0_14 = arith.constant 0 : index
    %c0_15 = arith.constant 0 : index
    %36 = vector.load %arg4[%c1_13, %c0_14, %c0_15] : memref<7x128x128xbf16, #tpu.memory_space<vmem>>, vector<1x128x128xbf16>
    %37 = vector.shape_cast %36 : vector<1x128x128xbf16> to vector<128x128xbf16>
    %cst_16 = arith.constant dense<0.000000e+00> : vector<256x128xf32>
    %38 = tpu.matmul %35, %37, %cst_16 {dimension_numbers = #tpu.dot_dimension_numbers<[1], [0], [0], [1], [0, 0, 1, 1], [], []>} : vector<256x128xbf16>, vector<128x128xbf16>, vector<256x128xf32> -> vector<256x128xf32>
    %c1_17 = arith.constant 1 : index
    %c0_18 = arith.constant 0 : index
    %39 = vector.load %arg5[%c1_17, %c0_18] : memref<7x128xf32, #tpu.memory_space<vmem>>, vector<1x128xf32>
    %40 = vector.broadcast %39 : vector<1x128xf32> to vector<256x128xf32>
    %41 = arith.addf %38, %40 : vector<256x128xf32>
    %cst_19 = arith.constant 0.000000e+00 : f32
    %42 = vector.broadcast %cst_19 : f32 to vector<256x128xf32>
    %43 = arith.maximumf %41, %42 : vector<256x128xf32>
    %44 = arith.truncf %43 : vector<256x128xf32> to vector<256x128xbf16>
    %c2_20 = arith.constant 2 : index
    %c0_21 = arith.constant 0 : index
    %c0_22 = arith.constant 0 : index
    %45 = vector.load %arg4[%c2_20, %c0_21, %c0_22] : memref<7x128x128xbf16, #tpu.memory_space<vmem>>, vector<1x128x128xbf16>
    %46 = vector.shape_cast %45 : vector<1x128x128xbf16> to vector<128x128xbf16>
    %cst_23 = arith.constant dense<0.000000e+00> : vector<256x128xf32>
    %47 = tpu.matmul %44, %46, %cst_23 {dimension_numbers = #tpu.dot_dimension_numbers<[1], [0], [0], [1], [0, 0, 1, 1], [], []>} : vector<256x128xbf16>, vector<128x128xbf16>, vector<256x128xf32> -> vector<256x128xf32>
    %c2_24 = arith.constant 2 : index
    %c0_25 = arith.constant 0 : index
    %48 = vector.load %arg5[%c2_24, %c0_25] : memref<7x128xf32, #tpu.memory_space<vmem>>, vector<1x128xf32>
    %49 = vector.broadcast %48 : vector<1x128xf32> to vector<256x128xf32>
    %50 = arith.addf %47, %49 : vector<256x128xf32>
    %cst_26 = arith.constant 0.000000e+00 : f32
    %51 = vector.broadcast %cst_26 : f32 to vector<256x128xf32>
    %52 = arith.maximumf %50, %51 : vector<256x128xf32>
    %53 = arith.truncf %52 : vector<256x128xf32> to vector<256x128xbf16>
    %c3 = arith.constant 3 : index
    %c0_27 = arith.constant 0 : index
    %c0_28 = arith.constant 0 : index
    %54 = vector.load %arg4[%c3, %c0_27, %c0_28] : memref<7x128x128xbf16, #tpu.memory_space<vmem>>, vector<1x128x128xbf16>
    %55 = vector.shape_cast %54 : vector<1x128x128xbf16> to vector<128x128xbf16>
    %cst_29 = arith.constant dense<0.000000e+00> : vector<256x128xf32>
    %56 = tpu.matmul %53, %55, %cst_29 {dimension_numbers = #tpu.dot_dimension_numbers<[1], [0], [0], [1], [0, 0, 1, 1], [], []>} : vector<256x128xbf16>, vector<128x128xbf16>, vector<256x128xf32> -> vector<256x128xf32>
    %c3_30 = arith.constant 3 : index
    %c0_31 = arith.constant 0 : index
    %57 = vector.load %arg5[%c3_30, %c0_31] : memref<7x128xf32, #tpu.memory_space<vmem>>, vector<1x128xf32>
    %58 = vector.broadcast %57 : vector<1x128xf32> to vector<256x128xf32>
    %59 = arith.addf %56, %58 : vector<256x128xf32>
    %cst_32 = arith.constant 0.000000e+00 : f32
    %60 = vector.broadcast %cst_32 : f32 to vector<256x128xf32>
    %61 = arith.maximumf %59, %60 : vector<256x128xf32>
    %62 = arith.truncf %61 : vector<256x128xf32> to vector<256x128xbf16>
    %c4 = arith.constant 4 : index
    %c0_33 = arith.constant 0 : index
    %c0_34 = arith.constant 0 : index
    %63 = vector.load %arg4[%c4, %c0_33, %c0_34] : memref<7x128x128xbf16, #tpu.memory_space<vmem>>, vector<1x128x128xbf16>
    %64 = vector.shape_cast %63 : vector<1x128x128xbf16> to vector<128x128xbf16>
    %cst_35 = arith.constant dense<0.000000e+00> : vector<256x128xf32>
    %65 = tpu.matmul %62, %64, %cst_35 {dimension_numbers = #tpu.dot_dimension_numbers<[1], [0], [0], [1], [0, 0, 1, 1], [], []>} : vector<256x128xbf16>, vector<128x128xbf16>, vector<256x128xf32> -> vector<256x128xf32>
    %c4_36 = arith.constant 4 : index
    %c0_37 = arith.constant 0 : index
    %66 = vector.load %arg5[%c4_36, %c0_37] : memref<7x128xf32, #tpu.memory_space<vmem>>, vector<1x128xf32>
    %67 = vector.broadcast %66 : vector<1x128xf32> to vector<256x128xf32>
    %68 = arith.addf %65, %67 : vector<256x128xf32>
    %cst_38 = arith.constant 0.000000e+00 : f32
    %69 = vector.broadcast %cst_38 : f32 to vector<256x128xf32>
    %70 = arith.maximumf %68, %69 : vector<256x128xf32>
    %71 = arith.truncf %70 : vector<256x128xf32> to vector<256x128xbf16>
    %c5 = arith.constant 5 : index
    %c0_39 = arith.constant 0 : index
    %c0_40 = arith.constant 0 : index
    %72 = vector.load %arg4[%c5, %c0_39, %c0_40] : memref<7x128x128xbf16, #tpu.memory_space<vmem>>, vector<1x128x128xbf16>
    %73 = vector.shape_cast %72 : vector<1x128x128xbf16> to vector<128x128xbf16>
    %cst_41 = arith.constant dense<0.000000e+00> : vector<256x128xf32>
    %74 = tpu.matmul %71, %73, %cst_41 {dimension_numbers = #tpu.dot_dimension_numbers<[1], [0], [0], [1], [0, 0, 1, 1], [], []>} : vector<256x128xbf16>, vector<128x128xbf16>, vector<256x128xf32> -> vector<256x128xf32>
    %c5_42 = arith.constant 5 : index
    %c0_43 = arith.constant 0 : index
    %75 = vector.load %arg5[%c5_42, %c0_43] : memref<7x128xf32, #tpu.memory_space<vmem>>, vector<1x128xf32>
    %76 = vector.broadcast %75 : vector<1x128xf32> to vector<256x128xf32>
    %77 = arith.addf %74, %76 : vector<256x128xf32>
    %cst_44 = arith.constant 0.000000e+00 : f32
    %78 = vector.broadcast %cst_44 : f32 to vector<256x128xf32>
    %79 = arith.maximumf %77, %78 : vector<256x128xf32>
    %80 = arith.truncf %79 : vector<256x128xf32> to vector<256x128xbf16>
    %c6 = arith.constant 6 : index
    %c0_45 = arith.constant 0 : index
    %c0_46 = arith.constant 0 : index
    %81 = vector.load %arg4[%c6, %c0_45, %c0_46] : memref<7x128x128xbf16, #tpu.memory_space<vmem>>, vector<1x128x128xbf16>
    %82 = vector.shape_cast %81 : vector<1x128x128xbf16> to vector<128x128xbf16>
    %cst_47 = arith.constant dense<0.000000e+00> : vector<256x128xf32>
    %83 = tpu.matmul %80, %82, %cst_47 {dimension_numbers = #tpu.dot_dimension_numbers<[1], [0], [0], [1], [0, 0, 1, 1], [], []>} : vector<256x128xbf16>, vector<128x128xbf16>, vector<256x128xf32> -> vector<256x128xf32>
    %c6_48 = arith.constant 6 : index
    %c0_49 = arith.constant 0 : index
    %84 = vector.load %arg5[%c6_48, %c0_49] : memref<7x128xf32, #tpu.memory_space<vmem>>, vector<1x128xf32>
    %85 = vector.broadcast %84 : vector<1x128xf32> to vector<256x128xf32>
    %86 = arith.addf %83, %85 : vector<256x128xf32>
    %cst_50 = arith.constant 0.000000e+00 : f32
    %87 = vector.broadcast %cst_50 : f32 to vector<256x128xf32>
    %88 = arith.maximumf %86, %87 : vector<256x128xf32>
    %c0_51 = arith.constant 0 : index
    %c0_52 = arith.constant 0 : index
    %89 = vector.load %arg6[%c0_51, %c0_52] : memref<3x128xf32, #tpu.memory_space<vmem>>, vector<1x128xf32>
    %90 = vector.broadcast %89 : vector<1x128xf32> to vector<256x128xf32>
    %91 = arith.mulf %88, %90 : vector<256x128xf32>
    %cst_53 = arith.constant dense<0.000000e+00> : vector<256xf32>
    %92 = vector.multi_reduction <add>, %91, %cst_53 [1] : vector<256x128xf32> to vector<256xf32>
    %93 = vector.shape_cast %92 : vector<256xf32> to vector<256x1xf32>
    %c1_54 = arith.constant 1 : index
    %c0_55 = arith.constant 0 : index
    %94 = vector.load %arg6[%c1_54, %c0_55] : memref<3x128xf32, #tpu.memory_space<vmem>>, vector<1x128xf32>
    %95 = vector.broadcast %94 : vector<1x128xf32> to vector<256x128xf32>
    %96 = arith.mulf %88, %95 : vector<256x128xf32>
    %cst_56 = arith.constant dense<0.000000e+00> : vector<256xf32>
    %97 = vector.multi_reduction <add>, %96, %cst_56 [1] : vector<256x128xf32> to vector<256xf32>
    %98 = vector.shape_cast %97 : vector<256xf32> to vector<256x1xf32>
    %c2_57 = arith.constant 2 : index
    %c0_58 = arith.constant 0 : index
    %99 = vector.load %arg6[%c2_57, %c0_58] : memref<3x128xf32, #tpu.memory_space<vmem>>, vector<1x128xf32>
    %100 = vector.broadcast %99 : vector<1x128xf32> to vector<256x128xf32>
    %101 = arith.mulf %88, %100 : vector<256x128xf32>
    %cst_59 = arith.constant dense<0.000000e+00> : vector<256xf32>
    %102 = vector.multi_reduction <add>, %101, %cst_59 [1] : vector<256x128xf32> to vector<256xf32>
    %103 = vector.shape_cast %102 : vector<256xf32> to vector<256x1xf32>
    %104 = tpu.concatenate %93, %98, %103 in 1 : vector<256x1xf32>, vector<256x1xf32>, vector<256x1xf32> -> vector<256x3xf32>
    %c0_60 = arith.constant 0 : index
    %c0_61 = arith.constant 0 : index
    %105 = vector.load %arg7[%c0_60, %c0_61] : memref<1x3xf32, #tpu.memory_space<vmem>>, vector<1x3xf32>
    %106 = vector.broadcast %105 : vector<1x3xf32> to vector<256x3xf32>
    %107 = arith.addf %104, %106 : vector<256x3xf32>
    %108 = arith.index_cast %1 : i32 to index
    %c0_62 = arith.constant 0 : index
    %109 = vector.load %arg8[%108, %c0_62] : memref<256x3xf32, #tpu.memory_space<vmem>>, vector<256x3xf32>
    tpu.vector_store %arg8[%108, %c0_62], %107 {strides = array<i32>} : memref<256x3xf32, #tpu.memory_space<vmem>>, vector<256x3xf32>,
    %c1_i32 = arith.constant 1 : i32
    return
  }
  func.func @transform_0(%arg0: i32) -> (i32, i32) {
    %c0_i32 = arith.constant 0 : i32
    %c0_i32_0 = arith.constant 0 : i32
    return %arg0, %c0_i32 : i32, i32
  }
  func.func @transform_1(%arg0: i32) -> (i32, i32) {
    %c0_i32 = arith.constant 0 : i32
    %c0_i32_0 = arith.constant 0 : i32
    %c0_i32_1 = arith.constant 0 : i32
    return %c0_i32, %c0_i32_0 : i32, i32
  }
  func.func @transform_2(%arg0: i32) -> (i32, i32) {
    %c0_i32 = arith.constant 0 : i32
    %c0_i32_0 = arith.constant 0 : i32
    %c0_i32_1 = arith.constant 0 : i32
    return %c0_i32, %c0_i32_0 : i32, i32
  }
  func.func @transform_3(%arg0: i32) -> (i32, i32, i32) {
    %c0_i32 = arith.constant 0 : i32
    %c0_i32_0 = arith.constant 0 : i32
    %c0_i32_1 = arith.constant 0 : i32
    %c0_i32_2 = arith.constant 0 : i32
    return %c0_i32, %c0_i32_0, %c0_i32_1 : i32, i32, i32
  }
  func.func @transform_4(%arg0: i32) -> (i32, i32) {
    %c0_i32 = arith.constant 0 : i32
    %c0_i32_0 = arith.constant 0 : i32
    %c0_i32_1 = arith.constant 0 : i32
    return %c0_i32, %c0_i32_0 : i32, i32
  }
  func.func @transform_5(%arg0: i32) -> (i32, i32) {
    %c0_i32 = arith.constant 0 : i32
    %c0_i32_0 = arith.constant 0 : i32
    %c0_i32_1 = arith.constant 0 : i32
    return %c0_i32, %c0_i32_0 : i32, i32
  }
  func.func @transform_6(%arg0: i32) -> (i32, i32) {
    %c0_i32 = arith.constant 0 : i32
    %c0_i32_0 = arith.constant 0 : i32
    %c0_i32_1 = arith.constant 0 : i32
    return %c0_i32, %c0_i32_0 : i32, i32
  }
  func.func @transform_7(%arg0: i32) -> (i32, i32) {
    %c0_i32 = arith.constant 0 : i32
    %c0_i32_0 = arith.constant 0 : i32
    return %arg0, %c0_i32 : i32, i32
  }
}

</mosaic_0001>

<llo_original>
// kernel: tpu_custom_call.1
$region0: #{tpu_custom_call.1}
  #allocation0 [shape = 'u32[]', space=smem, size = 0x4, offset = 0x4, fixed_abs, tag = 'smem constant byte address 0x4 - core index']
  #allocation1 [shape = 'u32[144,128]{1,0:T(1,128)}', space=vmem, size = 0x12000, scoped, tag = 'internal scratch']
  %s0 = inlined_call_operand.vmem [shape: f32[256,3], index: 0, kind: input, shape index: {}]
  %s1 = inlined_call_operand.vmem [shape: f32[3,128], index: 1, kind: input, shape index: {}]
  %s2 = inlined_call_operand.vmem [shape: f32[1,128], index: 2, kind: input, shape index: {}]
  %s3 = inlined_call_operand.hbm [shape: bf16[7,128,128], index: 3, kind: input, shape index: {}]
  %s4 = inlined_call_operand.vmem [shape: f32[7,128], index: 4, kind: input, shape index: {}]
  %s5 = inlined_call_operand.vmem [shape: f32[3,128], index: 5, kind: input, shape index: {}]
  %s6 = inlined_call_operand.vmem [shape: f32[1,3], index: 6, kind: input, shape index: {}]
  %s7 = inlined_call_operand.vmem [shape: f32[256,3], index: 7, kind: output, shape index: {}]
  %s8 = sld [smem:[#allocation0]]
  $region42: #{tpu_custom_call.1} parent=0
    _
  %s10 = ssub.s32 1, %s8
  %s11 = scalar_select 0, %s10, %s8
  $region1: #{tpu_custom_call.1} parent=0
    #allocation2 [shape = 'u8[229376]{0}', space=vmem, size = 0x38000, scoped, tag = 'input window, operand 3, single buffered']
    #allocation3 [shape = 's32[1]{0}', space=sflag, size = 0x4, scoped, tag = 'scoped memory for tpu_custom_call.1']
    %12 = vsyncpa [#allocation3], 0
    // Predicated region
    $region2: #{tpu_custom_call.1} parent=1 // pred_check
      _
    $region3: #{tpu_custom_call.1} parent=1 // pred_check_branch
      %14 = sbr.rel (0) target = $region5
    $region4: #{tpu_custom_call.1} parent=1 // pred_region
      _
    $region5: #{tpu_custom_call.1} parent=1 // pred_fallthru
      _
    // Predicated region
    $region6: #{tpu_custom_call.1} parent=1 // pred_check
      _
    $region7: #{tpu_custom_call.1} parent=1 // pred_check_branch
      %16 = sbr.rel (0) target = $region9
    $region8: #{tpu_custom_call.1} parent=1 // pred_region
      _
    $region9: #{tpu_custom_call.1} parent=1 // pred_fallthru
      _
    // Predicated region
    $region10: #{tpu_custom_call.1} parent=1 // pred_check
      _
    $region11: #{tpu_custom_call.1} parent=1 // pred_check_branch
      %18 = sbr.rel (0) target = $region13
    $region12: #{tpu_custom_call.1} parent=1 // pred_region
      _
    $region13: #{tpu_custom_call.1} parent=1 // pred_fallthru
      _
    // Predicated region
    $region14: #{tpu_custom_call.1} parent=1 // pred_check
      _
    $region15: #{tpu_custom_call.1} parent=1 // pred_check_branch
      %20 = sbr.rel (0) target = $region17
    $region16: #{tpu_custom_call.1} parent=1 // pred_region
      %s22 = ssub.s32 7168, 7168
      %23 = vsyncadd [#allocation3], %s22
      %s24 = sshll.u32 [#allocation2], 4
      %s25 = int_to_ptr.vmem [resolvable:$true] %s24
      %30 = dma.hbm_to_vmem [thread:$0]  %s3, 7168, %s25, [#allocation3], 64, 64, 4
    $region17: #{tpu_custom_call.1} parent=1 // pred_fallthru
      _
    // Predicated region
    $region18: #{tpu_custom_call.1} parent=1 // pred_check
      _
    $region19: #{tpu_custom_call.1} parent=1 // pred_check_branch
      %32 = sbr.rel (0) target = $region21
    $region20: #{tpu_custom_call.1} parent=1 // pred_region
      _
    $region21: #{tpu_custom_call.1} parent=1 // pred_fallthru
      _
    // Predicated region
    $region22: #{tpu_custom_call.1} parent=1 // pred_check
      _
    $region23: #{tpu_custom_call.1} parent=1 // pred_check_branch
      %34 = sbr.rel (0) target = $region25
    $region24: #{tpu_custom_call.1} parent=1 // pred_region
      _
    $region25: #{tpu_custom_call.1} parent=1 // pred_fallthru
      _
    // Predicated region
    $region26: #{tpu_custom_call.1} parent=1 // pred_check
      _
    $region27: #{tpu_custom_call.1} parent=1 // pred_check_branch
      %36 = sbr.rel (0) target = $region29
    $region28: #{tpu_custom_call.1} parent=1 // pred_region
      _
    $region29: #{tpu_custom_call.1} parent=1 // pred_fallthru
      _
    // Predicated region
    $region30: #{tpu_custom_call.1} parent=1 // pred_check
      _
    $region31: #{tpu_custom_call.1} parent=1 // pred_check_branch
      %38 = sbr.rel (0) target = $region33
    $region32: #{tpu_custom_call.1} parent=1 // pred_region
      %39 = dma.done [#allocation3], 7168
    $region33: #{tpu_custom_call.1} parent=1 // pred_fallthru
      _
    %v41 = vld [vmem:[%s0] sm:$0xff]
    %v42 = vld [vmem:[%s0 + $0x8] sm:$0xff]
    %v43 = vld [vmem:[%s0 + $0x10] sm:$0xff]
    %v44 = vld [vmem:[%s0 + $0x18] sm:$0xff]
    %v45 = vld [vmem:[%s0 + $0x20] sm:$0xff]
    %v46 = vld [vmem:[%s0 + $0x28] sm:$0xff]
    %v47 = vld [vmem:[%s0 + $0x30] sm:$0xff]
    %v48 = vld [vmem:[%s0 + $0x38] sm:$0xff]
    %v49 = vld [vmem:[%s0 + $0x40] sm:$0xff]
    %v50 = vld [vmem:[%s0 + $0x48] sm:$0xff]
    %v51 = vld [vmem:[%s0 + $0x50] sm:$0xff]
    %v52 = vld [vmem:[%s0 + $0x58] sm:$0xff]
    %v53 = vld [vmem:[%s0 + $0x60] sm:$0xff]
    %v54 = vld [vmem:[%s0 + $0x68] sm:$0xff]
    %v55 = vld [vmem:[%s0 + $0x70] sm:$0xff]
    %v56 = vld [vmem:[%s0 + $0x78] sm:$0xff]
    %v57 = vld [vmem:[%s0 + $0x80] sm:$0xff]
    %v58 = vld [vmem:[%s0 + $0x88] sm:$0xff]
    %v59 = vld [vmem:[%s0 + $0x90] sm:$0xff]
    %v60 = vld [vmem:[%s0 + $0x98] sm:$0xff]
    %v61 = vld [vmem:[%s0 + $0xa0] sm:$0xff]
    %v62 = vld [vmem:[%s0 + $0xa8] sm:$0xff]
    %v63 = vld [vmem:[%s0 + $0xb0] sm:$0xff]
    %v64 = vld [vmem:[%s0 + $0xb8] sm:$0xff]
    %v65 = vld [vmem:[%s0 + $0xc0] sm:$0xff]
    %v66 = vld [vmem:[%s0 + $0xc8] sm:$0xff]
    %v67 = vld [vmem:[%s0 + $0xd0] sm:$0xff]
    %v68 = vld [vmem:[%s0 + $0xd8] sm:$0xff]
    %v69 = vld [vmem:[%s0 + $0xe0] sm:$0xff]
    %v70 = vld [vmem:[%s0 + $0xe8] sm:$0xff]
    %v71 = vld [vmem:[%s0 + $0xf0] sm:$0xff]
    %v72 = vld [vmem:[%s0 + $0xf8] sm:$0xff]
    %v73 = vld [vmem:[%s1] sm:$0x1]
    %75 = vset.pattern.permute.xlu0 0
    %76 = vperm.xlu0 %75, %v41
    %v77 = vpop.permute.xlu0 %76
    %80 = vset.pattern.permute.xlu0 0
    %81 = vperm.xlu0 %80, %v42
    %v82 = vpop.permute.xlu0 %81
    %85 = vset.pattern.permute.xlu0 0
    %86 = vperm.xlu0 %85, %v43
    %v87 = vpop.permute.xlu0 %86
    %90 = vset.pattern.permute.xlu0 0
    %91 = vperm.xlu0 %90, %v44
    %v92 = vpop.permute.xlu0 %91
    %95 = vset.pattern.permute.xlu0 0
    %96 = vperm.xlu0 %95, %v45
    %v97 = vpop.permute.xlu0 %96
    %100 = vset.pattern.permute.xlu0 0
    %101 = vperm.xlu0 %100, %v46
    %v102 = vpop.permute.xlu0 %101
    %105 = vset.pattern.permute.xlu0 0
    %106 = vperm.xlu0 %105, %v47
    %v107 = vpop.permute.xlu0 %106
    %110 = vset.pattern.permute.xlu0 0
    %111 = vperm.xlu0 %110, %v48
    %v112 = vpop.permute.xlu0 %111
    %115 = vset.pattern.permute.xlu0 0
    %116 = vperm.xlu0 %115, %v49
    %v117 = vpop.permute.xlu0 %116
    %120 = vset.pattern.permute.xlu0 0
    %121 = vperm.xlu0 %120, %v50
    %v122 = vpop.permute.xlu0 %121
    %125 = vset.pattern.permute.xlu0 0
    %126 = vperm.xlu0 %125, %v51
    %v127 = vpop.permute.xlu0 %126
    %130 = vset.pattern.permute.xlu0 0
    %131 = vperm.xlu0 %130, %v52
    %v132 = vpop.permute.xlu0 %131
    %135 = vset.pattern.permute.xlu0 0
    %136 = vperm.xlu0 %135, %v53
    %v137 = vpop.permute.xlu0 %136
    %140 = vset.pattern.permute.xlu0 0
    %141 = vperm.xlu0 %140, %v54
    %v142 = vpop.permute.xlu0 %141
    %145 = vset.pattern.permute.xlu0 0
    %146 = vperm.xlu0 %145, %v55
    %v147 = vpop.permute.xlu0 %146
    %150 = vset.pattern.permute.xlu0 0
    %151 = vperm.xlu0 %150, %v56
    %v152 = vpop.permute.xlu0 %151
    %155 = vset.pattern.permute.xlu0 0
    %156 = vperm.xlu0 %155, %v57
    %v157 = vpop.permute.xlu0 %156
    %160 = vset.pattern.permute.xlu0 0
    %161 = vperm.xlu0 %160, %v58
    %v162 = vpop.permute.xlu0 %161
    %165 = vset.pattern.permute.xlu0 0
    %166 = vperm.xlu0 %165, %v59
    %v167 = vpop.permute.xlu0 %166
    %170 = vset.pattern.permute.xlu0 0
    %171 = vperm.xlu0 %170, %v60
    %v172 = vpop.permute.xlu0 %171
    %175 = vset.pattern.permute.xlu0 0
    %176 = vperm.xlu0 %175, %v61
    %v177 = vpop.permute.xlu0 %176
    %180 = vset.pattern.permute.xlu0 0
    %181 = vperm.xlu0 %180, %v62
    %v182 = vpop.permute.xlu0 %181
    %185 = vset.pattern.permute.xlu0 0
    %186 = vperm.xlu0 %185, %v63
    %v187 = vpop.permute.xlu0 %186
    %190 = vset.pattern.permute.xlu0 0
    %191 = vperm.xlu0 %190, %v64
    %v192 = vpop.permute.xlu0 %191
    %195 = vset.pattern.permute.xlu0 0
    %196 = vperm.xlu0 %195, %v65
    %v197 = vpop.permute.xlu0 %196
    %200 = vset.pattern.permute.xlu0 0
    %201 = vperm.xlu0 %200, %v66
    %v202 = vpop.permute.xlu0 %201
    %205 = vset.pattern.permute.xlu0 0
    %206 = vperm.xlu0 %205, %v67
    %v207 = vpop.permute.xlu0 %206
    %210 = vset.pattern.permute.xlu0 0
    %211 = vperm.xlu0 %210, %v68
    %v212 = vpop.permute.xlu0 %211
    %215 = vset.pattern.permute.xlu0 0
    %216 = vperm.xlu0 %215, %v69
    %v217 = vpop.permute.xlu0 %216
    %220 = vset.pattern.permute.xlu0 0
    %221 = vperm.xlu0 %220, %v70
    %v222 = vpop.permute.xlu0 %221
    %225 = vset.pattern.permute.xlu0 0
    %226 = vperm.xlu0 %225, %v71
    %v227 = vpop.permute.xlu0 %226
    %230 = vset.pattern.permute.xlu0 0
    %231 = vperm.xlu0 %230, %v72
    %v232 = vpop.permute.xlu0 %231
    %v234 = vlaneseq
    %v235 = vshrl.u32 %v234, 7
    %v236 = vsub.s32 0, %v235
    %v237 = vrot.slane %v73, %v236
    %v238 = vmul.f32 %v77, %v237
    %v239 = vmul.f32 %v82, %v237
    %v240 = vmul.f32 %v87, %v237
    %v241 = vmul.f32 %v92, %v237
    %v242 = vmul.f32 %v97, %v237
    %v243 = vmul.f32 %v102, %v237
    %v244 = vmul.f32 %v107, %v237
    %v245 = vmul.f32 %v112, %v237
    %v246 = vmul.f32 %v117, %v237
    %v247 = vmul.f32 %v122, %v237
    %v248 = vmul.f32 %v127, %v237
    %v249 = vmul.f32 %v132, %v237
    %v250 = vmul.f32 %v137, %v237
    %v251 = vmul.f32 %v142, %v237
    %v252 = vmul.f32 %v147, %v237
    %v253 = vmul.f32 %v152, %v237
    %v254 = vmul.f32 %v157, %v237
    %v255 = vmul.f32 %v162, %v237
    %v256 = vmul.f32 %v167, %v237
    %v257 = vmul.f32 %v172, %v237
    %v258 = vmul.f32 %v177, %v237
    %v259 = vmul.f32 %v182, %v237
    %v260 = vmul.f32 %v187, %v237
    %v261 = vmul.f32 %v192, %v237
    %v262 = vmul.f32 %v197, %v237
    %v263 = vmul.f32 %v202, %v237
    %v264 = vmul.f32 %v207, %v237
    %v265 = vmul.f32 %v212, %v237
    %v266 = vmul.f32 %v217, %v237
    %v267 = vmul.f32 %v222, %v237
    %v268 = vmul.f32 %v227, %v237
    %v269 = vmul.f32 %v232, %v237
    %v270 = vld [vmem:[%s1 + $0x1] sm:$0x1]
    %271 = vset.pattern.permute.xlu0 1
    %272 = vperm.xlu0 %271, %v41
    %v273 = vpop.permute.xlu0 %272
    %275 = vset.pattern.permute.xlu0 1
    %276 = vperm.xlu0 %275, %v42
    %v277 = vpop.permute.xlu0 %276
    %279 = vset.pattern.permute.xlu0 1
    %280 = vperm.xlu0 %279, %v43
    %v281 = vpop.permute.xlu0 %280
    %283 = vset.pattern.permute.xlu0 1
    %284 = vperm.xlu0 %283, %v44
    %v285 = vpop.permute.xlu0 %284
    %287 = vset.pattern.permute.xlu0 1
    %288 = vperm.xlu0 %287, %v45
    %v289 = vpop.permute.xlu0 %288
    %291 = vset.pattern.permute.xlu0 1
    %292 = vperm.xlu0 %291, %v46
    %v293 = vpop.permute.xlu0 %292
    %295 = vset.pattern.permute.xlu0 1
    %296 = vperm.xlu0 %295, %v47
    %v297 = vpop.permute.xlu0 %296
    %299 = vset.pattern.permute.xlu0 1
    %300 = vperm.xlu0 %299, %v48
    %v301 = vpop.permute.xlu0 %300
    %303 = vset.pattern.permute.xlu0 1
    %304 = vperm.xlu0 %303, %v49
    %v305 = vpop.permute.xlu0 %304
    %307 = vset.pattern.permute.xlu0 1
    %308 = vperm.xlu0 %307, %v50
    %v309 = vpop.permute.xlu0 %308
    %311 = vset.pattern.permute.xlu0 1
    %312 = vperm.xlu0 %311, %v51
    %v313 = vpop.permute.xlu0 %312
    %315 = vset.pattern.permute.xlu0 1
    %316 = vperm.xlu0 %315, %v52
    %v317 = vpop.permute.xlu0 %316
    %319 = vset.pattern.permute.xlu0 1
    %320 = vperm.xlu0 %319, %v53
    %v321 = vpop.permute.xlu0 %320
    %323 = vset.pattern.permute.xlu0 1
    %324 = vperm.xlu0 %323, %v54
    %v325 = vpop.permute.xlu0 %324
    %327 = vset.pattern.permute.xlu0 1
    %328 = vperm.xlu0 %327, %v55
    %v329 = vpop.permute.xlu0 %328
    %331 = vset.pattern.permute.xlu0 1
    %332 = vperm.xlu0 %331, %v56
    %v333 = vpop.permute.xlu0 %332
    %335 = vset.pattern.permute.xlu0 1
    %336 = vperm.xlu0 %335, %v57
    %v337 = vpop.permute.xlu0 %336
    %339 = vset.pattern.permute.xlu0 1
    %340 = vperm.xlu0 %339, %v58
    %v341 = vpop.permute.xlu0 %340
    %343 = vset.pattern.permute.xlu0 1
    %344 = vperm.xlu0 %343, %v59
    %v345 = vpop.permute.xlu0 %344
    %347 = vset.pattern.permute.xlu0 1
    %348 = vperm.xlu0 %347, %v60
    %v349 = vpop.permute.xlu0 %348
    %351 = vset.pattern.permute.xlu0 1
    %352 = vperm.xlu0 %351, %v61
    %v353 = vpop.permute.xlu0 %352
    %355 = vset.pattern.permute.xlu0 1
    %356 = vperm.xlu0 %355, %v62
    %v357 = vpop.permute.xlu0 %356
    %359 = vset.pattern.permute.xlu0 1
    %360 = vperm.xlu0 %359, %v63
    %v361 = vpop.permute.xlu0 %360
    %363 = vset.pattern.permute.xlu0 1
    %364 = vperm.xlu0 %363, %v64
    %v365 = vpop.permute.xlu0 %364
    %367 = vset.pattern.permute.xlu0 1
    %368 = vperm.xlu0 %367, %v65
    %v369 = vpop.permute.xlu0 %368
    %371 = vset.pattern.permute.xlu0 1
    %372 = vperm.xlu0 %371, %v66
    %v373 = vpop.permute.xlu0 %372
    %375 = vset.pattern.permute.xlu0 1
    %376 = vperm.xlu0 %375, %v67
    %v377 = vpop.permute.xlu0 %376
    %379 = vset.pattern.permute.xlu0 1
    %380 = vperm.xlu0 %379, %v68
    %v381 = vpop.permute.xlu0 %380
    %383 = vset.pattern.permute.xlu0 1
    %384 = vperm.xlu0 %383, %v69
    %v385 = vpop.permute.xlu0 %384
    %387 = vset.pattern.permute.xlu0 1
    %388 = vperm.xlu0 %387, %v70
    %v389 = vpop.permute.xlu0 %388
    %391 = vset.pattern.permute.xlu0 1
    %392 = vperm.xlu0 %391, %v71
    %v393 = vpop.permute.xlu0 %392
    %395 = vset.pattern.permute.xlu0 1
    %396 = vperm.xlu0 %395, %v72
    %v397 = vpop.permute.xlu0 %396
    %v399 = vlaneseq
    %v400 = vshrl.u32 %v399, 7
    %v401 = vsub.s32 0, %v400
    %v402 = vrot.slane %v270, %v401
    %v403 = vmul.f32 %v273, %v402
    %v404 = vmul.f32 %v277, %v402
    %v405 = vmul.f32 %v281, %v402
    %v406 = vmul.f32 %v285, %v402
    %v407 = vmul.f32 %v289, %v402
    %v408 = vmul.f32 %v293, %v402
    %v409 = vmul.f32 %v297, %v402
    %v410 = vmul.f32 %v301, %v402
    %v411 = vmul.f32 %v305, %v402
    %v412 = vmul.f32 %v309, %v402
    %v413 = vmul.f32 %v313, %v402
    %v414 = vmul.f32 %v317, %v402
    %v415 = vmul.f32 %v321, %v402
    %v416 = vmul.f32 %v325, %v402
    %v417 = vmul.f32 %v329, %v402
    %v418 = vmul.f32 %v333, %v402
    %v419 = vmul.f32 %v337, %v402
    %v420 = vmul.f32 %v341, %v402
    %v421 = vmul.f32 %v345, %v402
    %v422 = vmul.f32 %v349, %v402
    %v423 = vmul.f32 %v353, %v402
    %v424 = vmul.f32 %v357, %v402
    %v425 = vmul.f32 %v361, %v402
    %v426 = vmul.f32 %v365, %v402
    %v427 = vmul.f32 %v369, %v402
    %v428 = vmul.f32 %v373, %v402
    %v429 = vmul.f32 %v377, %v402
    %v430 = vmul.f32 %v381, %v402
    %v431 = vmul.f32 %v385, %v402
    %v432 = vmul.f32 %v389, %v402
    %v433 = vmul.f32 %v393, %v402
    %v434 = vmul.f32 %v397, %v402
    %v435 = vadd.f32 %v238, %v403
    %v436 = vadd.f32 %v239, %v404
    %v437 = vadd.f32 %v240, %v405
    %v438 = vadd.f32 %v241, %v406
    %v439 = vadd.f32 %v242, %v407
    %v440 = vadd.f32 %v243, %v408
    %v441 = vadd.f32 %v244, %v409
    %v442 = vadd.f32 %v245, %v410
    %v443 = vadd.f32 %v246, %v411
    %v444 = vadd.f32 %v247, %v412
    %v445 = vadd.f32 %v248, %v413
    %v446 = vadd.f32 %v249, %v414
    %v447 = vadd.f32 %v250, %v415
    %v448 = vadd.f32 %v251, %v416
    %v449 = vadd.f32 %v252, %v417
    %v450 = vadd.f32 %v253, %v418
    %v451 = vadd.f32 %v254, %v419
    %v452 = vadd.f32 %v255, %v420
    %v453 = vadd.f32 %v256, %v421
    %v454 = vadd.f32 %v257, %v422
    %v455 = vadd.f32 %v258, %v423
    %v456 = vadd.f32 %v259, %v424
    %v457 = vadd.f32 %v260, %v425
    %v458 = vadd.f32 %v261, %v426
    %v459 = vadd.f32 %v262, %v427
    %v460 = vadd.f32 %v263, %v428
    %v461 = vadd.f32 %v264, %v429
    %v462 = vadd.f32 %v265, %v430
    %v463 = vadd.f32 %v266, %v431
    %v464 = vadd.f32 %v267, %v432
    %v465 = vadd.f32 %v268, %v433
    %v466 = vadd.f32 %v269, %v434
    %v467 = vld [vmem:[%s1 + $0x2] sm:$0x1]
    %468 = vset.pattern.permute.xlu0 2
    %469 = vperm.xlu0 %468, %v41
    %v470 = vpop.permute.xlu0 %469
    %472 = vset.pattern.permute.xlu0 2
    %473 = vperm.xlu0 %472, %v42
    %v474 = vpop.permute.xlu0 %473
    %476 = vset.pattern.permute.xlu0 2
    %477 = vperm.xlu0 %476, %v43
    %v478 = vpop.permute.xlu0 %477
    %480 = vset.pattern.permute.xlu0 2
    %481 = vperm.xlu0 %480, %v44
    %v482 = vpop.permute.xlu0 %481
    %484 = vset.pattern.permute.xlu0 2
    %485 = vperm.xlu0 %484, %v45
    %v486 = vpop.permute.xlu0 %485
    %488 = vset.pattern.permute.xlu0 2
    %489 = vperm.xlu0 %488, %v46
    %v490 = vpop.permute.xlu0 %489
    %492 = vset.pattern.permute.xlu0 2
    %493 = vperm.xlu0 %492, %v47
    %v494 = vpop.permute.xlu0 %493
    %496 = vset.pattern.permute.xlu0 2
    %497 = vperm.xlu0 %496, %v48
    %v498 = vpop.permute.xlu0 %497
    %500 = vset.pattern.permute.xlu0 2
    %501 = vperm.xlu0 %500, %v49
    %v502 = vpop.permute.xlu0 %501
    %504 = vset.pattern.permute.xlu0 2
    %505 = vperm.xlu0 %504, %v50
    %v506 = vpop.permute.xlu0 %505
    %508 = vset.pattern.permute.xlu0 2
    %509 = vperm.xlu0 %508, %v51
    %v510 = vpop.permute.xlu0 %509
    %512 = vset.pattern.permute.xlu0 2
    %513 = vperm.xlu0 %512, %v52
    %v514 = vpop.permute.xlu0 %513
    %516 = vset.pattern.permute.xlu0 2
    %517 = vperm.xlu0 %516, %v53
    %v518 = vpop.permute.xlu0 %517
    %520 = vset.pattern.permute.xlu0 2
    %521 = vperm.xlu0 %520, %v54
    %v522 = vpop.permute.xlu0 %521
    %524 = vset.pattern.permute.xlu0 2
    %525 = vperm.xlu0 %524, %v55
    %v526 = vpop.permute.xlu0 %525
    %528 = vset.pattern.permute.xlu0 2
    %529 = vperm.xlu0 %528, %v56
    %v530 = vpop.permute.xlu0 %529
    %532 = vset.pattern.permute.xlu0 2
    %533 = vperm.xlu0 %532, %v57
    %v534 = vpop.permute.xlu0 %533
    %536 = vset.pattern.permute.xlu0 2
    %537 = vperm.xlu0 %536, %v58
    %v538 = vpop.permute.xlu0 %537
    %540 = vset.pattern.permute.xlu0 2
    %541 = vperm.xlu0 %540, %v59
    %v542 = vpop.permute.xlu0 %541
    %544 = vset.pattern.permute.xlu0 2
    %545 = vperm.xlu0 %544, %v60
    %v546 = vpop.permute.xlu0 %545
    %548 = vset.pattern.permute.xlu0 2
    %549 = vperm.xlu0 %548, %v61
    %v550 = vpop.permute.xlu0 %549
    %552 = vset.pattern.permute.xlu0 2
    %553 = vperm.xlu0 %552, %v62
    %v554 = vpop.permute.xlu0 %553
    %556 = vset.pattern.permute.xlu0 2
    %557 = vperm.xlu0 %556, %v63
    %v558 = vpop.permute.xlu0 %557
    %560 = vset.pattern.permute.xlu0 2
    %561 = vperm.xlu0 %560, %v64
    %v562 = vpop.permute.xlu0 %561
    %564 = vset.pattern.permute.xlu0 2
    %565 = vperm.xlu0 %564, %v65
    %v566 = vpop.permute.xlu0 %565
    %568 = vset.pattern.permute.xlu0 2
    %569 = vperm.xlu0 %568, %v66
    %v570 = vpop.permute.xlu0 %569
    %572 = vset.pattern.permute.xlu0 2
    %573 = vperm.xlu0 %572, %v67
    %v574 = vpop.permute.xlu0 %573
    %576 = vset.pattern.permute.xlu0 2
    %577 = vperm.xlu0 %576, %v68
    %v578 = vpop.permute.xlu0 %577
    %580 = vset.pattern.permute.xlu0 2
    %581 = vperm.xlu0 %580, %v69
    %v582 = vpop.permute.xlu0 %581
    %584 = vset.pattern.permute.xlu0 2
    %585 = vperm.xlu0 %584, %v70
    %v586 = vpop.permute.xlu0 %585
    %588 = vset.pattern.permute.xlu0 2
    %589 = vperm.xlu0 %588, %v71
    %v590 = vpop.permute.xlu0 %589
    %592 = vset.pattern.permute.xlu0 2
    %593 = vperm.xlu0 %592, %v72
    %v594 = vpop.permute.xlu0 %593
    %v596 = vlaneseq
    %v597 = vshrl.u32 %v596, 7
    %v598 = vsub.s32 0, %v597
    %v599 = vrot.slane %v467, %v598
    %v600 = vmul.f32 %v470, %v599
    %v601 = vmul.f32 %v474, %v599
    %v602 = vmul.f32 %v478, %v599
    %v603 = vmul.f32 %v482, %v599
    %v604 = vmul.f32 %v486, %v599
    %v605 = vmul.f32 %v490, %v599
    %v606 = vmul.f32 %v494, %v599
    %v607 = vmul.f32 %v498, %v599
    %v608 = vmul.f32 %v502, %v599
    %v609 = vmul.f32 %v506, %v599
    %v610 = vmul.f32 %v510, %v599
    %v611 = vmul.f32 %v514, %v599
    %v612 = vmul.f32 %v518, %v599
    %v613 = vmul.f32 %v522, %v599
    %v614 = vmul.f32 %v526, %v599
    %v615 = vmul.f32 %v530, %v599
    %v616 = vmul.f32 %v534, %v599
    %v617 = vmul.f32 %v538, %v599
    %v618 = vmul.f32 %v542, %v599
    %v619 = vmul.f32 %v546, %v599
    %v620 = vmul.f32 %v550, %v599
    %v621 = vmul.f32 %v554, %v599
    %v622 = vmul.f32 %v558, %v599
    %v623 = vmul.f32 %v562, %v599
    %v624 = vmul.f32 %v566, %v599
    %v625 = vmul.f32 %v570, %v599
    %v626 = vmul.f32 %v574, %v599
    %v627 = vmul.f32 %v578, %v599
    %v628 = vmul.f32 %v582, %v599
    %v629 = vmul.f32 %v586, %v599
    %v630 = vmul.f32 %v590, %v599
    %v631 = vmul.f32 %v594, %v599
    %v632 = vadd.f32 %v435, %v600
    %v633 = vadd.f32 %v436, %v601
    %v634 = vadd.f32 %v437, %v602
    %v635 = vadd.f32 %v438, %v603
    %v636 = vadd.f32 %v439, %v604
    %v637 = vadd.f32 %v440, %v605
    %v638 = vadd.f32 %v441, %v606
    %v639 = vadd.f32 %v442, %v607
    %v640 = vadd.f32 %v443, %v608
    %v641 = vadd.f32 %v444, %v609
    %v642 = vadd.f32 %v445, %v610
    %v643 = vadd.f32 %v446, %v611
    %v644 = vadd.f32 %v447, %v612
    %v645 = vadd.f32 %v448, %v613
    %v646 = vadd.f32 %v449, %v614
    %v647 = vadd.f32 %v450, %v615
    %v648 = vadd.f32 %v451, %v616
    %v649 = vadd.f32 %v452, %v617
    %v650 = vadd.f32 %v453, %v618
    %v651 = vadd.f32 %v454, %v619
    %v652 = vadd.f32 %v455, %v620
    %v653 = vadd.f32 %v456, %v621
    %v654 = vadd.f32 %v457, %v622
    %v655 = vadd.f32 %v458, %v623
    %v656 = vadd.f32 %v459, %v624
    %v657 = vadd.f32 %v460, %v625
    %v658 = vadd.f32 %v461, %v626
    %v659 = vadd.f32 %v462, %v627
    %v660 = vadd.f32 %v463, %v628
    %v661 = vadd.f32 %v464, %v629
    %v662 = vadd.f32 %v465, %v630
    %v663 = vadd.f32 %v466, %v631
    %v664 = vld [vmem:[%s2] sm:$0x1]
    %v666 = vlaneseq
    %v667 = vshrl.u32 %v666, 7
    %v668 = vsub.s32 0, %v667
    %v669 = vrot.slane %v664, %v668
    %v671 = vadd.f32 %v632, %v669
    %v672 = vadd.f32 %v633, %v669
    %v673 = vadd.f32 %v634, %v669
    %v674 = vadd.f32 %v635, %v669
    %v675 = vadd.f32 %v636, %v669
    %v676 = vadd.f32 %v637, %v669
    %v677 = vadd.f32 %v638, %v669
    %v678 = vadd.f32 %v639, %v669
    %v679 = vadd.f32 %v640, %v669
    %v680 = vadd.f32 %v641, %v669
    %v681 = vadd.f32 %v642, %v669
    %v682 = vadd.f32 %v643, %v669
    %v683 = vadd.f32 %v644, %v669
    %v684 = vadd.f32 %v645, %v669
    %v685 = vadd.f32 %v646, %v669
    %v686 = vadd.f32 %v647, %v669
    %v687 = vadd.f32 %v648, %v669
    %v688 = vadd.f32 %v649, %v669
    %v689 = vadd.f32 %v650, %v669
    %v690 = vadd.f32 %v651, %v669
    %v691 = vadd.f32 %v652, %v669
    %v692 = vadd.f32 %v653, %v669
    %v693 = vadd.f32 %v654, %v669
    %v694 = vadd.f32 %v655, %v669
    %v695 = vadd.f32 %v656, %v669
    %v696 = vadd.f32 %v657, %v669
    %v697 = vadd.f32 %v658, %v669
    %v698 = vadd.f32 %v659, %v669
    %v699 = vadd.f32 %v660, %v669
    %v700 = vadd.f32 %v661, %v669
    %v701 = vadd.f32 %v662, %v669
    %v702 = vadd.f32 %v663, %v669
    %v703 = vmax.f32 %v671, 0.0
    %v704 = vmax.f32 %v672, 0.0
    %v705 = vmax.f32 %v673, 0.0
    %v706 = vmax.f32 %v674, 0.0
    %v707 = vmax.f32 %v675, 0.0
    %v708 = vmax.f32 %v676, 0.0
    %v709 = vmax.f32 %v677, 0.0
    %v710 = vmax.f32 %v678, 0.0
    %v711 = vmax.f32 %v679, 0.0
    %v712 = vmax.f32 %v680, 0.0
    %v713 = vmax.f32 %v681, 0.0
    %v714 = vmax.f32 %v682, 0.0
    %v715 = vmax.f32 %v683, 0.0
    %v716 = vmax.f32 %v684, 0.0
    %v717 = vmax.f32 %v685, 0.0
    %v718 = vmax.f32 %v686, 0.0
    %v719 = vmax.f32 %v687, 0.0
    %v720 = vmax.f32 %v688, 0.0
    %v721 = vmax.f32 %v689, 0.0
    %v722 = vmax.f32 %v690, 0.0
    %v723 = vmax.f32 %v691, 0.0
    %v724 = vmax.f32 %v692, 0.0
    %v725 = vmax.f32 %v693, 0.0
    %v726 = vmax.f32 %v694, 0.0
    %v727 = vmax.f32 %v695, 0.0
    %v728 = vmax.f32 %v696, 0.0
    %v729 = vmax.f32 %v697, 0.0
    %v730 = vmax.f32 %v698, 0.0
    %v731 = vmax.f32 %v699, 0.0
    %v732 = vmax.f32 %v700, 0.0
    %v733 = vmax.f32 %v701, 0.0
    %v734 = vmax.f32 %v702, 0.0
    %v735 = vpack.c.bf16 %v704, %v703
    %v736 = vpack.c.bf16 %v706, %v705
    %v737 = vpack.c.bf16 %v708, %v707
    %v738 = vpack.c.bf16 %v710, %v709
    %v739 = vpack.c.bf16 %v712, %v711
    %v740 = vpack.c.bf16 %v714, %v713
    %v741 = vpack.c.bf16 %v716, %v715
    %v742 = vpack.c.bf16 %v718, %v717
    %v743 = vpack.c.bf16 %v720, %v719
    %v744 = vpack.c.bf16 %v722, %v721
    %v745 = vpack.c.bf16 %v724, %v723
    %v746 = vpack.c.bf16 %v726, %v725
    %v747 = vpack.c.bf16 %v728, %v727
    %v748 = vpack.c.bf16 %v730, %v729
    %v749 = vpack.c.bf16 %v732, %v731
    %v750 = vpack.c.bf16 %v734, %v733
    %v751 = vld [vmem:[#allocation2] sm:$0xf]
    %v752 = vld [vmem:[#allocation2 + $0x4] sm:$0xf]
    %v753 = vld [vmem:[#allocation2 + $0x8] sm:$0xf]
    %v754 = vld [vmem:[#allocation2 + $0xc] sm:$0xf]
    %v755 = vld [vmem:[#allocation2 + $0x10] sm:$0xf]
    %v756 = vld [vmem:[#allocation2 + $0x14] sm:$0xf]
    %v757 = vld [vmem:[#allocation2 + $0x18] sm:$0xf]
    %v758 = vld [vmem:[#allocation2 + $0x1c] sm:$0xf]
    %v759 = vld [vmem:[#allocation2 + $0x20] sm:$0xf]
    %v760 = vld [vmem:[#allocation2 + $0x24] sm:$0xf]
    %v761 = vld [vmem:[#allocation2 + $0x28] sm:$0xf]
    %v762 = vld [vmem:[#allocation2 + $0x2c] sm:$0xf]
    %v763 = vld [vmem:[#allocation2 + $0x30] sm:$0xf]
    %v764 = vld [vmem:[#allocation2 + $0x34] sm:$0xf]
    %v765 = vld [vmem:[#allocation2 + $0x38] sm:$0xf]
    %v766 = vld [vmem:[#allocation2 + $0x3c] sm:$0xf]
    %v767 = vld [vmem:[%s4] sm:$0x1]
    %v768 = vlaneseq
    %v769 = vshrl.u32 %v768, 7
    %v770 = vsub.s32 0, %v769
    %v771 = vrot.slane %v767, %v770
    %v788 = vunpack.c.l.b16 %v751
    %v789 = vunpack.c.l.b16 %v752
    %v790 = vunpack.c.l.b16 %v753
    %v791 = vunpack.c.l.b16 %v754
    %v792 = vunpack.c.l.b16 %v755
    %v793 = vunpack.c.l.b16 %v756
    %v794 = vunpack.c.l.b16 %v757
    %v795 = vunpack.c.l.b16 %v758
    %v796 = vunpack.c.l.b16 %v759
    %v797 = vunpack.c.l.b16 %v760
    %v798 = vunpack.c.l.b16 %v761
    %v799 = vunpack.c.l.b16 %v762
    %v800 = vunpack.c.l.b16 %v763
    %v801 = vunpack.c.l.b16 %v764
    %v802 = vunpack.c.l.b16 %v765
    %v803 = vunpack.c.l.b16 %v766
    %v804 = vpack.c.b16 %v789, %v788
    %v805 = vpack.c.b16 %v791, %v790
    %v806 = vpack.c.b16 %v793, %v792
    %v807 = vpack.c.b16 %v795, %v794
    %v808 = vpack.c.b16 %v797, %v796
    %v809 = vpack.c.b16 %v799, %v798
    %v810 = vpack.c.b16 %v801, %v800
    %v811 = vpack.c.b16 %v803, %v802
    %820 = vmatprep.subr.bf16.mxu0 0
    %821 = vmatpush1.bf16.msra.mxu0 %v804
    %822 = vmatprep.subr.bf16.mxu0 0
    %823 = vmatpush1.bf16.msra.mxu0 %v805
    %824 = vmatprep.subr.bf16.mxu0 0
    %825 = vmatpush1.bf16.msra.mxu0 %v806
    %826 = vmatprep.subr.bf16.mxu0 0
    %827 = vmatpush1.bf16.msra.mxu0 %v807
    %828 = vmatprep.subr.bf16.mxu0 0
    %829 = vmatpush1.bf16.msra.mxu0 %v808
    %830 = vmatprep.subr.bf16.mxu0 0
    %831 = vmatpush1.bf16.msra.mxu0 %v809
    %832 = vmatprep.subr.bf16.mxu0 0
    %833 = vmatpush1.bf16.msra.mxu0 %v810
    %834 = vmatprep.subr.bf16.mxu0 0
    %835 = vmatpush1.bf16.msra.mxu0 %v811
    %836 = vmatprep.subr.bf16.mxu0 0
    %837 = vmatpush1.bf16.msra.mxu0 0
    %838 = vmatprep.subr.bf16.mxu0 0
    %839 = vmatpush1.bf16.msra.mxu0 0
    %840 = vmatprep.subr.bf16.mxu0 0
    %841 = vmatpush1.bf16.msra.mxu0 0
    %842 = vmatprep.subr.bf16.mxu0 0
    %843 = vmatpush1.bf16.msra.mxu0 0
    %844 = vmatprep.subr.bf16.mxu0 0
    %845 = vmatpush1.bf16.msra.mxu0 0
    %846 = vmatprep.subr.bf16.mxu0 0
    %847 = vmatpush1.bf16.msra.mxu0 0
    %848 = vmatprep.subr.bf16.mxu0 0
    %849 = vmatpush1.bf16.msra.mxu0 0
    %850 = vmatprep.subr.bf16.mxu0 0
    %851 = vmatpush1.bf16.msra.mxu0 0
    %852 = vmatprep.mubr.bf16.mxu0 0
    %853 = vmatmul.mubr.bf16.gmra.mrb[0].mxu0 %v735
    %v854 = vpop.f32.mrb[0].mxu0
    %v855 = vadd.f32 %v771, %v854
    %v856 = vpop.f32.mrb[0].mxu0
    %v857 = vpop.f32.mrb[0].mxu0
    %v858 = vadd.f32 %v771, %v857
    %v859 = vpop.f32.mrb[0].mxu0
    %860 = vmatprep.mubr.bf16.mxu0 0
    %861 = vmatmul.mubr.bf16.gmra.mrb[0].mxu0 %v736
    %v862 = vpop.f32.mrb[0].mxu0
    %v863 = vadd.f32 %v771, %v862
    %v864 = vpop.f32.mrb[0].mxu0
    %v865 = vpop.f32.mrb[0].mxu0
    %v866 = vadd.f32 %v771, %v865
    %v867 = vpop.f32.mrb[0].mxu0
    %868 = vmatprep.mubr.bf16.mxu0 0
    %869 = vmatmul.mubr.bf16.gmra.mrb[0].mxu0 %v737
    %v870 = vpop.f32.mrb[0].mxu0
    %v871 = vadd.f32 %v771, %v870
    %v872 = vpop.f32.mrb[0].mxu0
    %v873 = vpop.f32.mrb[0].mxu0
    %v874 = vadd.f32 %v771, %v873
    %v875 = vpop.f32.mrb[0].mxu0
    %876 = vmatprep.mubr.bf16.mxu0 0
    %877 = vmatmul.mubr.bf16.gmra.mrb[0].mxu0 %v738
    %v878 = vpop.f32.mrb[0].mxu0
    %v879 = vadd.f32 %v771, %v878
    %v880 = vpop.f32.mrb[0].mxu0
    %v881 = vpop.f32.mrb[0].mxu0
    %v882 = vadd.f32 %v771, %v881
    %v883 = vpop.f32.mrb[0].mxu0
    %884 = vmatprep.mubr.bf16.mxu0 0
    %885 = vmatmul.mubr.bf16.gmra.mrb[0].mxu0 %v739
    %v886 = vpop.f32.mrb[0].mxu0
    %v887 = vadd.f32 %v771, %v886
    %v888 = vpop.f32.mrb[0].mxu0
    %v889 = vpop.f32.mrb[0].mxu0
    %v890 = vadd.f32 %v771, %v889
    %v891 = vpop.f32.mrb[0].mxu0
    %892 = vmatprep.mubr.bf16.mxu0 0
    %893 = vmatmul.mubr.bf16.gmra.mrb[0].mxu0 %v740
    %v894 = vpop.f32.mrb[0].mxu0
    %v895 = vadd.f32 %v771, %v894
    %v896 = vpop.f32.mrb[0].mxu0
    %v897 = vpop.f32.mrb[0].mxu0
    %v898 = vadd.f32 %v771, %v897
    %v899 = vpop.f32.mrb[0].mxu0
    %900 = vmatprep.mubr.bf16.mxu0 0
    %901 = vmatmul.mubr.bf16.gmra.mrb[0].mxu0 %v741
    %v902 = vpop.f32.mrb[0].mxu0
    %v903 = vadd.f32 %v771, %v902
    %v904 = vpop.f32.mrb[0].mxu0
    %v905 = vpop.f32.mrb[0].mxu0
    %v906 = vadd.f32 %v771, %v905
    %v907 = vpop.f32.mrb[0].mxu0
    %908 = vmatprep.mubr.bf16.mxu0 0
    %909 = vmatmul.mubr.bf16.gmra.mrb[0].mxu0 %v742
    %v910 = vpop.f32.mrb[0].mxu0
    %v911 = vadd.f32 %v771, %v910
    %v912 = vpop.f32.mrb[0].mxu0
    %v913 = vpop.f32.mrb[0].mxu0
    %v914 = vadd.f32 %v771, %v913
    %v915 = vpop.f32.mrb[0].mxu0
    %916 = vmatprep.mubr.bf16.mxu0 0
    %917 = vmatmul.mubr.bf16.gmra.mrb[0].mxu0 %v743
    %v918 = vpop.f32.mrb[0].mxu0
    %v919 = vadd.f32 %v771, %v918
    %v920 = vpop.f32.mrb[0].mxu0
    %v921 = vpop.f32.mrb[0].mxu0
    %v922 = vadd.f32 %v771, %v921
    %v923 = vpop.f32.mrb[0].mxu0
    %924 = vmatprep.mubr.bf16.mxu0 0
    %925 = vmatmul.mubr.bf16.gmra.mrb[0].mxu0 %v744
    %v926 = vpop.f32.mrb[0].mxu0
    %v927 = vadd.f32 %v771, %v926
    %v928 = vpop.f32.mrb[0].mxu0
    %v929 = vpop.f32.mrb[0].mxu0
    %v930 = vadd.f32 %v771, %v929
    %v931 = vpop.f32.mrb[0].mxu0
    %932 = vmatprep.mubr.bf16.mxu0 0
    %933 = vmatmul.mubr.bf16.gmra.mrb[0].mxu0 %v745
    %v934 = vpop.f32.mrb[0].mxu0
    %v935 = vadd.f32 %v771, %v934
    %v936 = vpop.f32.mrb[0].mxu0
    %v937 = vpop.f32.mrb[0].mxu0
    %v938 = vadd.f32 %v771, %v937
    %v939 = vpop.f32.mrb[0].mxu0
    %940 = vmatprep.mubr.bf16.mxu0 0
    %941 = vmatmul.mubr.bf16.gmra.mrb[0].mxu0 %v746
    %v942 = vpop.f32.mrb[0].mxu0
    %v943 = vadd.f32 %v771, %v942
    %v944 = vpop.f32.mrb[0].mxu0
    %v945 = vpop.f32.mrb[0].mxu0
    %v946 = vadd.f32 %v771, %v945
    %v947 = vpop.f32.mrb[0].mxu0
    %948 = vmatprep.mubr.bf16.mxu0 0
    %949 = vmatmul.mubr.bf16.gmra.mrb[0].mxu0 %v747
    %v950 = vpop.f32.mrb[0].mxu0
    %v951 = vadd.f32 %v771, %v950
    %v952 = vpop.f32.mrb[0].mxu0
    %v953 = vpop.f32.mrb[0].mxu0
    %v954 = vadd.f32 %v771, %v953
    %v955 = vpop.f32.mrb[0].mxu0
    %956 = vmatprep.mubr.bf16.mxu0 0
    %957 = vmatmul.mubr.bf16.gmra.mrb[0].mxu0 %v748
    %v958 = vpop.f32.mrb[0].mxu0
    %v959 = vadd.f32 %v771, %v958
    %v960 = vpop.f32.mrb[0].mxu0
    %v961 = vpop.f32.mrb[0].mxu0
    %v962 = vadd.f32 %v771, %v961
    %v963 = vpop.f32.mrb[0].mxu0
    %964 = vmatprep.mubr.bf16.mxu0 0
    %965 = vmatmul.mubr.bf16.gmra.mrb[0].mxu0 %v749
    %v966 = vpop.f32.mrb[0].mxu0
    %v967 = vadd.f32 %v771, %v966
    %v968 = vpop.f32.mrb[0].mxu0
    %v969 = vpop.f32.mrb[0].mxu0
    %v970 = vadd.f32 %v771, %v969
    %v971 = vpop.f32.mrb[0].mxu0
    %972 = vmatprep.mubr.bf16.mxu0 0
    %973 = vmatmul.mubr.bf16.gmra.mrb[0].mxu0 %v750
    %v974 = vpop.f32.mrb[0].mxu0
    %v975 = vadd.f32 %v771, %v974
    %v976 = vpop.f32.mrb[0].mxu0
    %v977 = vpop.f32.mrb[0].mxu0
    %v978 = vadd.f32 %v771, %v977
    %v979 = vpop.f32.mrb[0].mxu0
    %980 = vdwg.mxu0
    %v981 = vmax.f32 %v855, 0.0
    %v982 = vmax.f32 %v858, 0.0
    %v983 = vmax.f32 %v863, 0.0
    %v984 = vmax.f32 %v866, 0.0
    %v985 = vmax.f32 %v871, 0.0
    %v986 = vmax.f32 %v874, 0.0
    %v987 = vmax.f32 %v879, 0.0
    %v988 = vmax.f32 %v882, 0.0
    %v989 = vmax.f32 %v887, 0.0
    %v990 = vmax.f32 %v890, 0.0
    %v991 = vmax.f32 %v895, 0.0
    %v992 = vmax.f32 %v898, 0.0
    %v993 = vmax.f32 %v903, 0.0
    %v994 = vmax.f32 %v906, 0.0
    %v995 = vmax.f32 %v911, 0.0
    %v996 = vmax.f32 %v914, 0.0
    %v997 = vmax.f32 %v919, 0.0
    %v998 = vmax.f32 %v922, 0.0
    %v999 = vmax.f32 %v927, 0.0
    %v1000 = vmax.f32 %v930, 0.0
    %v1001 = vmax.f32 %v935, 0.0
    %v1002 = vmax.f32 %v938, 0.0
    %v1003 = vmax.f32 %v943, 0.0
    %v1004 = vmax.f32 %v946, 0.0
    %v1005 = vmax.f32 %v951, 0.0
    %v1006 = vmax.f32 %v954, 0.0
    %v1007 = vmax.f32 %v959, 0.0
    %v1008 = vmax.f32 %v962, 0.0
    %v1009 = vmax.f32 %v967, 0.0
    %v1010 = vmax.f32 %v970, 0.0
    %v1011 = vmax.f32 %v975, 0.0
    %v1012 = vmax.f32 %v978, 0.0
    %v1013 = vpack.c.bf16 %v982, %v981
    %v1014 = vpack.c.bf16 %v984, %v983
    %v1015 = vpack.c.bf16 %v986, %v985
    %v1016 = vpack.c.bf16 %v988, %v987
    %v1017 = vpack.c.bf16 %v990, %v989
    %v1018 = vpack.c.bf16 %v992, %v991
    %v1019 = vpack.c.bf16 %v994, %v993
    %v1020 = vpack.c.bf16 %v996, %v995
    %v1021 = vpack.c.bf16 %v998, %v997
    %v1022 = vpack.c.bf16 %v1000, %v999
    %v1023 = vpack.c.bf16 %v1002, %v1001
    %v1024 = vpack.c.bf16 %v1004, %v1003
    %v1025 = vpack.c.bf16 %v1006, %v1005
    %v1026 = vpack.c.bf16 %v1008, %v1007
    %v1027 = vpack.c.bf16 %v1010, %v1009
    %v1028 = vpack.c.bf16 %v1012, %v1011
    %s1029 = scalar_lea.vmem [#allocation2], 64
    %v1030 = vld [vmem:[%s1029] sm:$0xf]
    %v1031 = vld [vmem:[%s1029 + $0x4] sm:$0xf]
    %v1032 = vld [vmem:[%s1029 + $0x8] sm:$0xf]
    %v1033 = vld [vmem:[%s1029 + $0xc] sm:$0xf]
    %v1034 = vld [vmem:[%s1029 + $0x10] sm:$0xf]
    %v1035 = vld [vmem:[%s1029 + $0x14] sm:$0xf]
    %v1036 = vld [vmem:[%s1029 + $0x18] sm:$0xf]
    %v1037 = vld [vmem:[%s1029 + $0x1c] sm:$0xf]
    %v1038 = vld [vmem:[%s1029 + $0x20] sm:$0xf]
    %v1039 = vld [vmem:[%s1029 + $0x24] sm:$0xf]
    %v1040 = vld [vmem:[%s1029 + $0x28] sm:$0xf]
    %v1041 = vld [vmem:[%s1029 + $0x2c] sm:$0xf]
    %v1042 = vld [vmem:[%s1029 + $0x30] sm:$0xf]
    %v1043 = vld [vmem:[%s1029 + $0x34] sm:$0xf]
    %v1044 = vld [vmem:[%s1029 + $0x38] sm:$0xf]
    %v1045 = vld [vmem:[%s1029 + $0x3c] sm:$0xf]
    %v1046 = vld [vmem:[%s4 + $0x1] sm:$0x1]
    %v1047 = vlaneseq
    %v1048 = vshrl.u32 %v1047, 7
    %v1049 = vsub.s32 0, %v1048
    %v1050 = vrot.slane %v1046, %v1049
    %v1067 = vunpack.c.l.b16 %v1030
    %v1068 = vunpack.c.l.b16 %v1031
    %v1069 = vunpack.c.l.b16 %v1032
    %v1070 = vunpack.c.l.b16 %v1033
    %v1071 = vunpack.c.l.b16 %v1034
    %v1072 = vunpack.c.l.b16 %v1035
    %v1073 = vunpack.c.l.b16 %v1036
    %v1074 = vunpack.c.l.b16 %v1037
    %v1075 = vunpack.c.l.b16 %v1038
    %v1076 = vunpack.c.l.b16 %v1039
    %v1077 = vunpack.c.l.b16 %v1040
    %v1078 = vunpack.c.l.b16 %v1041
    %v1079 = vunpack.c.l.b16 %v1042
    %v1080 = vunpack.c.l.b16 %v1043
    %v1081 = vunpack.c.l.b16 %v1044
    %v1082 = vunpack.c.l.b16 %v1045
    %v1083 = vpack.c.b16 %v1068, %v1067
    %v1084 = vpack.c.b16 %v1070, %v1069
    %v1085 = vpack.c.b16 %v1072, %v1071
    %v1086 = vpack.c.b16 %v1074, %v1073
    %v1087 = vpack.c.b16 %v1076, %v1075
    %v1088 = vpack.c.b16 %v1078, %v1077
    %v1089 = vpack.c.b16 %v1080, %v1079
    %v1090 = vpack.c.b16 %v1082, %v1081
    %1099 = vmatprep.subr.bf16.mxu0 0
    %1100 = vmatpush1.bf16.msra.mxu0 %v1083
    %1101 = vmatprep.subr.bf16.mxu0 0
    %1102 = vmatpush1.bf16.msra.mxu0 %v1084
    %1103 = vmatprep.subr.bf16.mxu0 0
    %1104 = vmatpush1.bf16.msra.mxu0 %v1085
    %1105 = vmatprep.subr.bf16.mxu0 0
    %1106 = vmatpush1.bf16.msra.mxu0 %v1086
    %1107 = vmatprep.subr.bf16.mxu0 0
    %1108 = vmatpush1.bf16.msra.mxu0 %v1087
    %1109 = vmatprep.subr.bf16.mxu0 0
    %1110 = vmatpush1.bf16.msra.mxu0 %v1088
    %1111 = vmatprep.subr.bf16.mxu0 0
    %1112 = vmatpush1.bf16.msra.mxu0 %v1089
    %1113 = vmatprep.subr.bf16.mxu0 0
    %1114 = vmatpush1.bf16.msra.mxu0 %v1090
    %1115 = vmatprep.subr.bf16.mxu0 0
    %1116 = vmatpush1.bf16.msra.mxu0 0
    %1117 = vmatprep.subr.bf16.mxu0 0
    %1118 = vmatpush1.bf16.msra.mxu0 0
    %1119 = vmatprep.subr.bf16.mxu0 0
    %1120 = vmatpush1.bf16.msra.mxu0 0
    %1121 = vmatprep.subr.bf16.mxu0 0
    %1122 = vmatpush1.bf16.msra.mxu0 0
    %1123 = vmatprep.subr.bf16.mxu0 0
    %1124 = vmatpush1.bf16.msra.mxu0 0
    %1125 = vmatprep.subr.bf16.mxu0 0
    %1126 = vmatpush1.bf16.msra.mxu0 0
    %1127 = vmatprep.subr.bf16.mxu0 0
    %1128 = vmatpush1.bf16.msra.mxu0 0
    %1129 = vmatprep.subr.bf16.mxu0 0
    %1130 = vmatpush1.bf16.msra.mxu0 0
    %1131 = vmatprep.mubr.bf16.mxu0 0
    %1132 = vmatmul.mubr.bf16.gmra.mrb[0].mxu0 %v1013
    %v1133 = vpop.f32.mrb[0].mxu0
    %v1134 = vadd.f32 %v1050, %v1133
    %v1135 = vpop.f32.mrb[0].mxu0
    %v1136 = vpop.f32.mrb[0].mxu0
    %v1137 = vadd.f32 %v1050, %v1136
    %v1138 = vpop.f32.mrb[0].mxu0
    %1139 = vmatprep.mubr.bf16.mxu0 0
    %1140 = vmatmul.mubr.bf16.gmra.mrb[0].mxu0 %v1014
    %v1141 = vpop.f32.mrb[0].mxu0
    %v1142 = vadd.f32 %v1050, %v1141
    %v1143 = vpop.f32.mrb[0].mxu0
    %v1144 = vpop.f32.mrb[0].mxu0
    %v1145 = vadd.f32 %v1050, %v1144
    %v1146 = vpop.f32.mrb[0].mxu0
    %1147 = vmatprep.mubr.bf16.mxu0 0
    %1148 = vmatmul.mubr.bf16.gmra.mrb[0].mxu0 %v1015
    %v1149 = vpop.f32.mrb[0].mxu0
    %v1150 = vadd.f32 %v1050, %v1149
    %v1151 = vpop.f32.mrb[0].mxu0
    %v1152 = vpop.f32.mrb[0].mxu0
    %v1153 = vadd.f32 %v1050, %v1152
    %v1154 = vpop.f32.mrb[0].mxu0
    %1155 = vmatprep.mubr.bf16.mxu0 0
    %1156 = vmatmul.mubr.bf16.gmra.mrb[0].mxu0 %v1016
    %v1157 = vpop.f32.mrb[0].mxu0
    %v1158 = vadd.f32 %v1050, %v1157
    %v1159 = vpop.f32.mrb[0].mxu0
    %v1160 = vpop.f32.mrb[0].mxu0
    %v1161 = vadd.f32 %v1050, %v1160
    %v1162 = vpop.f32.mrb[0].mxu0
    %1163 = vmatprep.mubr.bf16.mxu0 0
    %1164 = vmatmul.mubr.bf16.gmra.mrb[0].mxu0 %v1017
    %v1165 = vpop.f32.mrb[0].mxu0
    %v1166 = vadd.f32 %v1050, %v1165
    %v1167 = vpop.f32.mrb[0].mxu0
    %v1168 = vpop.f32.mrb[0].mxu0
    %v1169 = vadd.f32 %v1050, %v1168
    %v1170 = vpop.f32.mrb[0].mxu0
    %1171 = vmatprep.mubr.bf16.mxu0 0
    %1172 = vmatmul.mubr.bf16.gmra.mrb[0].mxu0 %v1018
    %v1173 = vpop.f32.mrb[0].mxu0
    %v1174 = vadd.f32 %v1050, %v1173
    %v1175 = vpop.f32.mrb[0].mxu0
    %v1176 = vpop.f32.mrb[0].mxu0
    %v1177 = vadd.f32 %v1050, %v1176
    %v1178 = vpop.f32.mrb[0].mxu0
    %1179 = vmatprep.mubr.bf16.mxu0 0
    %1180 = vmatmul.mubr.bf16.gmra.mrb[0].mxu0 %v1019
    %v1181 = vpop.f32.mrb[0].mxu0
    %v1182 = vadd.f32 %v1050, %v1181
    %v1183 = vpop.f32.mrb[0].mxu0
    %v1184 = vpop.f32.mrb[0].mxu0
    %v1185 = vadd.f32 %v1050, %v1184
    %v1186 = vpop.f32.mrb[0].mxu0
    %1187 = vmatprep.mubr.bf16.mxu0 0
    %1188 = vmatmul.mubr.bf16.gmra.mrb[0].mxu0 %v1020
    %v1189 = vpop.f32.mrb[0].mxu0
    %v1190 = vadd.f32 %v1050, %v1189
    %v1191 = vpop.f32.mrb[0].mxu0
    %v1192 = vpop.f32.mrb[0].mxu0
    %v1193 = vadd.f32 %v1050, %v1192
    %v1194 = vpop.f32.mrb[0].mxu0
    %1195 = vmatprep.mubr.bf16.mxu0 0
    %1196 = vmatmul.mubr.bf16.gmra.mrb[0].mxu0 %v1021
    %v1197 = vpop.f32.mrb[0].mxu0
    %v1198 = vadd.f32 %v1050, %v1197
    %v1199 = vpop.f32.mrb[0].mxu0
    %v1200 = vpop.f32.mrb[0].mxu0
    %v1201 = vadd.f32 %v1050, %v1200
    %v1202 = vpop.f32.mrb[0].mxu0
    %1203 = vmatprep.mubr.bf16.mxu0 0
    %1204 = vmatmul.mubr.bf16.gmra.mrb[0].mxu0 %v1022
    %v1205 = vpop.f32.mrb[0].mxu0
    %v1206 = vadd.f32 %v1050, %v1205
    %v1207 = vpop.f32.mrb[0].mxu0
    %v1208 = vpop.f32.mrb[0].mxu0
    %v1209 = vadd.f32 %v1050, %v1208
    %v1210 = vpop.f32.mrb[0].mxu0
    %1211 = vmatprep.mubr.bf16.mxu0 0
    %1212 = vmatmul.mubr.bf16.gmra.mrb[0].mxu0 %v1023
    %v1213 = vpop.f32.mrb[0].mxu0
    %v1214 = vadd.f32 %v1050, %v1213
    %v1215 = vpop.f32.mrb[0].mxu0
    %v1216 = vpop.f32.mrb[0].mxu0
    %v1217 = vadd.f32 %v1050, %v1216
    %v1218 = vpop.f32.mrb[0].mxu0
    %1219 = vmatprep.mubr.bf16.mxu0 0
    %1220 = vmatmul.mubr.bf16.gmra.mrb[0].mxu0 %v1024
    %v1221 = vpop.f32.mrb[0].mxu0
    %v1222 = vadd.f32 %v1050, %v1221
    %v1223 = vpop.f32.mrb[0].mxu0
    %v1224 = vpop.f32.mrb[0].mxu0
    %v1225 = vadd.f32 %v1050, %v1224
    %v1226 = vpop.f32.mrb[0].mxu0
    %1227 = vmatprep.mubr.bf16.mxu0 0
    %1228 = vmatmul.mubr.bf16.gmra.mrb[0].mxu0 %v1025
    %v1229 = vpop.f32.mrb[0].mxu0
    %v1230 = vadd.f32 %v1050, %v1229
    %v1231 = vpop.f32.mrb[0].mxu0
    %v1232 = vpop.f32.mrb[0].mxu0
    %v1233 = vadd.f32 %v1050, %v1232
    %v1234 = vpop.f32.mrb[0].mxu0
    %1235 = vmatprep.mubr.bf16.mxu0 0
    %1236 = vmatmul.mubr.bf16.gmra.mrb[0].mxu0 %v1026
    %v1237 = vpop.f32.mrb[0].mxu0
    %v1238 = vadd.f32 %v1050, %v1237
    %v1239 = vpop.f32.mrb[0].mxu0
    %v1240 = vpop.f32.mrb[0].mxu0
    %v1241 = vadd.f32 %v1050, %v1240
    %v1242 = vpop.f32.mrb[0].mxu0
    %1243 = vmatprep.mubr.bf16.mxu0 0
    %1244 = vmatmul.mubr.bf16.gmra.mrb[0].mxu0 %v1027
    %v1245 = vpop.f32.mrb[0].mxu0
    %v1246 = vadd.f32 %v1050, %v1245
    %v1247 = vpop.f32.mrb[0].mxu0
    %v1248 = vpop.f32.mrb[0].mxu0
    %v1249 = vadd.f32 %v1050, %v1248
    %v1250 = vpop.f32.mrb[0].mxu0
    %1251 = vmatprep.mubr.bf16.mxu0 0
    %1252 = vmatmul.mubr.bf16.gmra.mrb[0].mxu0 %v1028
    %v1253 = vpop.f32.mrb[0].mxu0
    %v1254 = vadd.f32 %v1050, %v1253
    %v1255 = vpop.f32.mrb[0].mxu0
    %v1256 = vpop.f32.mrb[0].mxu0
    %v1257 = vadd.f32 %v1050, %v1256
    %v1258 = vpop.f32.mrb[0].mxu0
    %1259 = vdwg.mxu0
    %v1260 = vmax.f32 %v1134, 0.0
    %v1261 = vmax.f32 %v1137, 0.0
    %v1262 = vmax.f32 %v1142, 0.0
    %v1263 = vmax.f32 %v1145, 0.0
    %v1264 = vmax.f32 %v1150, 0.0
    %v1265 = vmax.f32 %v1153, 0.0
    %v1266 = vmax.f32 %v1158, 0.0
    %v1267 = vmax.f32 %v1161, 0.0
    %v1268 = vmax.f32 %v1166, 0.0
    %v1269 = vmax.f32 %v1169, 0.0
    %v1270 = vmax.f32 %v1174, 0.0
    %v1271 = vmax.f32 %v1177, 0.0
    %v1272 = vmax.f32 %v1182, 0.0
    %v1273 = vmax.f32 %v1185, 0.0
    %v1274 = vmax.f32 %v1190, 0.0
    %v1275 = vmax.f32 %v1193, 0.0
    %v1276 = vmax.f32 %v1198, 0.0
    %v1277 = vmax.f32 %v1201, 0.0
    %v1278 = vmax.f32 %v1206, 0.0
    %v1279 = vmax.f32 %v1209, 0.0
    %v1280 = vmax.f32 %v1214, 0.0
    %v1281 = vmax.f32 %v1217, 0.0
    %v1282 = vmax.f32 %v1222, 0.0
    %v1283 = vmax.f32 %v1225, 0.0
    %v1284 = vmax.f32 %v1230, 0.0
    %v1285 = vmax.f32 %v1233, 0.0
    %v1286 = vmax.f32 %v1238, 0.0
    %v1287 = vmax.f32 %v1241, 0.0
    %v1288 = vmax.f32 %v1246, 0.0
    %v1289 = vmax.f32 %v1249, 0.0
    %v1290 = vmax.f32 %v1254, 0.0
    %v1291 = vmax.f32 %v1257, 0.0
    %v1292 = vpack.c.bf16 %v1261, %v1260
    %v1293 = vpack.c.bf16 %v1263, %v1262
    %v1294 = vpack.c.bf16 %v1265, %v1264
    %v1295 = vpack.c.bf16 %v1267, %v1266
    %v1296 = vpack.c.bf16 %v1269, %v1268
    %v1297 = vpack.c.bf16 %v1271, %v1270
    %v1298 = vpack.c.bf16 %v1273, %v1272
    %v1299 = vpack.c.bf16 %v1275, %v1274
    %v1300 = vpack.c.bf16 %v1277, %v1276
    %v1301 = vpack.c.bf16 %v1279, %v1278
    %v1302 = vpack.c.bf16 %v1281, %v1280
    %v1303 = vpack.c.bf16 %v1283, %v1282
    %v1304 = vpack.c.bf16 %v1285, %v1284
    %v1305 = vpack.c.bf16 %v1287, %v1286
    %v1306 = vpack.c.bf16 %v1289, %v1288
    %v1307 = vpack.c.bf16 %v1291, %v1290
    %s1308 = scalar_lea.vmem [#allocation2], 128
    %v1309 = vld [vmem:[%s1308] sm:$0xf]
    %v1310 = vld [vmem:[%s1308 + $0x4] sm:$0xf]
    %v1311 = vld [vmem:[%s1308 + $0x8] sm:$0xf]
    %v1312 = vld [vmem:[%s1308 + $0xc] sm:$0xf]
    %v1313 = vld [vmem:[%s1308 + $0x10] sm:$0xf]
    %v1314 = vld [vmem:[%s1308 + $0x14] sm:$0xf]
    %v1315 = vld [vmem:[%s1308 + $0x18] sm:$0xf]
    %v1316 = vld [vmem:[%s1308 + $0x1c] sm:$0xf]
    %v1317 = vld [vmem:[%s1308 + $0x20] sm:$0xf]
    %v1318 = vld [vmem:[%s1308 + $0x24] sm:$0xf]
    %v1319 = vld [vmem:[%s1308 + $0x28] sm:$0xf]
    %v1320 = vld [vmem:[%s1308 + $0x2c] sm:$0xf]
    %v1321 = vld [vmem:[%s1308 + $0x30] sm:$0xf]
    %v1322 = vld [vmem:[%s1308 + $0x34] sm:$0xf]
    %v1323 = vld [vmem:[%s1308 + $0x38] sm:$0xf]
    %v1324 = vld [vmem:[%s1308 + $0x3c] sm:$0xf]
    %v1325 = vld [vmem:[%s4 + $0x2] sm:$0x1]
    %v1326 = vlaneseq
    %v1327 = vshrl.u32 %v1326, 7
    %v1328 = vsub.s32 0, %v1327
    %v1329 = vrot.slane %v1325, %v1328
    %v1346 = vunpack.c.l.b16 %v1309
    %v1347 = vunpack.c.l.b16 %v1310
    %v1348 = vunpack.c.l.b16 %v1311
    %v1349 = vunpack.c.l.b16 %v1312
    %v1350 = vunpack.c.l.b16 %v1313
    %v1351 = vunpack.c.l.b16 %v1314
    %v1352 = vunpack.c.l.b16 %v1315
    %v1353 = vunpack.c.l.b16 %v1316
    %v1354 = vunpack.c.l.b16 %v1317
    %v1355 = vunpack.c.l.b16 %v1318
    %v1356 = vunpack.c.l.b16 %v1319
    %v1357 = vunpack.c.l.b16 %v1320
    %v1358 = vunpack.c.l.b16 %v1321
    %v1359 = vunpack.c.l.b16 %v1322
    %v1360 = vunpack.c.l.b16 %v1323
    %v1361 = vunpack.c.l.b16 %v1324
    %v1362 = vpack.c.b16 %v1347, %v1346
    %v1363 = vpack.c.b16 %v1349, %v1348
    %v1364 = vpack.c.b16 %v1351, %v1350
    %v1365 = vpack.c.b16 %v1353, %v1352
    %v1366 = vpack.c.b16 %v1355, %v1354
    %v1367 = vpack.c.b16 %v1357, %v1356
    %v1368 = vpack.c.b16 %v1359, %v1358
    %v1369 = vpack.c.b16 %v1361, %v1360
    %1378 = vmatprep.subr.bf16.mxu0 0
    %1379 = vmatpush1.bf16.msra.mxu0 %v1362
    %1380 = vmatprep.subr.bf16.mxu0 0
    %1381 = vmatpush1.bf16.msra.mxu0 %v1363
    %1382 = vmatprep.subr.bf16.mxu0 0
    %1383 = vmatpush1.bf16.msra.mxu0 %v1364
    %1384 = vmatprep.subr.bf16.mxu0 0
    %1385 = vmatpush1.bf16.msra.mxu0 %v1365
    %1386 = vmatprep.subr.bf16.mxu0 0
    %1387 = vmatpush1.bf16.msra.mxu0 %v1366
    %1388 = vmatprep.subr.bf16.mxu0 0
    %1389 = vmatpush1.bf16.msra.mxu0 %v1367
    %1390 = vmatprep.subr.bf16.mxu0 0
    %1391 = vmatpush1.bf16.msra.mxu0 %v1368
    %1392 = vmatprep.subr.bf16.mxu0 0
    %1393 = vmatpush1.bf16.msra.mxu0 %v1369
    %1394 = vmatprep.subr.bf16.mxu0 0
    %1395 = vmatpush1.bf16.msra.mxu0 0
    %1396 = vmatprep.subr.bf16.mxu0 0
    %1397 = vmatpush1.bf16.msra.mxu0 0
    %1398 = vmatprep.subr.bf16.mxu0 0
    %1399 = vmatpush1.bf16.msra.mxu0 0
    %1400 = vmatprep.subr.bf16.mxu0 0
    %1401 = vmatpush1.bf16.msra.mxu0 0
    %1402 = vmatprep.subr.bf16.mxu0 0
    %1403 = vmatpush1.bf16.msra.mxu0 0
    %1404 = vmatprep.subr.bf16.mxu0 0
    %1405 = vmatpush1.bf16.msra.mxu0 0
    %1406 = vmatprep.subr.bf16.mxu0 0
    %1407 = vmatpush1.bf16.msra.mxu0 0
    %1408 = vmatprep.subr.bf16.mxu0 0
    %1409 = vmatpush1.bf16.msra.mxu0 0
    %1410 = vmatprep.mubr.bf16.mxu0 0
    %1411 = vmatmul.mubr.bf16.gmra.mrb[0].mxu0 %v1292
    %v1412 = vpop.f32.mrb[0].mxu0
    %v1413 = vadd.f32 %v1329, %v1412
    %v1414 = vpop.f32.mrb[0].mxu0
    %v1415 = vpop.f32.mrb[0].mxu0
    %v1416 = vadd.f32 %v1329, %v1415
    %v1417 = vpop.f32.mrb[0].mxu0
    %1418 = vmatprep.mubr.bf16.mxu0 0
    %1419 = vmatmul.mubr.bf16.gmra.mrb[0].mxu0 %v1293
    %v1420 = vpop.f32.mrb[0].mxu0
    %v1421 = vadd.f32 %v1329, %v1420
    %v1422 = vpop.f32.mrb[0].mxu0
    %v1423 = vpop.f32.mrb[0].mxu0
    %v1424 = vadd.f32 %v1329, %v1423
    %v1425 = vpop.f32.mrb[0].mxu0
    %1426 = vmatprep.mubr.bf16.mxu0 0
    %1427 = vmatmul.mubr.bf16.gmra.mrb[0].mxu0 %v1294
    %v1428 = vpop.f32.mrb[0].mxu0
    %v1429 = vadd.f32 %v1329, %v1428
    %v1430 = vpop.f32.mrb[0].mxu0
    %v1431 = vpop.f32.mrb[0].mxu0
    %v1432 = vadd.f32 %v1329, %v1431
    %v1433 = vpop.f32.mrb[0].mxu0
    %1434 = vmatprep.mubr.bf16.mxu0 0
    %1435 = vmatmul.mubr.bf16.gmra.mrb[0].mxu0 %v1295
    %v1436 = vpop.f32.mrb[0].mxu0
    %v1437 = vadd.f32 %v1329, %v1436
    %v1438 = vpop.f32.mrb[0].mxu0
    %v1439 = vpop.f32.mrb[0].mxu0
    %v1440 = vadd.f32 %v1329, %v1439
    %v1441 = vpop.f32.mrb[0].mxu0
    %1442 = vmatprep.mubr.bf16.mxu0 0
    %1443 = vmatmul.mubr.bf16.gmra.mrb[0].mxu0 %v1296
    %v1444 = vpop.f32.mrb[0].mxu0
    %v1445 = vadd.f32 %v1329, %v1444
    %v1446 = vpop.f32.mrb[0].mxu0
    %v1447 = vpop.f32.mrb[0].mxu0
    %v1448 = vadd.f32 %v1329, %v1447
    %v1449 = vpop.f32.mrb[0].mxu0
    %1450 = vmatprep.mubr.bf16.mxu0 0
    %1451 = vmatmul.mubr.bf16.gmra.mrb[0].mxu0 %v1297
    %v1452 = vpop.f32.mrb[0].mxu0
    %v1453 = vadd.f32 %v1329, %v1452
    %v1454 = vpop.f32.mrb[0].mxu0
    %v1455 = vpop.f32.mrb[0].mxu0
    %v1456 = vadd.f32 %v1329, %v1455
    %v1457 = vpop.f32.mrb[0].mxu0
    %1458 = vmatprep.mubr.bf16.mxu0 0
    %1459 = vmatmul.mubr.bf16.gmra.mrb[0].mxu0 %v1298
    %v1460 = vpop.f32.mrb[0].mxu0
    %v1461 = vadd.f32 %v1329, %v1460
    %v1462 = vpop.f32.mrb[0].mxu0
    %v1463 = vpop.f32.mrb[0].mxu0
    %v1464 = vadd.f32 %v1329, %v1463
    %v1465 = vpop.f32.mrb[0].mxu0
    %1466 = vmatprep.mubr.bf16.mxu0 0
    %1467 = vmatmul.mubr.bf16.gmra.mrb[0].mxu0 %v1299
    %v1468 = vpop.f32.mrb[0].mxu0
    %v1469 = vadd.f32 %v1329, %v1468
    %v1470 = vpop.f32.mrb[0].mxu0
    %v1471 = vpop.f32.mrb[0].mxu0
    %v1472 = vadd.f32 %v1329, %v1471
    %v1473 = vpop.f32.mrb[0].mxu0
    %1474 = vmatprep.mubr.bf16.mxu0 0
    %1475 = vmatmul.mubr.bf16.gmra.mrb[0].mxu0 %v1300
    %v1476 = vpop.f32.mrb[0].mxu0
    %v1477 = vadd.f32 %v1329, %v1476
    %v1478 = vpop.f32.mrb[0].mxu0
    %v1479 = vpop.f32.mrb[0].mxu0
    %v1480 = vadd.f32 %v1329, %v1479
    %v1481 = vpop.f32.mrb[0].mxu0
    %1482 = vmatprep.mubr.bf16.mxu0 0
    %1483 = vmatmul.mubr.bf16.gmra.mrb[0].mxu0 %v1301
    %v1484 = vpop.f32.mrb[0].mxu0
    %v1485 = vadd.f32 %v1329, %v1484
    %v1486 = vpop.f32.mrb[0].mxu0
    %v1487 = vpop.f32.mrb[0].mxu0
    %v1488 = vadd.f32 %v1329, %v1487
    %v1489 = vpop.f32.mrb[0].mxu0
    %1490 = vmatprep.mubr.bf16.mxu0 0
    %1491 = vmatmul.mubr.bf16.gmra.mrb[0].mxu0 %v1302
    %v1492 = vpop.f32.mrb[0].mxu0
    %v1493 = vadd.f32 %v1329, %v1492
    %v1494 = vpop.f32.mrb[0].mxu0
    %v1495 = vpop.f32.mrb[0].mxu0
    %v1496 = vadd.f32 %v1329, %v1495
    %v1497 = vpop.f32.mrb[0].mxu0
    %1498 = vmatprep.mubr.bf16.mxu0 0
    %1499 = vmatmul.mubr.bf16.gmra.mrb[0].mxu0 %v1303
    %v1500 = vpop.f32.mrb[0].mxu0
    %v1501 = vadd.f32 %v1329, %v1500
    %v1502 = vpop.f32.mrb[0].mxu0
    %v1503 = vpop.f32.mrb[0].mxu0
    %v1504 = vadd.f32 %v1329, %v1503
    %v1505 = vpop.f32.mrb[0].mxu0
    %1506 = vmatprep.mubr.bf16.mxu0 0
    %1507 = vmatmul.mubr.bf16.gmra.mrb[0].mxu0 %v1304
    %v1508 = vpop.f32.mrb[0].mxu0
    %v1509 = vadd.f32 %v1329, %v1508
    %v1510 = vpop.f32.mrb[0].mxu0
    %v1511 = vpop.f32.mrb[0].mxu0
    %v1512 = vadd.f32 %v1329, %v1511
    %v1513 = vpop.f32.mrb[0].mxu0
    %1514 = vmatprep.mubr.bf16.mxu0 0
    %1515 = vmatmul.mubr.bf16.gmra.mrb[0].mxu0 %v1305
    %v1516 = vpop.f32.mrb[0].mxu0
    %v1517 = vadd.f32 %v1329, %v1516
    %v1518 = vpop.f32.mrb[0].mxu0
    %v1519 = vpop.f32.mrb[0].mxu0
    %v1520 = vadd.f32 %v1329, %v1519
    %v1521 = vpop.f32.mrb[0].mxu0
    %1522 = vmatprep.mubr.bf16.mxu0 0
    %1523 = vmatmul.mubr.bf16.gmra.mrb[0].mxu0 %v1306
    %v1524 = vpop.f32.mrb[0].mxu0
    %v1525 = vadd.f32 %v1329, %v1524
    %v1526 = vpop.f32.mrb[0].mxu0
    %v1527 = vpop.f32.mrb[0].mxu0
    %v1528 = vadd.f32 %v1329, %v1527
    %v1529 = vpop.f32.mrb[0].mxu0
    %1530 = vmatprep.mubr.bf16.mxu0 0
    %1531 = vmatmul.mubr.bf16.gmra.mrb[0].mxu0 %v1307
    %v1532 = vpop.f32.mrb[0].mxu0
    %v1533 = vadd.f32 %v1329, %v1532
    %v1534 = vpop.f32.mrb[0].mxu0
    %v1535 = vpop.f32.mrb[0].mxu0
    %v1536 = vadd.f32 %v1329, %v1535
    %v1537 = vpop.f32.mrb[0].mxu0
    %1538 = vdwg.mxu0
    %v1539 = vmax.f32 %v1413, 0.0
    %v1540 = vmax.f32 %v1416, 0.0
    %v1541 = vmax.f32 %v1421, 0.0
    %v1542 = vmax.f32 %v1424, 0.0
    %v1543 = vmax.f32 %v1429, 0.0
    %v1544 = vmax.f32 %v1432, 0.0
    %v1545 = vmax.f32 %v1437, 0.0
    %v1546 = vmax.f32 %v1440, 0.0
    %v1547 = vmax.f32 %v1445, 0.0
    %v1548 = vmax.f32 %v1448, 0.0
    %v1549 = vmax.f32 %v1453, 0.0
    %v1550 = vmax.f32 %v1456, 0.0
    %v1551 = vmax.f32 %v1461, 0.0
    %v1552 = vmax.f32 %v1464, 0.0
    %v1553 = vmax.f32 %v1469, 0.0
    %v1554 = vmax.f32 %v1472, 0.0
    %v1555 = vmax.f32 %v1477, 0.0
    %v1556 = vmax.f32 %v1480, 0.0
    %v1557 = vmax.f32 %v1485, 0.0
    %v1558 = vmax.f32 %v1488, 0.0
    %v1559 = vmax.f32 %v1493, 0.0
    %v1560 = vmax.f32 %v1496, 0.0
    %v1561 = vmax.f32 %v1501, 0.0
    %v1562 = vmax.f32 %v1504, 0.0
    %v1563 = vmax.f32 %v1509, 0.0
    %v1564 = vmax.f32 %v1512, 0.0
    %v1565 = vmax.f32 %v1517, 0.0
    %v1566 = vmax.f32 %v1520, 0.0
    %v1567 = vmax.f32 %v1525, 0.0
    %v1568 = vmax.f32 %v1528, 0.0
    %v1569 = vmax.f32 %v1533, 0.0
    %v1570 = vmax.f32 %v1536, 0.0
    %v1571 = vpack.c.bf16 %v1540, %v1539
    %v1572 = vpack.c.bf16 %v1542, %v1541
    %v1573 = vpack.c.bf16 %v1544, %v1543
    %v1574 = vpack.c.bf16 %v1546, %v1545
    %v1575 = vpack.c.bf16 %v1548, %v1547
    %v1576 = vpack.c.bf16 %v1550, %v1549
    %v1577 = vpack.c.bf16 %v1552, %v1551
    %v1578 = vpack.c.bf16 %v1554, %v1553
    %v1579 = vpack.c.bf16 %v1556, %v1555
    %v1580 = vpack.c.bf16 %v1558, %v1557
    %v1581 = vpack.c.bf16 %v1560, %v1559
    %v1582 = vpack.c.bf16 %v1562, %v1561
    %v1583 = vpack.c.bf16 %v1564, %v1563
    %v1584 = vpack.c.bf16 %v1566, %v1565
    %v1585 = vpack.c.bf16 %v1568, %v1567
    %v1586 = vpack.c.bf16 %v1570, %v1569
    %s1587 = scalar_lea.vmem [#allocation2], 192
    %v1588 = vld [vmem:[%s1587] sm:$0xf]
    %v1589 = vld [vmem:[%s1587 + $0x4] sm:$0xf]
    %v1590 = vld [vmem:[%s1587 + $0x8] sm:$0xf]
    %v1591 = vld [vmem:[%s1587 + $0xc] sm:$0xf]
    %v1592 = vld [vmem:[%s1587 + $0x10] sm:$0xf]
    %v1593 = vld [vmem:[%s1587 + $0x14] sm:$0xf]
    %v1594 = vld [vmem:[%s1587 + $0x18] sm:$0xf]
    %v1595 = vld [vmem:[%s1587 + $0x1c] sm:$0xf]
    %v1596 = vld [vmem:[%s1587 + $0x20] sm:$0xf]
    %v1597 = vld [vmem:[%s1587 + $0x24] sm:$0xf]
    %v1598 = vld [vmem:[%s1587 + $0x28] sm:$0xf]
    %v1599 = vld [vmem:[%s1587 + $0x2c] sm:$0xf]
    %v1600 = vld [vmem:[%s1587 + $0x30] sm:$0xf]
    %v1601 = vld [vmem:[%s1587 + $0x34] sm:$0xf]
    %v1602 = vld [vmem:[%s1587 + $0x38] sm:$0xf]
    %v1603 = vld [vmem:[%s1587 + $0x3c] sm:$0xf]
    %v1604 = vld [vmem:[%s4 + $0x3] sm:$0x1]
    %v1605 = vlaneseq
    %v1606 = vshrl.u32 %v1605, 7
    %v1607 = vsub.s32 0, %v1606
    %v1608 = vrot.slane %v1604, %v1607
    %v1625 = vunpack.c.l.b16 %v1588
    %v1626 = vunpack.c.l.b16 %v1589
    %v1627 = vunpack.c.l.b16 %v1590
    %v1628 = vunpack.c.l.b16 %v1591
    %v1629 = vunpack.c.l.b16 %v1592
    %v1630 = vunpack.c.l.b16 %v1593
    %v1631 = vunpack.c.l.b16 %v1594
    %v1632 = vunpack.c.l.b16 %v1595
    %v1633 = vunpack.c.l.b16 %v1596
    %v1634 = vunpack.c.l.b16 %v1597
    %v1635 = vunpack.c.l.b16 %v1598
    %v1636 = vunpack.c.l.b16 %v1599
    %v1637 = vunpack.c.l.b16 %v1600
    %v1638 = vunpack.c.l.b16 %v1601
    %v1639 = vunpack.c.l.b16 %v1602
    %v1640 = vunpack.c.l.b16 %v1603
    %v1641 = vpack.c.b16 %v1626, %v1625
    %v1642 = vpack.c.b16 %v1628, %v1627
    %v1643 = vpack.c.b16 %v1630, %v1629
    %v1644 = vpack.c.b16 %v1632, %v1631
    %v1645 = vpack.c.b16 %v1634, %v1633
    %v1646 = vpack.c.b16 %v1636, %v1635
    %v1647 = vpack.c.b16 %v1638, %v1637
    %v1648 = vpack.c.b16 %v1640, %v1639
    %1657 = vmatprep.subr.bf16.mxu0 0
    %1658 = vmatpush1.bf16.msra.mxu0 %v1641
    %1659 = vmatprep.subr.bf16.mxu0 0
    %1660 = vmatpush1.bf16.msra.mxu0 %v1642
    %1661 = vmatprep.subr.bf16.mxu0 0
    %1662 = vmatpush1.bf16.msra.mxu0 %v1643
    %1663 = vmatprep.subr.bf16.mxu0 0
    %1664 = vmatpush1.bf16.msra.mxu0 %v1644
    %1665 = vmatprep.subr.bf16.mxu0 0
    %1666 = vmatpush1.bf16.msra.mxu0 %v1645
    %1667 = vmatprep.subr.bf16.mxu0 0
    %1668 = vmatpush1.bf16.msra.mxu0 %v1646
    %1669 = vmatprep.subr.bf16.mxu0 0
    %1670 = vmatpush1.bf16.msra.mxu0 %v1647
    %1671 = vmatprep.subr.bf16.mxu0 0
    %1672 = vmatpush1.bf16.msra.mxu0 %v1648
    %1673 = vmatprep.subr.bf16.mxu0 0
    %1674 = vmatpush1.bf16.msra.mxu0 0
    %1675 = vmatprep.subr.bf16.mxu0 0
    %1676 = vmatpush1.bf16.msra.mxu0 0
    %1677 = vmatprep.subr.bf16.mxu0 0
    %1678 = vmatpush1.bf16.msra.mxu0 0
    %1679 = vmatprep.subr.bf16.mxu0 0
    %1680 = vmatpush1.bf16.msra.mxu0 0
    %1681 = vmatprep.subr.bf16.mxu0 0
    %1682 = vmatpush1.bf16.msra.mxu0 0
    %1683 = vmatprep.subr.bf16.mxu0 0
    %1684 = vmatpush1.bf16.msra.mxu0 0
    %1685 = vmatprep.subr.bf16.mxu0 0
    %1686 = vmatpush1.bf16.msra.mxu0 0
    %1687 = vmatprep.subr.bf16.mxu0 0
    %1688 = vmatpush1.bf16.msra.mxu0 0
    %1689 = vmatprep.mubr.bf16.mxu0 0
    %1690 = vmatmul.mubr.bf16.gmra.mrb[0].mxu0 %v1571
    %v1691 = vpop.f32.mrb[0].mxu0
    %v1692 = vadd.f32 %v1608, %v1691
    %v1693 = vpop.f32.mrb[0].mxu0
    %v1694 = vpop.f32.mrb[0].mxu0
    %v1695 = vadd.f32 %v1608, %v1694
    %v1696 = vpop.f32.mrb[0].mxu0
    %1697 = vmatprep.mubr.bf16.mxu0 0
    %1698 = vmatmul.mubr.bf16.gmra.mrb[0].mxu0 %v1572
    %v1699 = vpop.f32.mrb[0].mxu0
    %v1700 = vadd.f32 %v1608, %v1699
    %v1701 = vpop.f32.mrb[0].mxu0
    %v1702 = vpop.f32.mrb[0].mxu0
    %v1703 = vadd.f32 %v1608, %v1702
    %v1704 = vpop.f32.mrb[0].mxu0
    %1705 = vmatprep.mubr.bf16.mxu0 0
    %1706 = vmatmul.mubr.bf16.gmra.mrb[0].mxu0 %v1573
    %v1707 = vpop.f32.mrb[0].mxu0
    %v1708 = vadd.f32 %v1608, %v1707
    %v1709 = vpop.f32.mrb[0].mxu0
    %v1710 = vpop.f32.mrb[0].mxu0
    %v1711 = vadd.f32 %v1608, %v1710
    %v1712 = vpop.f32.mrb[0].mxu0
    %1713 = vmatprep.mubr.bf16.mxu0 0
    %1714 = vmatmul.mubr.bf16.gmra.mrb[0].mxu0 %v1574
    %v1715 = vpop.f32.mrb[0].mxu0
    %v1716 = vadd.f32 %v1608, %v1715
    %v1717 = vpop.f32.mrb[0].mxu0
    %v1718 = vpop.f32.mrb[0].mxu0
    %v1719 = vadd.f32 %v1608, %v1718
    %v1720 = vpop.f32.mrb[0].mxu0
    %1721 = vmatprep.mubr.bf16.mxu0 0
    %1722 = vmatmul.mubr.bf16.gmra.mrb[0].mxu0 %v1575
    %v1723 = vpop.f32.mrb[0].mxu0
    %v1724 = vadd.f32 %v1608, %v1723
    %v1725 = vpop.f32.mrb[0].mxu0
    %v1726 = vpop.f32.mrb[0].mxu0
    %v1727 = vadd.f32 %v1608, %v1726
    %v1728 = vpop.f32.mrb[0].mxu0
    %1729 = vmatprep.mubr.bf16.mxu0 0
    %1730 = vmatmul.mubr.bf16.gmra.mrb[0].mxu0 %v1576
    %v1731 = vpop.f32.mrb[0].mxu0
    %v1732 = vadd.f32 %v1608, %v1731
    %v1733 = vpop.f32.mrb[0].mxu0
    %v1734 = vpop.f32.mrb[0].mxu0
    %v1735 = vadd.f32 %v1608, %v1734
    %v1736 = vpop.f32.mrb[0].mxu0
    %1737 = vmatprep.mubr.bf16.mxu0 0
    %1738 = vmatmul.mubr.bf16.gmra.mrb[0].mxu0 %v1577
    %v1739 = vpop.f32.mrb[0].mxu0
    %v1740 = vadd.f32 %v1608, %v1739
    %v1741 = vpop.f32.mrb[0].mxu0
    %v1742 = vpop.f32.mrb[0].mxu0
    %v1743 = vadd.f32 %v1608, %v1742
    %v1744 = vpop.f32.mrb[0].mxu0
    %1745 = vmatprep.mubr.bf16.mxu0 0
    %1746 = vmatmul.mubr.bf16.gmra.mrb[0].mxu0 %v1578
    %v1747 = vpop.f32.mrb[0].mxu0
    %v1748 = vadd.f32 %v1608, %v1747
    %v1749 = vpop.f32.mrb[0].mxu0
    %v1750 = vpop.f32.mrb[0].mxu0
    %v1751 = vadd.f32 %v1608, %v1750
    %v1752 = vpop.f32.mrb[0].mxu0
    %1753 = vmatprep.mubr.bf16.mxu0 0
    %1754 = vmatmul.mubr.bf16.gmra.mrb[0].mxu0 %v1579
    %v1755 = vpop.f32.mrb[0].mxu0
    %v1756 = vadd.f32 %v1608, %v1755
    %v1757 = vpop.f32.mrb[0].mxu0
    %v1758 = vpop.f32.mrb[0].mxu0
    %v1759 = vadd.f32 %v1608, %v1758
    %v1760 = vpop.f32.mrb[0].mxu0
    %1761 = vmatprep.mubr.bf16.mxu0 0
    %1762 = vmatmul.mubr.bf16.gmra.mrb[0].mxu0 %v1580
    %v1763 = vpop.f32.mrb[0].mxu0
    %v1764 = vadd.f32 %v1608, %v1763
    %v1765 = vpop.f32.mrb[0].mxu0
    %v1766 = vpop.f32.mrb[0].mxu0
    %v1767 = vadd.f32 %v1608, %v1766
    %v1768 = vpop.f32.mrb[0].mxu0
    %1769 = vmatprep.mubr.bf16.mxu0 0
    %1770 = vmatmul.mubr.bf16.gmra.mrb[0].mxu0 %v1581
    %v1771 = vpop.f32.mrb[0].mxu0
    %v1772 = vadd.f32 %v1608, %v1771
    %v1773 = vpop.f32.mrb[0].mxu0
    %v1774 = vpop.f32.mrb[0].mxu0
    %v1775 = vadd.f32 %v1608, %v1774
    %v1776 = vpop.f32.mrb[0].mxu0
    %1777 = vmatprep.mubr.bf16.mxu0 0
    %1778 = vmatmul.mubr.bf16.gmra.mrb[0].mxu0 %v1582
    %v1779 = vpop.f32.mrb[0].mxu0
    %v1780 = vadd.f32 %v1608, %v1779
    %v1781 = vpop.f32.mrb[0].mxu0
    %v1782 = vpop.f32.mrb[0].mxu0
    %v1783 = vadd.f32 %v1608, %v1782
    %v1784 = vpop.f32.mrb[0].mxu0
    %1785 = vmatprep.mubr.bf16.mxu0 0
    %1786 = vmatmul.mubr.bf16.gmra.mrb[0].mxu0 %v1583
    %v1787 = vpop.f32.mrb[0].mxu0
    %v1788 = vadd.f32 %v1608, %v1787
    %v1789 = vpop.f32.mrb[0].mxu0
    %v1790 = vpop.f32.mrb[0].mxu0
    %v1791 = vadd.f32 %v1608, %v1790
    %v1792 = vpop.f32.mrb[0].mxu0
    %1793 = vmatprep.mubr.bf16.mxu0 0
    %1794 = vmatmul.mubr.bf16.gmra.mrb[0].mxu0 %v1584
    %v1795 = vpop.f32.mrb[0].mxu0
    %v1796 = vadd.f32 %v1608, %v1795
    %v1797 = vpop.f32.mrb[0].mxu0
    %v1798 = vpop.f32.mrb[0].mxu0
    %v1799 = vadd.f32 %v1608, %v1798
    %v1800 = vpop.f32.mrb[0].mxu0
    %1801 = vmatprep.mubr.bf16.mxu0 0
    %1802 = vmatmul.mubr.bf16.gmra.mrb[0].mxu0 %v1585
    %v1803 = vpop.f32.mrb[0].mxu0
    %v1804 = vadd.f32 %v1608, %v1803
    %v1805 = vpop.f32.mrb[0].mxu0
    %v1806 = vpop.f32.mrb[0].mxu0
    %v1807 = vadd.f32 %v1608, %v1806
    %v1808 = vpop.f32.mrb[0].mxu0
    %1809 = vmatprep.mubr.bf16.mxu0 0
    %1810 = vmatmul.mubr.bf16.gmra.mrb[0].mxu0 %v1586
    %v1811 = vpop.f32.mrb[0].mxu0
    %v1812 = vadd.f32 %v1608, %v1811
    %v1813 = vpop.f32.mrb[0].mxu0
    %v1814 = vpop.f32.mrb[0].mxu0
    %v1815 = vadd.f32 %v1608, %v1814
    %v1816 = vpop.f32.mrb[0].mxu0
    %1817 = vdwg.mxu0
    %v1818 = vmax.f32 %v1692, 0.0
    %v1819 = vmax.f32 %v1695, 0.0
    %v1820 = vmax.f32 %v1700, 0.0
    %v1821 = vmax.f32 %v1703, 0.0
    %v1822 = vmax.f32 %v1708, 0.0
    %v1823 = vmax.f32 %v1711, 0.0
    %v1824 = vmax.f32 %v1716, 0.0
    %v1825 = vmax.f32 %v1719, 0.0
    %v1826 = vmax.f32 %v1724, 0.0
    %v1827 = vmax.f32 %v1727, 0.0
    %v1828 = vmax.f32 %v1732, 0.0
    %v1829 = vmax.f32 %v1735, 0.0
    %v1830 = vmax.f32 %v1740, 0.0
    %v1831 = vmax.f32 %v1743, 0.0
    %v1832 = vmax.f32 %v1748, 0.0
    %v1833 = vmax.f32 %v1751, 0.0
    %v1834 = vmax.f32 %v1756, 0.0
    %v1835 = vmax.f32 %v1759, 0.0
    %v1836 = vmax.f32 %v1764, 0.0
    %v1837 = vmax.f32 %v1767, 0.0
    %v1838 = vmax.f32 %v1772, 0.0
    %v1839 = vmax.f32 %v1775, 0.0
    %v1840 = vmax.f32 %v1780, 0.0
    %v1841 = vmax.f32 %v1783, 0.0
    %v1842 = vmax.f32 %v1788, 0.0
    %v1843 = vmax.f32 %v1791, 0.0
    %v1844 = vmax.f32 %v1796, 0.0
    %v1845 = vmax.f32 %v1799, 0.0
    %v1846 = vmax.f32 %v1804, 0.0
    %v1847 = vmax.f32 %v1807, 0.0
    %v1848 = vmax.f32 %v1812, 0.0
    %v1849 = vmax.f32 %v1815, 0.0
    %v1850 = vpack.c.bf16 %v1819, %v1818
    %v1851 = vpack.c.bf16 %v1821, %v1820
    %v1852 = vpack.c.bf16 %v1823, %v1822
    %v1853 = vpack.c.bf16 %v1825, %v1824
    %v1854 = vpack.c.bf16 %v1827, %v1826
    %v1855 = vpack.c.bf16 %v1829, %v1828
    %v1856 = vpack.c.bf16 %v1831, %v1830
    %v1857 = vpack.c.bf16 %v1833, %v1832
    %v1858 = vpack.c.bf16 %v1835, %v1834
    %v1859 = vpack.c.bf16 %v1837, %v1836
    %v1860 = vpack.c.bf16 %v1839, %v1838
    %v1861 = vpack.c.bf16 %v1841, %v1840
    %v1862 = vpack.c.bf16 %v1843, %v1842
    %v1863 = vpack.c.bf16 %v1845, %v1844
    %v1864 = vpack.c.bf16 %v1847, %v1846
    %v1865 = vpack.c.bf16 %v1849, %v1848
    %s1866 = scalar_lea.vmem [#allocation2], 256
    %v1867 = vld [vmem:[%s1866] sm:$0xf]
    %v1868 = vld [vmem:[%s1866 + $0x4] sm:$0xf]
    %v1869 = vld [vmem:[%s1866 + $0x8] sm:$0xf]
    %v1870 = vld [vmem:[%s1866 + $0xc] sm:$0xf]
    %v1871 = vld [vmem:[%s1866 + $0x10] sm:$0xf]
    %v1872 = vld [vmem:[%s1866 + $0x14] sm:$0xf]
    %v1873 = vld [vmem:[%s1866 + $0x18] sm:$0xf]
    %v1874 = vld [vmem:[%s1866 + $0x1c] sm:$0xf]
    %v1875 = vld [vmem:[%s1866 + $0x20] sm:$0xf]
    %v1876 = vld [vmem:[%s1866 + $0x24] sm:$0xf]
    %v1877 = vld [vmem:[%s1866 + $0x28] sm:$0xf]
    %v1878 = vld [vmem:[%s1866 + $0x2c] sm:$0xf]
    %v1879 = vld [vmem:[%s1866 + $0x30] sm:$0xf]
    %v1880 = vld [vmem:[%s1866 + $0x34] sm:$0xf]
    %v1881 = vld [vmem:[%s1866 + $0x38] sm:$0xf]
    %v1882 = vld [vmem:[%s1866 + $0x3c] sm:$0xf]
    %v1883 = vld [vmem:[%s4 + $0x4] sm:$0x1]
    %v1884 = vlaneseq
    %v1885 = vshrl.u32 %v1884, 7
    %v1886 = vsub.s32 0, %v1885
    %v1887 = vrot.slane %v1883, %v1886
    %v1904 = vunpack.c.l.b16 %v1867
    %v1905 = vunpack.c.l.b16 %v1868
    %v1906 = vunpack.c.l.b16 %v1869
    %v1907 = vunpack.c.l.b16 %v1870
    %v1908 = vunpack.c.l.b16 %v1871
    %v1909 = vunpack.c.l.b16 %v1872
    %v1910 = vunpack.c.l.b16 %v1873
    %v1911 = vunpack.c.l.b16 %v1874
    %v1912 = vunpack.c.l.b16 %v1875
    %v1913 = vunpack.c.l.b16 %v1876
    %v1914 = vunpack.c.l.b16 %v1877
    %v1915 = vunpack.c.l.b16 %v1878
    %v1916 = vunpack.c.l.b16 %v1879
    %v1917 = vunpack.c.l.b16 %v1880
    %v1918 = vunpack.c.l.b16 %v1881
    %v1919 = vunpack.c.l.b16 %v1882
    %v1920 = vpack.c.b16 %v1905, %v1904
    %v1921 = vpack.c.b16 %v1907, %v1906
    %v1922 = vpack.c.b16 %v1909, %v1908
    %v1923 = vpack.c.b16 %v1911, %v1910
    %v1924 = vpack.c.b16 %v1913, %v1912
    %v1925 = vpack.c.b16 %v1915, %v1914
    %v1926 = vpack.c.b16 %v1917, %v1916
    %v1927 = vpack.c.b16 %v1919, %v1918
    %1936 = vmatprep.subr.bf16.mxu0 0
    %1937 = vmatpush1.bf16.msra.mxu0 %v1920
    %1938 = vmatprep.subr.bf16.mxu0 0
    %1939 = vmatpush1.bf16.msra.mxu0 %v1921
    %1940 = vmatprep.subr.bf16.mxu0 0
    %1941 = vmatpush1.bf16.msra.mxu0 %v1922
    %1942 = vmatprep.subr.bf16.mxu0 0
    %1943 = vmatpush1.bf16.msra.mxu0 %v1923
    %1944 = vmatprep.subr.bf16.mxu0 0
    %1945 = vmatpush1.bf16.msra.mxu0 %v1924
    %1946 = vmatprep.subr.bf16.mxu0 0
    %1947 = vmatpush1.bf16.msra.mxu0 %v1925
    %1948 = vmatprep.subr.bf16.mxu0 0
    %1949 = vmatpush1.bf16.msra.mxu0 %v1926
    %1950 = vmatprep.subr.bf16.mxu0 0
    %1951 = vmatpush1.bf16.msra.mxu0 %v1927
    %1952 = vmatprep.subr.bf16.mxu0 0
    %1953 = vmatpush1.bf16.msra.mxu0 0
    %1954 = vmatprep.subr.bf16.mxu0 0
    %1955 = vmatpush1.bf16.msra.mxu0 0
    %1956 = vmatprep.subr.bf16.mxu0 0
    %1957 = vmatpush1.bf16.msra.mxu0 0
    %1958 = vmatprep.subr.bf16.mxu0 0
    %1959 = vmatpush1.bf16.msra.mxu0 0
    %1960 = vmatprep.subr.bf16.mxu0 0
    %1961 = vmatpush1.bf16.msra.mxu0 0
    %1962 = vmatprep.subr.bf16.mxu0 0
    %1963 = vmatpush1.bf16.msra.mxu0 0
    %1964 = vmatprep.subr.bf16.mxu0 0
    %1965 = vmatpush1.bf16.msra.mxu0 0
    %1966 = vmatprep.subr.bf16.mxu0 0
    %1967 = vmatpush1.bf16.msra.mxu0 0
    %1968 = vmatprep.mubr.bf16.mxu0 0
    %1969 = vmatmul.mubr.bf16.gmra.mrb[0].mxu0 %v1850
    %v1970 = vpop.f32.mrb[0].mxu0
    %v1971 = vadd.f32 %v1887, %v1970
    %v1972 = vpop.f32.mrb[0].mxu0
    %v1973 = vpop.f32.mrb[0].mxu0
    %v1974 = vadd.f32 %v1887, %v1973
    %v1975 = vpop.f32.mrb[0].mxu0
    %1976 = vmatprep.mubr.bf16.mxu0 0
    %1977 = vmatmul.mubr.bf16.gmra.mrb[0].mxu0 %v1851
    %v1978 = vpop.f32.mrb[0].mxu0
    %v1979 = vadd.f32 %v1887, %v1978
    %v1980 = vpop.f32.mrb[0].mxu0
    %v1981 = vpop.f32.mrb[0].mxu0
    %v1982 = vadd.f32 %v1887, %v1981
    %v1983 = vpop.f32.mrb[0].mxu0
    %1984 = vmatprep.mubr.bf16.mxu0 0
    %1985 = vmatmul.mubr.bf16.gmra.mrb[0].mxu0 %v1852
    %v1986 = vpop.f32.mrb[0].mxu0
    %v1987 = vadd.f32 %v1887, %v1986
    %v1988 = vpop.f32.mrb[0].mxu0
    %v1989 = vpop.f32.mrb[0].mxu0
    %v1990 = vadd.f32 %v1887, %v1989
    %v1991 = vpop.f32.mrb[0].mxu0
    %1992 = vmatprep.mubr.bf16.mxu0 0
    %1993 = vmatmul.mubr.bf16.gmra.mrb[0].mxu0 %v1853
    %v1994 = vpop.f32.mrb[0].mxu0
    %v1995 = vadd.f32 %v1887, %v1994
    %v1996 = vpop.f32.mrb[0].mxu0
    %v1997 = vpop.f32.mrb[0].mxu0
    %v1998 = vadd.f32 %v1887, %v1997
    %v1999 = vpop.f32.mrb[0].mxu0
    %2000 = vmatprep.mubr.bf16.mxu0 0
    %2001 = vmatmul.mubr.bf16.gmra.mrb[0].mxu0 %v1854
    %v2002 = vpop.f32.mrb[0].mxu0
    %v2003 = vadd.f32 %v1887, %v2002
    %v2004 = vpop.f32.mrb[0].mxu0
    %v2005 = vpop.f32.mrb[0].mxu0
    %v2006 = vadd.f32 %v1887, %v2005
    %v2007 = vpop.f32.mrb[0].mxu0
    %2008 = vmatprep.mubr.bf16.mxu0 0
    %2009 = vmatmul.mubr.bf16.gmra.mrb[0].mxu0 %v1855
    %v2010 = vpop.f32.mrb[0].mxu0
    %v2011 = vadd.f32 %v1887, %v2010
    %v2012 = vpop.f32.mrb[0].mxu0
    %v2013 = vpop.f32.mrb[0].mxu0
    %v2014 = vadd.f32 %v1887, %v2013
    %v2015 = vpop.f32.mrb[0].mxu0
    %2016 = vmatprep.mubr.bf16.mxu0 0
    %2017 = vmatmul.mubr.bf16.gmra.mrb[0].mxu0 %v1856
    %v2018 = vpop.f32.mrb[0].mxu0
    %v2019 = vadd.f32 %v1887, %v2018
    %v2020 = vpop.f32.mrb[0].mxu0
    %v2021 = vpop.f32.mrb[0].mxu0
    %v2022 = vadd.f32 %v1887, %v2021
    %v2023 = vpop.f32.mrb[0].mxu0
    %2024 = vmatprep.mubr.bf16.mxu0 0
    %2025 = vmatmul.mubr.bf16.gmra.mrb[0].mxu0 %v1857
    %v2026 = vpop.f32.mrb[0].mxu0
    %v2027 = vadd.f32 %v1887, %v2026
    %v2028 = vpop.f32.mrb[0].mxu0
    %v2029 = vpop.f32.mrb[0].mxu0
    %v2030 = vadd.f32 %v1887, %v2029
    %v2031 = vpop.f32.mrb[0].mxu0
    %2032 = vmatprep.mubr.bf16.mxu0 0
    %2033 = vmatmul.mubr.bf16.gmra.mrb[0].mxu0 %v1858
    %v2034 = vpop.f32.mrb[0].mxu0
    %v2035 = vadd.f32 %v1887, %v2034
    %v2036 = vpop.f32.mrb[0].mxu0
    %v2037 = vpop.f32.mrb[0].mxu0
    %v2038 = vadd.f32 %v1887, %v2037
    %v2039 = vpop.f32.mrb[0].mxu0
    %2040 = vmatprep.mubr.bf16.mxu0 0
    %2041 = vmatmul.mubr.bf16.gmra.mrb[0].mxu0 %v1859
    %v2042 = vpop.f32.mrb[0].mxu0
    %v2043 = vadd.f32 %v1887, %v2042
    %v2044 = vpop.f32.mrb[0].mxu0
    %v2045 = vpop.f32.mrb[0].mxu0
    %v2046 = vadd.f32 %v1887, %v2045
    %v2047 = vpop.f32.mrb[0].mxu0
    %2048 = vmatprep.mubr.bf16.mxu0 0
    %2049 = vmatmul.mubr.bf16.gmra.mrb[0].mxu0 %v1860
    %v2050 = vpop.f32.mrb[0].mxu0
    %v2051 = vadd.f32 %v1887, %v2050
    %v2052 = vpop.f32.mrb[0].mxu0
    %v2053 = vpop.f32.mrb[0].mxu0
    %v2054 = vadd.f32 %v1887, %v2053
    %v2055 = vpop.f32.mrb[0].mxu0
    %2056 = vmatprep.mubr.bf16.mxu0 0
    %2057 = vmatmul.mubr.bf16.gmra.mrb[0].mxu0 %v1861
    %v2058 = vpop.f32.mrb[0].mxu0
    %v2059 = vadd.f32 %v1887, %v2058
    %v2060 = vpop.f32.mrb[0].mxu0
    %v2061 = vpop.f32.mrb[0].mxu0
    %v2062 = vadd.f32 %v1887, %v2061
    %v2063 = vpop.f32.mrb[0].mxu0
    %2064 = vmatprep.mubr.bf16.mxu0 0
    %2065 = vmatmul.mubr.bf16.gmra.mrb[0].mxu0 %v1862
    %v2066 = vpop.f32.mrb[0].mxu0
    %v2067 = vadd.f32 %v1887, %v2066
    %v2068 = vpop.f32.mrb[0].mxu0
    %v2069 = vpop.f32.mrb[0].mxu0
    %v2070 = vadd.f32 %v1887, %v2069
    %v2071 = vpop.f32.mrb[0].mxu0
    %2072 = vmatprep.mubr.bf16.mxu0 0
    %2073 = vmatmul.mubr.bf16.gmra.mrb[0].mxu0 %v1863
    %v2074 = vpop.f32.mrb[0].mxu0
    %v2075 = vadd.f32 %v1887, %v2074
    %v2076 = vpop.f32.mrb[0].mxu0
    %v2077 = vpop.f32.mrb[0].mxu0
    %v2078 = vadd.f32 %v1887, %v2077
    %v2079 = vpop.f32.mrb[0].mxu0
    %2080 = vmatprep.mubr.bf16.mxu0 0
    %2081 = vmatmul.mubr.bf16.gmra.mrb[0].mxu0 %v1864
    %v2082 = vpop.f32.mrb[0].mxu0
    %v2083 = vadd.f32 %v1887, %v2082
    %v2084 = vpop.f32.mrb[0].mxu0
    %v2085 = vpop.f32.mrb[0].mxu0
    %v2086 = vadd.f32 %v1887, %v2085
    %v2087 = vpop.f32.mrb[0].mxu0
    %2088 = vmatprep.mubr.bf16.mxu0 0
    %2089 = vmatmul.mubr.bf16.gmra.mrb[0].mxu0 %v1865
    %v2090 = vpop.f32.mrb[0].mxu0
    %v2091 = vadd.f32 %v1887, %v2090
    %v2092 = vpop.f32.mrb[0].mxu0
    %v2093 = vpop.f32.mrb[0].mxu0
    %v2094 = vadd.f32 %v1887, %v2093
    %v2095 = vpop.f32.mrb[0].mxu0
    %2096 = vdwg.mxu0
    %v2097 = vmax.f32 %v1971, 0.0
    %v2098 = vmax.f32 %v1974, 0.0
    %v2099 = vmax.f32 %v1979, 0.0
    %v2100 = vmax.f32 %v1982, 0.0
    %v2101 = vmax.f32 %v1987, 0.0
    %v2102 = vmax.f32 %v1990, 0.0
    %v2103 = vmax.f32 %v1995, 0.0
    %v2104 = vmax.f32 %v1998, 0.0
    %v2105 = vmax.f32 %v2003, 0.0
    %v2106 = vmax.f32 %v2006, 0.0
    %v2107 = vmax.f32 %v2011, 0.0
    %v2108 = vmax.f32 %v2014, 0.0
    %v2109 = vmax.f32 %v2019, 0.0
    %v2110 = vmax.f32 %v2022, 0.0
    %v2111 = vmax.f32 %v2027, 0.0
    %v2112 = vmax.f32 %v2030, 0.0
    %v2113 = vmax.f32 %v2035, 0.0
    %v2114 = vmax.f32 %v2038, 0.0
    %v2115 = vmax.f32 %v2043, 0.0
    %v2116 = vmax.f32 %v2046, 0.0
    %v2117 = vmax.f32 %v2051, 0.0
    %v2118 = vmax.f32 %v2054, 0.0
    %v2119 = vmax.f32 %v2059, 0.0
    %v2120 = vmax.f32 %v2062, 0.0
    %v2121 = vmax.f32 %v2067, 0.0
    %v2122 = vmax.f32 %v2070, 0.0
    %v2123 = vmax.f32 %v2075, 0.0
    %v2124 = vmax.f32 %v2078, 0.0
    %v2125 = vmax.f32 %v2083, 0.0
    %v2126 = vmax.f32 %v2086, 0.0
    %v2127 = vmax.f32 %v2091, 0.0
    %v2128 = vmax.f32 %v2094, 0.0
    %v2129 = vpack.c.bf16 %v2098, %v2097
    %v2130 = vpack.c.bf16 %v2100, %v2099
    %v2131 = vpack.c.bf16 %v2102, %v2101
    %v2132 = vpack.c.bf16 %v2104, %v2103
    %v2133 = vpack.c.bf16 %v2106, %v2105
    %v2134 = vpack.c.bf16 %v2108, %v2107
    %v2135 = vpack.c.bf16 %v2110, %v2109
    %v2136 = vpack.c.bf16 %v2112, %v2111
    %v2137 = vpack.c.bf16 %v2114, %v2113
    %v2138 = vpack.c.bf16 %v2116, %v2115
    %v2139 = vpack.c.bf16 %v2118, %v2117
    %v2140 = vpack.c.bf16 %v2120, %v2119
    %v2141 = vpack.c.bf16 %v2122, %v2121
    %v2142 = vpack.c.bf16 %v2124, %v2123
    %v2143 = vpack.c.bf16 %v2126, %v2125
    %v2144 = vpack.c.bf16 %v2128, %v2127
    %s2145 = scalar_lea.vmem [#allocation2], 320
    %v2146 = vld [vmem:[%s2145] sm:$0xf]
    %v2147 = vld [vmem:[%s2145 + $0x4] sm:$0xf]
    %v2148 = vld [vmem:[%s2145 + $0x8] sm:$0xf]
    %v2149 = vld [vmem:[%s2145 + $0xc] sm:$0xf]
    %v2150 = vld [vmem:[%s2145 + $0x10] sm:$0xf]
    %v2151 = vld [vmem:[%s2145 + $0x14] sm:$0xf]
    %v2152 = vld [vmem:[%s2145 + $0x18] sm:$0xf]
    %v2153 = vld [vmem:[%s2145 + $0x1c] sm:$0xf]
    %v2154 = vld [vmem:[%s2145 + $0x20] sm:$0xf]
    %v2155 = vld [vmem:[%s2145 + $0x24] sm:$0xf]
    %v2156 = vld [vmem:[%s2145 + $0x28] sm:$0xf]
    %v2157 = vld [vmem:[%s2145 + $0x2c] sm:$0xf]
    %v2158 = vld [vmem:[%s2145 + $0x30] sm:$0xf]
    %v2159 = vld [vmem:[%s2145 + $0x34] sm:$0xf]
    %v2160 = vld [vmem:[%s2145 + $0x38] sm:$0xf]
    %v2161 = vld [vmem:[%s2145 + $0x3c] sm:$0xf]
    %v2162 = vld [vmem:[%s4 + $0x5] sm:$0x1]
    %v2163 = vlaneseq
    %v2164 = vshrl.u32 %v2163, 7
    %v2165 = vsub.s32 0, %v2164
    %v2166 = vrot.slane %v2162, %v2165
    %v2183 = vunpack.c.l.b16 %v2146
    %v2184 = vunpack.c.l.b16 %v2147
    %v2185 = vunpack.c.l.b16 %v2148
    %v2186 = vunpack.c.l.b16 %v2149
    %v2187 = vunpack.c.l.b16 %v2150
    %v2188 = vunpack.c.l.b16 %v2151
    %v2189 = vunpack.c.l.b16 %v2152
    %v2190 = vunpack.c.l.b16 %v2153
    %v2191 = vunpack.c.l.b16 %v2154
    %v2192 = vunpack.c.l.b16 %v2155
    %v2193 = vunpack.c.l.b16 %v2156
    %v2194 = vunpack.c.l.b16 %v2157
    %v2195 = vunpack.c.l.b16 %v2158
    %v2196 = vunpack.c.l.b16 %v2159
    %v2197 = vunpack.c.l.b16 %v2160
    %v2198 = vunpack.c.l.b16 %v2161
    %v2199 = vpack.c.b16 %v2184, %v2183
    %v2200 = vpack.c.b16 %v2186, %v2185
    %v2201 = vpack.c.b16 %v2188, %v2187
    %v2202 = vpack.c.b16 %v2190, %v2189
    %v2203 = vpack.c.b16 %v2192, %v2191
    %v2204 = vpack.c.b16 %v2194, %v2193
    %v2205 = vpack.c.b16 %v2196, %v2195
    %v2206 = vpack.c.b16 %v2198, %v2197
    %2215 = vmatprep.subr.bf16.mxu0 0
    %2216 = vmatpush1.bf16.msra.mxu0 %v2199
    %2217 = vmatprep.subr.bf16.mxu0 0
    %2218 = vmatpush1.bf16.msra.mxu0 %v2200
    %2219 = vmatprep.subr.bf16.mxu0 0
    %2220 = vmatpush1.bf16.msra.mxu0 %v2201
    %2221 = vmatprep.subr.bf16.mxu0 0
    %2222 = vmatpush1.bf16.msra.mxu0 %v2202
    %2223 = vmatprep.subr.bf16.mxu0 0
    %2224 = vmatpush1.bf16.msra.mxu0 %v2203
    %2225 = vmatprep.subr.bf16.mxu0 0
    %2226 = vmatpush1.bf16.msra.mxu0 %v2204
    %2227 = vmatprep.subr.bf16.mxu0 0
    %2228 = vmatpush1.bf16.msra.mxu0 %v2205
    %2229 = vmatprep.subr.bf16.mxu0 0
    %2230 = vmatpush1.bf16.msra.mxu0 %v2206
    %2231 = vmatprep.subr.bf16.mxu0 0
    %2232 = vmatpush1.bf16.msra.mxu0 0
    %2233 = vmatprep.subr.bf16.mxu0 0
    %2234 = vmatpush1.bf16.msra.mxu0 0
    %2235 = vmatprep.subr.bf16.mxu0 0
    %2236 = vmatpush1.bf16.msra.mxu0 0
    %2237 = vmatprep.subr.bf16.mxu0 0
    %2238 = vmatpush1.bf16.msra.mxu0 0
    %2239 = vmatprep.subr.bf16.mxu0 0
    %2240 = vmatpush1.bf16.msra.mxu0 0
    %2241 = vmatprep.subr.bf16.mxu0 0
    %2242 = vmatpush1.bf16.msra.mxu0 0
    %2243 = vmatprep.subr.bf16.mxu0 0
    %2244 = vmatpush1.bf16.msra.mxu0 0
    %2245 = vmatprep.subr.bf16.mxu0 0
    %2246 = vmatpush1.bf16.msra.mxu0 0
    %2247 = vmatprep.mubr.bf16.mxu0 0
    %2248 = vmatmul.mubr.bf16.gmra.mrb[0].mxu0 %v2129
    %v2249 = vpop.f32.mrb[0].mxu0
    %v2250 = vadd.f32 %v2166, %v2249
    %v2251 = vpop.f32.mrb[0].mxu0
    %v2252 = vpop.f32.mrb[0].mxu0
    %v2253 = vadd.f32 %v2166, %v2252
    %v2254 = vpop.f32.mrb[0].mxu0
    %2255 = vmatprep.mubr.bf16.mxu0 0
    %2256 = vmatmul.mubr.bf16.gmra.mrb[0].mxu0 %v2130
    %v2257 = vpop.f32.mrb[0].mxu0
    %v2258 = vadd.f32 %v2166, %v2257
    %v2259 = vpop.f32.mrb[0].mxu0
    %v2260 = vpop.f32.mrb[0].mxu0
    %v2261 = vadd.f32 %v2166, %v2260
    %v2262 = vpop.f32.mrb[0].mxu0
    %2263 = vmatprep.mubr.bf16.mxu0 0
    %2264 = vmatmul.mubr.bf16.gmra.mrb[0].mxu0 %v2131
    %v2265 = vpop.f32.mrb[0].mxu0
    %v2266 = vadd.f32 %v2166, %v2265
    %v2267 = vpop.f32.mrb[0].mxu0
    %v2268 = vpop.f32.mrb[0].mxu0
    %v2269 = vadd.f32 %v2166, %v2268
    %v2270 = vpop.f32.mrb[0].mxu0
    %2271 = vmatprep.mubr.bf16.mxu0 0
    %2272 = vmatmul.mubr.bf16.gmra.mrb[0].mxu0 %v2132
    %v2273 = vpop.f32.mrb[0].mxu0
    %v2274 = vadd.f32 %v2166, %v2273
    %v2275 = vpop.f32.mrb[0].mxu0
    %v2276 = vpop.f32.mrb[0].mxu0
    %v2277 = vadd.f32 %v2166, %v2276
    %v2278 = vpop.f32.mrb[0].mxu0
    %2279 = vmatprep.mubr.bf16.mxu0 0
    %2280 = vmatmul.mubr.bf16.gmra.mrb[0].mxu0 %v2133
    %v2281 = vpop.f32.mrb[0].mxu0
    %v2282 = vadd.f32 %v2166, %v2281
    %v2283 = vpop.f32.mrb[0].mxu0
    %v2284 = vpop.f32.mrb[0].mxu0
    %v2285 = vadd.f32 %v2166, %v2284
    %v2286 = vpop.f32.mrb[0].mxu0
    %2287 = vmatprep.mubr.bf16.mxu0 0
    %2288 = vmatmul.mubr.bf16.gmra.mrb[0].mxu0 %v2134
    %v2289 = vpop.f32.mrb[0].mxu0
    %v2290 = vadd.f32 %v2166, %v2289
    %v2291 = vpop.f32.mrb[0].mxu0
    %v2292 = vpop.f32.mrb[0].mxu0
    %v2293 = vadd.f32 %v2166, %v2292
    %v2294 = vpop.f32.mrb[0].mxu0
    %2295 = vmatprep.mubr.bf16.mxu0 0
    %2296 = vmatmul.mubr.bf16.gmra.mrb[0].mxu0 %v2135
    %v2297 = vpop.f32.mrb[0].mxu0
    %v2298 = vadd.f32 %v2166, %v2297
    %v2299 = vpop.f32.mrb[0].mxu0
    %v2300 = vpop.f32.mrb[0].mxu0
    %v2301 = vadd.f32 %v2166, %v2300
    %v2302 = vpop.f32.mrb[0].mxu0
    %2303 = vmatprep.mubr.bf16.mxu0 0
    %2304 = vmatmul.mubr.bf16.gmra.mrb[0].mxu0 %v2136
    %v2305 = vpop.f32.mrb[0].mxu0
    %v2306 = vadd.f32 %v2166, %v2305
    %v2307 = vpop.f32.mrb[0].mxu0
    %v2308 = vpop.f32.mrb[0].mxu0
    %v2309 = vadd.f32 %v2166, %v2308
    %v2310 = vpop.f32.mrb[0].mxu0
    %2311 = vmatprep.mubr.bf16.mxu0 0
    %2312 = vmatmul.mubr.bf16.gmra.mrb[0].mxu0 %v2137
    %v2313 = vpop.f32.mrb[0].mxu0
    %v2314 = vadd.f32 %v2166, %v2313
    %v2315 = vpop.f32.mrb[0].mxu0
    %v2316 = vpop.f32.mrb[0].mxu0
    %v2317 = vadd.f32 %v2166, %v2316
    %v2318 = vpop.f32.mrb[0].mxu0
    %2319 = vmatprep.mubr.bf16.mxu0 0
    %2320 = vmatmul.mubr.bf16.gmra.mrb[0].mxu0 %v2138
    %v2321 = vpop.f32.mrb[0].mxu0
    %v2322 = vadd.f32 %v2166, %v2321
    %v2323 = vpop.f32.mrb[0].mxu0
    %v2324 = vpop.f32.mrb[0].mxu0
    %v2325 = vadd.f32 %v2166, %v2324
    %v2326 = vpop.f32.mrb[0].mxu0
    %2327 = vmatprep.mubr.bf16.mxu0 0
    %2328 = vmatmul.mubr.bf16.gmra.mrb[0].mxu0 %v2139
    %v2329 = vpop.f32.mrb[0].mxu0
    %v2330 = vadd.f32 %v2166, %v2329
    %v2331 = vpop.f32.mrb[0].mxu0
    %v2332 = vpop.f32.mrb[0].mxu0
    %v2333 = vadd.f32 %v2166, %v2332
    %v2334 = vpop.f32.mrb[0].mxu0
    %2335 = vmatprep.mubr.bf16.mxu0 0
    %2336 = vmatmul.mubr.bf16.gmra.mrb[0].mxu0 %v2140
    %v2337 = vpop.f32.mrb[0].mxu0
    %v2338 = vadd.f32 %v2166, %v2337
    %v2339 = vpop.f32.mrb[0].mxu0
    %v2340 = vpop.f32.mrb[0].mxu0
    %v2341 = vadd.f32 %v2166, %v2340
    %v2342 = vpop.f32.mrb[0].mxu0
    %2343 = vmatprep.mubr.bf16.mxu0 0
    %2344 = vmatmul.mubr.bf16.gmra.mrb[0].mxu0 %v2141
    %v2345 = vpop.f32.mrb[0].mxu0
    %v2346 = vadd.f32 %v2166, %v2345
    %v2347 = vpop.f32.mrb[0].mxu0
    %v2348 = vpop.f32.mrb[0].mxu0
    %v2349 = vadd.f32 %v2166, %v2348
    %v2350 = vpop.f32.mrb[0].mxu0
    %2351 = vmatprep.mubr.bf16.mxu0 0
    %2352 = vmatmul.mubr.bf16.gmra.mrb[0].mxu0 %v2142
    %v2353 = vpop.f32.mrb[0].mxu0
    %v2354 = vadd.f32 %v2166, %v2353
    %v2355 = vpop.f32.mrb[0].mxu0
    %v2356 = vpop.f32.mrb[0].mxu0
    %v2357 = vadd.f32 %v2166, %v2356
    %v2358 = vpop.f32.mrb[0].mxu0
    %2359 = vmatprep.mubr.bf16.mxu0 0
    %2360 = vmatmul.mubr.bf16.gmra.mrb[0].mxu0 %v2143
    %v2361 = vpop.f32.mrb[0].mxu0
    %v2362 = vadd.f32 %v2166, %v2361
    %v2363 = vpop.f32.mrb[0].mxu0
    %v2364 = vpop.f32.mrb[0].mxu0
    %v2365 = vadd.f32 %v2166, %v2364
    %v2366 = vpop.f32.mrb[0].mxu0
    %2367 = vmatprep.mubr.bf16.mxu0 0
    %2368 = vmatmul.mubr.bf16.gmra.mrb[0].mxu0 %v2144
    %v2369 = vpop.f32.mrb[0].mxu0
    %v2370 = vadd.f32 %v2166, %v2369
    %v2371 = vpop.f32.mrb[0].mxu0
    %v2372 = vpop.f32.mrb[0].mxu0
    %v2373 = vadd.f32 %v2166, %v2372
    %v2374 = vpop.f32.mrb[0].mxu0
    %2375 = vdwg.mxu0
    %v2376 = vmax.f32 %v2250, 0.0
    %v2377 = vmax.f32 %v2253, 0.0
    %v2378 = vmax.f32 %v2258, 0.0
    %v2379 = vmax.f32 %v2261, 0.0
    %v2380 = vmax.f32 %v2266, 0.0
    %v2381 = vmax.f32 %v2269, 0.0
    %v2382 = vmax.f32 %v2274, 0.0
    %v2383 = vmax.f32 %v2277, 0.0
    %v2384 = vmax.f32 %v2282, 0.0
    %v2385 = vmax.f32 %v2285, 0.0
    %v2386 = vmax.f32 %v2290, 0.0
    %v2387 = vmax.f32 %v2293, 0.0
    %v2388 = vmax.f32 %v2298, 0.0
    %v2389 = vmax.f32 %v2301, 0.0
    %v2390 = vmax.f32 %v2306, 0.0
    %v2391 = vmax.f32 %v2309, 0.0
    %v2392 = vmax.f32 %v2314, 0.0
    %v2393 = vmax.f32 %v2317, 0.0
    %v2394 = vmax.f32 %v2322, 0.0
    %v2395 = vmax.f32 %v2325, 0.0
    %v2396 = vmax.f32 %v2330, 0.0
    %v2397 = vmax.f32 %v2333, 0.0
    %v2398 = vmax.f32 %v2338, 0.0
    %v2399 = vmax.f32 %v2341, 0.0
    %v2400 = vmax.f32 %v2346, 0.0
    %v2401 = vmax.f32 %v2349, 0.0
    %v2402 = vmax.f32 %v2354, 0.0
    %v2403 = vmax.f32 %v2357, 0.0
    %v2404 = vmax.f32 %v2362, 0.0
    %v2405 = vmax.f32 %v2365, 0.0
    %v2406 = vmax.f32 %v2370, 0.0
    %v2407 = vmax.f32 %v2373, 0.0
    %v2408 = vpack.c.bf16 %v2377, %v2376
    %v2409 = vpack.c.bf16 %v2379, %v2378
    %v2410 = vpack.c.bf16 %v2381, %v2380
    %v2411 = vpack.c.bf16 %v2383, %v2382
    %v2412 = vpack.c.bf16 %v2385, %v2384
    %v2413 = vpack.c.bf16 %v2387, %v2386
    %v2414 = vpack.c.bf16 %v2389, %v2388
    %v2415 = vpack.c.bf16 %v2391, %v2390
    %v2416 = vpack.c.bf16 %v2393, %v2392
    %v2417 = vpack.c.bf16 %v2395, %v2394
    %v2418 = vpack.c.bf16 %v2397, %v2396
    %v2419 = vpack.c.bf16 %v2399, %v2398
    %v2420 = vpack.c.bf16 %v2401, %v2400
    %v2421 = vpack.c.bf16 %v2403, %v2402
    %v2422 = vpack.c.bf16 %v2405, %v2404
    %v2423 = vpack.c.bf16 %v2407, %v2406
    %s2424 = scalar_lea.vmem [#allocation2], 384
    %v2425 = vld [vmem:[%s2424] sm:$0xf]
    %v2426 = vld [vmem:[%s2424 + $0x4] sm:$0xf]
    %v2427 = vld [vmem:[%s2424 + $0x8] sm:$0xf]
    %v2428 = vld [vmem:[%s2424 + $0xc] sm:$0xf]
    %v2429 = vld [vmem:[%s2424 + $0x10] sm:$0xf]
    %v2430 = vld [vmem:[%s2424 + $0x14] sm:$0xf]
    %v2431 = vld [vmem:[%s2424 + $0x18] sm:$0xf]
    %v2432 = vld [vmem:[%s2424 + $0x1c] sm:$0xf]
    %v2433 = vld [vmem:[%s2424 + $0x20] sm:$0xf]
    %v2434 = vld [vmem:[%s2424 + $0x24] sm:$0xf]
    %v2435 = vld [vmem:[%s2424 + $0x28] sm:$0xf]
    %v2436 = vld [vmem:[%s2424 + $0x2c] sm:$0xf]
    %v2437 = vld [vmem:[%s2424 + $0x30] sm:$0xf]
    %v2438 = vld [vmem:[%s2424 + $0x34] sm:$0xf]
    %v2439 = vld [vmem:[%s2424 + $0x38] sm:$0xf]
    %v2440 = vld [vmem:[%s2424 + $0x3c] sm:$0xf]
    %v2441 = vld [vmem:[%s4 + $0x6] sm:$0x1]
    %v2442 = vlaneseq
    %v2443 = vshrl.u32 %v2442, 7
    %v2444 = vsub.s32 0, %v2443
    %v2445 = vrot.slane %v2441, %v2444
    %v2462 = vunpack.c.l.b16 %v2425
    %v2463 = vunpack.c.l.b16 %v2426
    %v2464 = vunpack.c.l.b16 %v2427
    %v2465 = vunpack.c.l.b16 %v2428
    %v2466 = vunpack.c.l.b16 %v2429
    %v2467 = vunpack.c.l.b16 %v2430
    %v2468 = vunpack.c.l.b16 %v2431
    %v2469 = vunpack.c.l.b16 %v2432
    %v2470 = vunpack.c.l.b16 %v2433
    %v2471 = vunpack.c.l.b16 %v2434
    %v2472 = vunpack.c.l.b16 %v2435
    %v2473 = vunpack.c.l.b16 %v2436
    %v2474 = vunpack.c.l.b16 %v2437
    %v2475 = vunpack.c.l.b16 %v2438
    %v2476 = vunpack.c.l.b16 %v2439
    %v2477 = vunpack.c.l.b16 %v2440
    %v2478 = vpack.c.b16 %v2463, %v2462
    %v2479 = vpack.c.b16 %v2465, %v2464
    %v2480 = vpack.c.b16 %v2467, %v2466
    %v2481 = vpack.c.b16 %v2469, %v2468
    %v2482 = vpack.c.b16 %v2471, %v2470
    %v2483 = vpack.c.b16 %v2473, %v2472
    %v2484 = vpack.c.b16 %v2475, %v2474
    %v2485 = vpack.c.b16 %v2477, %v2476
    %2494 = vmatprep.subr.bf16.mxu0 0
    %2495 = vmatpush1.bf16.msra.mxu0 %v2478
    %2496 = vmatprep.subr.bf16.mxu0 0
    %2497 = vmatpush1.bf16.msra.mxu0 %v2479
    %2498 = vmatprep.subr.bf16.mxu0 0
    %2499 = vmatpush1.bf16.msra.mxu0 %v2480
    %2500 = vmatprep.subr.bf16.mxu0 0
    %2501 = vmatpush1.bf16.msra.mxu0 %v2481
    %2502 = vmatprep.subr.bf16.mxu0 0
    %2503 = vmatpush1.bf16.msra.mxu0 %v2482
    %2504 = vmatprep.subr.bf16.mxu0 0
    %2505 = vmatpush1.bf16.msra.mxu0 %v2483
    %2506 = vmatprep.subr.bf16.mxu0 0
    %2507 = vmatpush1.bf16.msra.mxu0 %v2484
    %2508 = vmatprep.subr.bf16.mxu0 0
    %2509 = vmatpush1.bf16.msra.mxu0 %v2485
    %2510 = vmatprep.subr.bf16.mxu0 0
    %2511 = vmatpush1.bf16.msra.mxu0 0
    %2512 = vmatprep.subr.bf16.mxu0 0
    %2513 = vmatpush1.bf16.msra.mxu0 0
    %2514 = vmatprep.subr.bf16.mxu0 0
    %2515 = vmatpush1.bf16.msra.mxu0 0
    %2516 = vmatprep.subr.bf16.mxu0 0
    %2517 = vmatpush1.bf16.msra.mxu0 0
    %2518 = vmatprep.subr.bf16.mxu0 0
    %2519 = vmatpush1.bf16.msra.mxu0 0
    %2520 = vmatprep.subr.bf16.mxu0 0
    %2521 = vmatpush1.bf16.msra.mxu0 0
    %2522 = vmatprep.subr.bf16.mxu0 0
    %2523 = vmatpush1.bf16.msra.mxu0 0
    %2524 = vmatprep.subr.bf16.mxu0 0
    %2525 = vmatpush1.bf16.msra.mxu0 0
    %2526 = vmatprep.mubr.bf16.mxu0 0
    %2527 = vmatmul.mubr.bf16.gmra.mrb[0].mxu0 %v2408
    %v2528 = vpop.f32.mrb[0].mxu0
    %v2529 = vadd.f32 %v2445, %v2528
    %v2530 = vpop.f32.mrb[0].mxu0
    %v2531 = vpop.f32.mrb[0].mxu0
    %v2532 = vadd.f32 %v2445, %v2531
    %v2533 = vpop.f32.mrb[0].mxu0
    %2534 = vmatprep.mubr.bf16.mxu0 0
    %2535 = vmatmul.mubr.bf16.gmra.mrb[0].mxu0 %v2409
    %v2536 = vpop.f32.mrb[0].mxu0
    %v2537 = vadd.f32 %v2445, %v2536
    %v2538 = vpop.f32.mrb[0].mxu0
    %v2539 = vpop.f32.mrb[0].mxu0
    %v2540 = vadd.f32 %v2445, %v2539
    %v2541 = vpop.f32.mrb[0].mxu0
    %2542 = vmatprep.mubr.bf16.mxu0 0
    %2543 = vmatmul.mubr.bf16.gmra.mrb[0].mxu0 %v2410
    %v2544 = vpop.f32.mrb[0].mxu0
    %v2545 = vadd.f32 %v2445, %v2544
    %v2546 = vpop.f32.mrb[0].mxu0
    %v2547 = vpop.f32.mrb[0].mxu0
    %v2548 = vadd.f32 %v2445, %v2547
    %v2549 = vpop.f32.mrb[0].mxu0
    %2550 = vmatprep.mubr.bf16.mxu0 0
    %2551 = vmatmul.mubr.bf16.gmra.mrb[0].mxu0 %v2411
    %v2552 = vpop.f32.mrb[0].mxu0
    %v2553 = vadd.f32 %v2445, %v2552
    %v2554 = vpop.f32.mrb[0].mxu0
    %v2555 = vpop.f32.mrb[0].mxu0
    %v2556 = vadd.f32 %v2445, %v2555
    %v2557 = vpop.f32.mrb[0].mxu0
    %2558 = vmatprep.mubr.bf16.mxu0 0
    %2559 = vmatmul.mubr.bf16.gmra.mrb[0].mxu0 %v2412
    %v2560 = vpop.f32.mrb[0].mxu0
    %v2561 = vadd.f32 %v2445, %v2560
    %v2562 = vpop.f32.mrb[0].mxu0
    %v2563 = vpop.f32.mrb[0].mxu0
    %v2564 = vadd.f32 %v2445, %v2563
    %v2565 = vpop.f32.mrb[0].mxu0
    %2566 = vmatprep.mubr.bf16.mxu0 0
    %2567 = vmatmul.mubr.bf16.gmra.mrb[0].mxu0 %v2413
    %v2568 = vpop.f32.mrb[0].mxu0
    %v2569 = vadd.f32 %v2445, %v2568
    %v2570 = vpop.f32.mrb[0].mxu0
    %v2571 = vpop.f32.mrb[0].mxu0
    %v2572 = vadd.f32 %v2445, %v2571
    %v2573 = vpop.f32.mrb[0].mxu0
    %2574 = vmatprep.mubr.bf16.mxu0 0
    %2575 = vmatmul.mubr.bf16.gmra.mrb[0].mxu0 %v2414
    %v2576 = vpop.f32.mrb[0].mxu0
    %v2577 = vadd.f32 %v2445, %v2576
    %v2578 = vpop.f32.mrb[0].mxu0
    %v2579 = vpop.f32.mrb[0].mxu0
    %v2580 = vadd.f32 %v2445, %v2579
    %v2581 = vpop.f32.mrb[0].mxu0
    %2582 = vmatprep.mubr.bf16.mxu0 0
    %2583 = vmatmul.mubr.bf16.gmra.mrb[0].mxu0 %v2415
    %v2584 = vpop.f32.mrb[0].mxu0
    %v2585 = vadd.f32 %v2445, %v2584
    %v2586 = vpop.f32.mrb[0].mxu0
    %v2587 = vpop.f32.mrb[0].mxu0
    %v2588 = vadd.f32 %v2445, %v2587
    %v2589 = vpop.f32.mrb[0].mxu0
    %2590 = vmatprep.mubr.bf16.mxu0 0
    %2591 = vmatmul.mubr.bf16.gmra.mrb[0].mxu0 %v2416
    %v2592 = vpop.f32.mrb[0].mxu0
    %v2593 = vadd.f32 %v2445, %v2592
    %v2594 = vpop.f32.mrb[0].mxu0
    %v2595 = vpop.f32.mrb[0].mxu0
    %v2596 = vadd.f32 %v2445, %v2595
    %v2597 = vpop.f32.mrb[0].mxu0
    %2598 = vmatprep.mubr.bf16.mxu0 0
    %2599 = vmatmul.mubr.bf16.gmra.mrb[0].mxu0 %v2417
    %v2600 = vpop.f32.mrb[0].mxu0
    %v2601 = vadd.f32 %v2445, %v2600
    %v2602 = vpop.f32.mrb[0].mxu0
    %v2603 = vpop.f32.mrb[0].mxu0
    %v2604 = vadd.f32 %v2445, %v2603
    %v2605 = vpop.f32.mrb[0].mxu0
    %2606 = vmatprep.mubr.bf16.mxu0 0
    %2607 = vmatmul.mubr.bf16.gmra.mrb[0].mxu0 %v2418
    %v2608 = vpop.f32.mrb[0].mxu0
    %v2609 = vadd.f32 %v2445, %v2608
    %v2610 = vpop.f32.mrb[0].mxu0
    %v2611 = vpop.f32.mrb[0].mxu0
    %v2612 = vadd.f32 %v2445, %v2611
    %v2613 = vpop.f32.mrb[0].mxu0
    %2614 = vmatprep.mubr.bf16.mxu0 0
    %2615 = vmatmul.mubr.bf16.gmra.mrb[0].mxu0 %v2419
    %v2616 = vpop.f32.mrb[0].mxu0
    %v2617 = vadd.f32 %v2445, %v2616
    %v2618 = vpop.f32.mrb[0].mxu0
    %v2619 = vpop.f32.mrb[0].mxu0
    %v2620 = vadd.f32 %v2445, %v2619
    %v2621 = vpop.f32.mrb[0].mxu0
    %2622 = vmatprep.mubr.bf16.mxu0 0
    %2623 = vmatmul.mubr.bf16.gmra.mrb[0].mxu0 %v2420
    %v2624 = vpop.f32.mrb[0].mxu0
    %v2625 = vadd.f32 %v2445, %v2624
    %v2626 = vpop.f32.mrb[0].mxu0
    %v2627 = vpop.f32.mrb[0].mxu0
    %v2628 = vadd.f32 %v2445, %v2627
    %v2629 = vpop.f32.mrb[0].mxu0
    %2630 = vmatprep.mubr.bf16.mxu0 0
    %2631 = vmatmul.mubr.bf16.gmra.mrb[0].mxu0 %v2421
    %v2632 = vpop.f32.mrb[0].mxu0
    %v2633 = vadd.f32 %v2445, %v2632
    %v2634 = vpop.f32.mrb[0].mxu0
    %v2635 = vpop.f32.mrb[0].mxu0
    %v2636 = vadd.f32 %v2445, %v2635
    %v2637 = vpop.f32.mrb[0].mxu0
    %2638 = vmatprep.mubr.bf16.mxu0 0
    %2639 = vmatmul.mubr.bf16.gmra.mrb[0].mxu0 %v2422
    %v2640 = vpop.f32.mrb[0].mxu0
    %v2641 = vadd.f32 %v2445, %v2640
    %v2642 = vpop.f32.mrb[0].mxu0
    %v2643 = vpop.f32.mrb[0].mxu0
    %v2644 = vadd.f32 %v2445, %v2643
    %v2645 = vpop.f32.mrb[0].mxu0
    %2646 = vmatprep.mubr.bf16.mxu0 0
    %2647 = vmatmul.mubr.bf16.gmra.mrb[0].mxu0 %v2423
    %v2648 = vpop.f32.mrb[0].mxu0
    %v2649 = vadd.f32 %v2445, %v2648
    %v2650 = vpop.f32.mrb[0].mxu0
    %v2651 = vpop.f32.mrb[0].mxu0
    %v2652 = vadd.f32 %v2445, %v2651
    %v2653 = vpop.f32.mrb[0].mxu0
    %2654 = vdwg.mxu0
    %v2655 = vmax.f32 %v2529, 0.0
    %v2656 = vmax.f32 %v2532, 0.0
    %v2657 = vmax.f32 %v2537, 0.0
    %v2658 = vmax.f32 %v2540, 0.0
    %v2659 = vmax.f32 %v2545, 0.0
    %v2660 = vmax.f32 %v2548, 0.0
    %v2661 = vmax.f32 %v2553, 0.0
    %v2662 = vmax.f32 %v2556, 0.0
    %v2663 = vmax.f32 %v2561, 0.0
    %v2664 = vmax.f32 %v2564, 0.0
    %v2665 = vmax.f32 %v2569, 0.0
    %v2666 = vmax.f32 %v2572, 0.0
    %v2667 = vmax.f32 %v2577, 0.0
    %v2668 = vmax.f32 %v2580, 0.0
    %v2669 = vmax.f32 %v2585, 0.0
    %v2670 = vmax.f32 %v2588, 0.0
    %v2671 = vmax.f32 %v2593, 0.0
    %v2672 = vmax.f32 %v2596, 0.0
    %v2673 = vmax.f32 %v2601, 0.0
    %v2674 = vmax.f32 %v2604, 0.0
    %v2675 = vmax.f32 %v2609, 0.0
    %v2676 = vmax.f32 %v2612, 0.0
    %v2677 = vmax.f32 %v2617, 0.0
    %v2678 = vmax.f32 %v2620, 0.0
    %v2679 = vmax.f32 %v2625, 0.0
    %v2680 = vmax.f32 %v2628, 0.0
    %v2681 = vmax.f32 %v2633, 0.0
    %v2682 = vmax.f32 %v2636, 0.0
    %v2683 = vmax.f32 %v2641, 0.0
    %v2684 = vmax.f32 %v2644, 0.0
    %v2685 = vmax.f32 %v2649, 0.0
    %v2686 = vmax.f32 %v2652, 0.0
    %v2687 = vld [vmem:[%s5] sm:$0x1]
    %v2688 = vlaneseq
    %v2689 = vshrl.u32 %v2688, 7
    %v2690 = vsub.s32 0, %v2689
    %v2691 = vrot.slane %v2687, %v2690
    %v2692 = vmul.f32 %v2655, %v2691
    %v2693 = vmul.f32 %v2656, %v2691
    %v2694 = vmul.f32 %v2657, %v2691
    %v2695 = vmul.f32 %v2658, %v2691
    %v2696 = vmul.f32 %v2659, %v2691
    %v2697 = vmul.f32 %v2660, %v2691
    %v2698 = vmul.f32 %v2661, %v2691
    %v2699 = vmul.f32 %v2662, %v2691
    %v2700 = vmul.f32 %v2663, %v2691
    %v2701 = vmul.f32 %v2664, %v2691
    %v2702 = vmul.f32 %v2665, %v2691
    %v2703 = vmul.f32 %v2666, %v2691
    %v2704 = vmul.f32 %v2667, %v2691
    %v2705 = vmul.f32 %v2668, %v2691
    %v2706 = vmul.f32 %v2669, %v2691
    %v2707 = vmul.f32 %v2670, %v2691
    %v2708 = vmul.f32 %v2671, %v2691
    %v2709 = vmul.f32 %v2672, %v2691
    %v2710 = vmul.f32 %v2673, %v2691
    %v2711 = vmul.f32 %v2674, %v2691
    %v2712 = vmul.f32 %v2675, %v2691
    %v2713 = vmul.f32 %v2676, %v2691
    %v2714 = vmul.f32 %v2677, %v2691
    %v2715 = vmul.f32 %v2678, %v2691
    %v2716 = vmul.f32 %v2679, %v2691
    %v2717 = vmul.f32 %v2680, %v2691
    %v2718 = vmul.f32 %v2681, %v2691
    %v2719 = vmul.f32 %v2682, %v2691
    %v2720 = vmul.f32 %v2683, %v2691
    %v2721 = vmul.f32 %v2684, %v2691
    %v2722 = vmul.f32 %v2685, %v2691
    %v2723 = vmul.f32 %v2686, %v2691
    %2724 = vadd.xlane.f32.xlu0 %v2692
    %v2725 = vpop.xlane.xlu0 %2724
    %2726 = vadd.xlane.f32.xlu0 %v2693
    %v2727 = vpop.xlane.xlu0 %2726
    %2728 = vadd.xlane.f32.xlu0 %v2694
    %v2729 = vpop.xlane.xlu0 %2728
    %2730 = vadd.xlane.f32.xlu0 %v2695
    %v2731 = vpop.xlane.xlu0 %2730
    %2732 = vadd.xlane.f32.xlu0 %v2696
    %v2733 = vpop.xlane.xlu0 %2732
    %2734 = vadd.xlane.f32.xlu0 %v2697
    %v2735 = vpop.xlane.xlu0 %2734
    %2736 = vadd.xlane.f32.xlu0 %v2698
    %v2737 = vpop.xlane.xlu0 %2736
    %2738 = vadd.xlane.f32.xlu0 %v2699
    %v2739 = vpop.xlane.xlu0 %2738
    %2740 = vadd.xlane.f32.xlu0 %v2700
    %v2741 = vpop.xlane.xlu0 %2740
    %2742 = vadd.xlane.f32.xlu0 %v2701
    %v2743 = vpop.xlane.xlu0 %2742
    %2744 = vadd.xlane.f32.xlu0 %v2702
    %v2745 = vpop.xlane.xlu0 %2744
    %2746 = vadd.xlane.f32.xlu0 %v2703
    %v2747 = vpop.xlane.xlu0 %2746
    %2748 = vadd.xlane.f32.xlu0 %v2704
    %v2749 = vpop.xlane.xlu0 %2748
    %2750 = vadd.xlane.f32.xlu0 %v2705
    %v2751 = vpop.xlane.xlu0 %2750
    %2752 = vadd.xlane.f32.xlu0 %v2706
    %v2753 = vpop.xlane.xlu0 %2752
    %2754 = vadd.xlane.f32.xlu0 %v2707
    %v2755 = vpop.xlane.xlu0 %2754
    %2756 = vadd.xlane.f32.xlu0 %v2708
    %v2757 = vpop.xlane.xlu0 %2756
    %2758 = vadd.xlane.f32.xlu0 %v2709
    %v2759 = vpop.xlane.xlu0 %2758
    %2760 = vadd.xlane.f32.xlu0 %v2710
    %v2761 = vpop.xlane.xlu0 %2760
    %2762 = vadd.xlane.f32.xlu0 %v2711
    %v2763 = vpop.xlane.xlu0 %2762
    %2764 = vadd.xlane.f32.xlu0 %v2712
    %v2765 = vpop.xlane.xlu0 %2764
    %2766 = vadd.xlane.f32.xlu0 %v2713
    %v2767 = vpop.xlane.xlu0 %2766
    %2768 = vadd.xlane.f32.xlu0 %v2714
    %v2769 = vpop.xlane.xlu0 %2768
    %2770 = vadd.xlane.f32.xlu0 %v2715
    %v2771 = vpop.xlane.xlu0 %2770
    %2772 = vadd.xlane.f32.xlu0 %v2716
    %v2773 = vpop.xlane.xlu0 %2772
    %2774 = vadd.xlane.f32.xlu0 %v2717
    %v2775 = vpop.xlane.xlu0 %2774
    %2776 = vadd.xlane.f32.xlu0 %v2718
    %v2777 = vpop.xlane.xlu0 %2776
    %2778 = vadd.xlane.f32.xlu0 %v2719
    %v2779 = vpop.xlane.xlu0 %2778
    %2780 = vadd.xlane.f32.xlu0 %v2720
    %v2781 = vpop.xlane.xlu0 %2780
    %2782 = vadd.xlane.f32.xlu0 %v2721
    %v2783 = vpop.xlane.xlu0 %2782
    %2784 = vadd.xlane.f32.xlu0 %v2722
    %v2785 = vpop.xlane.xlu0 %2784
    %2786 = vadd.xlane.f32.xlu0 %v2723
    %v2787 = vpop.xlane.xlu0 %2786
    %v2788 = vld [vmem:[%s5 + $0x1] sm:$0x1]
    %v2789 = vlaneseq
    %v2790 = vshrl.u32 %v2789, 7
    %v2791 = vsub.s32 0, %v2790
    %v2792 = vrot.slane %v2788, %v2791
    %v2793 = vmul.f32 %v2655, %v2792
    %v2794 = vmul.f32 %v2656, %v2792
    %v2795 = vmul.f32 %v2657, %v2792
    %v2796 = vmul.f32 %v2658, %v2792
    %v2797 = vmul.f32 %v2659, %v2792
    %v2798 = vmul.f32 %v2660, %v2792
    %v2799 = vmul.f32 %v2661, %v2792
    %v2800 = vmul.f32 %v2662, %v2792
    %v2801 = vmul.f32 %v2663, %v2792
    %v2802 = vmul.f32 %v2664, %v2792
    %v2803 = vmul.f32 %v2665, %v2792
    %v2804 = vmul.f32 %v2666, %v2792
    %v2805 = vmul.f32 %v2667, %v2792
    %v2806 = vmul.f32 %v2668, %v2792
    %v2807 = vmul.f32 %v2669, %v2792
    %v2808 = vmul.f32 %v2670, %v2792
    %v2809 = vmul.f32 %v2671, %v2792
    %v2810 = vmul.f32 %v2672, %v2792
    %v2811 = vmul.f32 %v2673, %v2792
    %v2812 = vmul.f32 %v2674, %v2792
    %v2813 = vmul.f32 %v2675, %v2792
    %v2814 = vmul.f32 %v2676, %v2792
    %v2815 = vmul.f32 %v2677, %v2792
    %v2816 = vmul.f32 %v2678, %v2792
    %v2817 = vmul.f32 %v2679, %v2792
    %v2818 = vmul.f32 %v2680, %v2792
    %v2819 = vmul.f32 %v2681, %v2792
    %v2820 = vmul.f32 %v2682, %v2792
    %v2821 = vmul.f32 %v2683, %v2792
    %v2822 = vmul.f32 %v2684, %v2792
    %v2823 = vmul.f32 %v2685, %v2792
    %v2824 = vmul.f32 %v2686, %v2792
    %2825 = vadd.xlane.f32.xlu0 %v2793
    %v2826 = vpop.xlane.xlu0 %2825
    %2827 = vadd.xlane.f32.xlu0 %v2794
    %v2828 = vpop.xlane.xlu0 %2827
    %2829 = vadd.xlane.f32.xlu0 %v2795
    %v2830 = vpop.xlane.xlu0 %2829
    %2831 = vadd.xlane.f32.xlu0 %v2796
    %v2832 = vpop.xlane.xlu0 %2831
    %2833 = vadd.xlane.f32.xlu0 %v2797
    %v2834 = vpop.xlane.xlu0 %2833
    %2835 = vadd.xlane.f32.xlu0 %v2798
    %v2836 = vpop.xlane.xlu0 %2835
    %2837 = vadd.xlane.f32.xlu0 %v2799
    %v2838 = vpop.xlane.xlu0 %2837
    %2839 = vadd.xlane.f32.xlu0 %v2800
    %v2840 = vpop.xlane.xlu0 %2839
    %2841 = vadd.xlane.f32.xlu0 %v2801
    %v2842 = vpop.xlane.xlu0 %2841
    %2843 = vadd.xlane.f32.xlu0 %v2802
    %v2844 = vpop.xlane.xlu0 %2843
    %2845 = vadd.xlane.f32.xlu0 %v2803
    %v2846 = vpop.xlane.xlu0 %2845
    %2847 = vadd.xlane.f32.xlu0 %v2804
    %v2848 = vpop.xlane.xlu0 %2847
    %2849 = vadd.xlane.f32.xlu0 %v2805
    %v2850 = vpop.xlane.xlu0 %2849
    %2851 = vadd.xlane.f32.xlu0 %v2806
    %v2852 = vpop.xlane.xlu0 %2851
    %2853 = vadd.xlane.f32.xlu0 %v2807
    %v2854 = vpop.xlane.xlu0 %2853
    %2855 = vadd.xlane.f32.xlu0 %v2808
    %v2856 = vpop.xlane.xlu0 %2855
    %2857 = vadd.xlane.f32.xlu0 %v2809
    %v2858 = vpop.xlane.xlu0 %2857
    %2859 = vadd.xlane.f32.xlu0 %v2810
    %v2860 = vpop.xlane.xlu0 %2859
    %2861 = vadd.xlane.f32.xlu0 %v2811
    %v2862 = vpop.xlane.xlu0 %2861
    %2863 = vadd.xlane.f32.xlu0 %v2812
    %v2864 = vpop.xlane.xlu0 %2863
    %2865 = vadd.xlane.f32.xlu0 %v2813
    %v2866 = vpop.xlane.xlu0 %2865
    %2867 = vadd.xlane.f32.xlu0 %v2814
    %v2868 = vpop.xlane.xlu0 %2867
    %2869 = vadd.xlane.f32.xlu0 %v2815
    %v2870 = vpop.xlane.xlu0 %2869
    %2871 = vadd.xlane.f32.xlu0 %v2816
    %v2872 = vpop.xlane.xlu0 %2871
    %2873 = vadd.xlane.f32.xlu0 %v2817
    %v2874 = vpop.xlane.xlu0 %2873
    %2875 = vadd.xlane.f32.xlu0 %v2818
    %v2876 = vpop.xlane.xlu0 %2875
    %2877 = vadd.xlane.f32.xlu0 %v2819
    %v2878 = vpop.xlane.xlu0 %2877
    %2879 = vadd.xlane.f32.xlu0 %v2820
    %v2880 = vpop.xlane.xlu0 %2879
    %2881 = vadd.xlane.f32.xlu0 %v2821
    %v2882 = vpop.xlane.xlu0 %2881
    %2883 = vadd.xlane.f32.xlu0 %v2822
    %v2884 = vpop.xlane.xlu0 %2883
    %2885 = vadd.xlane.f32.xlu0 %v2823
    %v2886 = vpop.xlane.xlu0 %2885
    %2887 = vadd.xlane.f32.xlu0 %v2824
    %v2888 = vpop.xlane.xlu0 %2887
    %v2889 = vld [vmem:[%s5 + $0x2] sm:$0x1]
    %v2890 = vlaneseq
    %v2891 = vshrl.u32 %v2890, 7
    %v2892 = vsub.s32 0, %v2891
    %v2893 = vrot.slane %v2889, %v2892
    %v2894 = vmul.f32 %v2655, %v2893
    %v2895 = vmul.f32 %v2656, %v2893
    %v2896 = vmul.f32 %v2657, %v2893
    %v2897 = vmul.f32 %v2658, %v2893
    %v2898 = vmul.f32 %v2659, %v2893
    %v2899 = vmul.f32 %v2660, %v2893
    %v2900 = vmul.f32 %v2661, %v2893
    %v2901 = vmul.f32 %v2662, %v2893
    %v2902 = vmul.f32 %v2663, %v2893
    %v2903 = vmul.f32 %v2664, %v2893
    %v2904 = vmul.f32 %v2665, %v2893
    %v2905 = vmul.f32 %v2666, %v2893
    %v2906 = vmul.f32 %v2667, %v2893
    %v2907 = vmul.f32 %v2668, %v2893
    %v2908 = vmul.f32 %v2669, %v2893
    %v2909 = vmul.f32 %v2670, %v2893
    %v2910 = vmul.f32 %v2671, %v2893
    %v2911 = vmul.f32 %v2672, %v2893
    %v2912 = vmul.f32 %v2673, %v2893
    %v2913 = vmul.f32 %v2674, %v2893
    %v2914 = vmul.f32 %v2675, %v2893
    %v2915 = vmul.f32 %v2676, %v2893
    %v2916 = vmul.f32 %v2677, %v2893
    %v2917 = vmul.f32 %v2678, %v2893
    %v2918 = vmul.f32 %v2679, %v2893
    %v2919 = vmul.f32 %v2680, %v2893
    %v2920 = vmul.f32 %v2681, %v2893
    %v2921 = vmul.f32 %v2682, %v2893
    %v2922 = vmul.f32 %v2683, %v2893
    %v2923 = vmul.f32 %v2684, %v2893
    %v2924 = vmul.f32 %v2685, %v2893
    %v2925 = vmul.f32 %v2686, %v2893
    %2926 = vadd.xlane.f32.xlu0 %v2894
    %v2927 = vpop.xlane.xlu0 %2926
    %2928 = vadd.xlane.f32.xlu0 %v2895
    %v2929 = vpop.xlane.xlu0 %2928
    %2930 = vadd.xlane.f32.xlu0 %v2896
    %v2931 = vpop.xlane.xlu0 %2930
    %2932 = vadd.xlane.f32.xlu0 %v2897
    %v2933 = vpop.xlane.xlu0 %2932
    %2934 = vadd.xlane.f32.xlu0 %v2898
    %v2935 = vpop.xlane.xlu0 %2934
    %2936 = vadd.xlane.f32.xlu0 %v2899
    %v2937 = vpop.xlane.xlu0 %2936
    %2938 = vadd.xlane.f32.xlu0 %v2900
    %v2939 = vpop.xlane.xlu0 %2938
    %2940 = vadd.xlane.f32.xlu0 %v2901
    %v2941 = vpop.xlane.xlu0 %2940
    %2942 = vadd.xlane.f32.xlu0 %v2902
    %v2943 = vpop.xlane.xlu0 %2942
    %2944 = vadd.xlane.f32.xlu0 %v2903
    %v2945 = vpop.xlane.xlu0 %2944
    %2946 = vadd.xlane.f32.xlu0 %v2904
    %v2947 = vpop.xlane.xlu0 %2946
    %2948 = vadd.xlane.f32.xlu0 %v2905
    %v2949 = vpop.xlane.xlu0 %2948
    %2950 = vadd.xlane.f32.xlu0 %v2906
    %v2951 = vpop.xlane.xlu0 %2950
    %2952 = vadd.xlane.f32.xlu0 %v2907
    %v2953 = vpop.xlane.xlu0 %2952
    %2954 = vadd.xlane.f32.xlu0 %v2908
    %v2955 = vpop.xlane.xlu0 %2954
    %2956 = vadd.xlane.f32.xlu0 %v2909
    %v2957 = vpop.xlane.xlu0 %2956
    %2958 = vadd.xlane.f32.xlu0 %v2910
    %v2959 = vpop.xlane.xlu0 %2958
    %2960 = vadd.xlane.f32.xlu0 %v2911
    %v2961 = vpop.xlane.xlu0 %2960
    %2962 = vadd.xlane.f32.xlu0 %v2912
    %v2963 = vpop.xlane.xlu0 %2962
    %2964 = vadd.xlane.f32.xlu0 %v2913
    %v2965 = vpop.xlane.xlu0 %2964
    %2966 = vadd.xlane.f32.xlu0 %v2914
    %v2967 = vpop.xlane.xlu0 %2966
    %2968 = vadd.xlane.f32.xlu0 %v2915
    %v2969 = vpop.xlane.xlu0 %2968
    %2970 = vadd.xlane.f32.xlu0 %v2916
    %v2971 = vpop.xlane.xlu0 %2970
    %2972 = vadd.xlane.f32.xlu0 %v2917
    %v2973 = vpop.xlane.xlu0 %2972
    %2974 = vadd.xlane.f32.xlu0 %v2918
    %v2975 = vpop.xlane.xlu0 %2974
    %2976 = vadd.xlane.f32.xlu0 %v2919
    %v2977 = vpop.xlane.xlu0 %2976
    %2978 = vadd.xlane.f32.xlu0 %v2920
    %v2979 = vpop.xlane.xlu0 %2978
    %2980 = vadd.xlane.f32.xlu0 %v2921
    %v2981 = vpop.xlane.xlu0 %2980
    %2982 = vadd.xlane.f32.xlu0 %v2922
    %v2983 = vpop.xlane.xlu0 %2982
    %2984 = vadd.xlane.f32.xlu0 %v2923
    %v2985 = vpop.xlane.xlu0 %2984
    %2986 = vadd.xlane.f32.xlu0 %v2924
    %v2987 = vpop.xlane.xlu0 %2986
    %2988 = vadd.xlane.f32.xlu0 %v2925
    %v2989 = vpop.xlane.xlu0 %2988
    %vm2990 = vcmask 7168
    %v2991 = vsel %vm2990, %v2725, %v2826
    %v2992 = vsel %vm2990, %v2727, %v2828
    %v2993 = vsel %vm2990, %v2729, %v2830
    %v2994 = vsel %vm2990, %v2731, %v2832
    %v2995 = vsel %vm2990, %v2733, %v2834
    %v2996 = vsel %vm2990, %v2735, %v2836
    %v2997 = vsel %vm2990, %v2737, %v2838
    %v2998 = vsel %vm2990, %v2739, %v2840
    %v2999 = vsel %vm2990, %v2741, %v2842
    %v3000 = vsel %vm2990, %v2743, %v2844
    %v3001 = vsel %vm2990, %v2745, %v2846
    %v3002 = vsel %vm2990, %v2747, %v2848
    %v3003 = vsel %vm2990, %v2749, %v2850
    %v3004 = vsel %vm2990, %v2751, %v2852
    %v3005 = vsel %vm2990, %v2753, %v2854
    %v3006 = vsel %vm2990, %v2755, %v2856
    %v3007 = vsel %vm2990, %v2757, %v2858
    %v3008 = vsel %vm2990, %v2759, %v2860
    %v3009 = vsel %vm2990, %v2761, %v2862
    %v3010 = vsel %vm2990, %v2763, %v2864
    %v3011 = vsel %vm2990, %v2765, %v2866
    %v3012 = vsel %vm2990, %v2767, %v2868
    %v3013 = vsel %vm2990, %v2769, %v2870
    %v3014 = vsel %vm2990, %v2771, %v2872
    %v3015 = vsel %vm2990, %v2773, %v2874
    %v3016 = vsel %vm2990, %v2775, %v2876
    %v3017 = vsel %vm2990, %v2777, %v2878
    %v3018 = vsel %vm2990, %v2779, %v2880
    %v3019 = vsel %vm2990, %v2781, %v2882
    %v3020 = vsel %vm2990, %v2783, %v2884
    %v3021 = vsel %vm2990, %v2785, %v2886
    %v3022 = vsel %vm2990, %v2787, %v2888
    %vm3023 = vcmask 15360
    %v3024 = vsel %vm3023, %v2991, %v2927
    %v3025 = vsel %vm3023, %v2992, %v2929
    %v3026 = vsel %vm3023, %v2993, %v2931
    %v3027 = vsel %vm3023, %v2994, %v2933
    %v3028 = vsel %vm3023, %v2995, %v2935
    %v3029 = vsel %vm3023, %v2996, %v2937
    %v3030 = vsel %vm3023, %v2997, %v2939
    %v3031 = vsel %vm3023, %v2998, %v2941
    %v3032 = vsel %vm3023, %v2999, %v2943
    %v3033 = vsel %vm3023, %v3000, %v2945
    %v3034 = vsel %vm3023, %v3001, %v2947
    %v3035 = vsel %vm3023, %v3002, %v2949
    %v3036 = vsel %vm3023, %v3003, %v2951
    %v3037 = vsel %vm3023, %v3004, %v2953
    %v3038 = vsel %vm3023, %v3005, %v2955
    %v3039 = vsel %vm3023, %v3006, %v2957
    %v3040 = vsel %vm3023, %v3007, %v2959
    %v3041 = vsel %vm3023, %v3008, %v2961
    %v3042 = vsel %vm3023, %v3009, %v2963
    %v3043 = vsel %vm3023, %v3010, %v2965
    %v3044 = vsel %vm3023, %v3011, %v2967
    %v3045 = vsel %vm3023, %v3012, %v2969
    %v3046 = vsel %vm3023, %v3013, %v2971
    %v3047 = vsel %vm3023, %v3014, %v2973
    %v3048 = vsel %vm3023, %v3015, %v2975
    %v3049 = vsel %vm3023, %v3016, %v2977
    %v3050 = vsel %vm3023, %v3017, %v2979
    %v3051 = vsel %vm3023, %v3018, %v2981
    %v3052 = vsel %vm3023, %v3019, %v2983
    %v3053 = vsel %vm3023, %v3020, %v2985
    %v3054 = vsel %vm3023, %v3021, %v2987
    %v3055 = vsel %vm3023, %v3022, %v2989
    %v3056 = vld [vmem:[%s6] sm:$0x1]
    %v3058 = vlaneseq
    %v3059 = vshrl.u32 %v3058, 7
    %v3060 = vsub.s32 0, %v3059
    %v3061 = vrot.slane %v3056, %v3060
    %v3063 = vadd.f32 %v3024, %v3061
    %v3064 = vadd.f32 %v3025, %v3061
    %v3065 = vadd.f32 %v3026, %v3061
    %v3066 = vadd.f32 %v3027, %v3061
    %v3067 = vadd.f32 %v3028, %v3061
    %v3068 = vadd.f32 %v3029, %v3061
    %v3069 = vadd.f32 %v3030, %v3061
    %v3070 = vadd.f32 %v3031, %v3061
    %v3071 = vadd.f32 %v3032, %v3061
    %v3072 = vadd.f32 %v3033, %v3061
    %v3073 = vadd.f32 %v3034, %v3061
    %v3074 = vadd.f32 %v3035, %v3061
    %v3075 = vadd.f32 %v3036, %v3061
    %v3076 = vadd.f32 %v3037, %v3061
    %v3077 = vadd.f32 %v3038, %v3061
    %v3078 = vadd.f32 %v3039, %v3061
    %v3079 = vadd.f32 %v3040, %v3061
    %v3080 = vadd.f32 %v3041, %v3061
    %v3081 = vadd.f32 %v3042, %v3061
    %v3082 = vadd.f32 %v3043, %v3061
    %v3083 = vadd.f32 %v3044, %v3061
    %v3084 = vadd.f32 %v3045, %v3061
    %v3085 = vadd.f32 %v3046, %v3061
    %v3086 = vadd.f32 %v3047, %v3061
    %v3087 = vadd.f32 %v3048, %v3061
    %v3088 = vadd.f32 %v3049, %v3061
    %v3089 = vadd.f32 %v3050, %v3061
    %v3090 = vadd.f32 %v3051, %v3061
    %v3091 = vadd.f32 %v3052, %v3061
    %v3092 = vadd.f32 %v3053, %v3061
    %v3093 = vadd.f32 %v3054, %v3061
    %v3094 = vadd.f32 %v3055, %v3061
    %vm3095 = vcmask 23552
    %3096 = vst.msk [vmem:[%s7] sm:$0xff] %vm3095, %v3063
    %3097 = vst.msk [vmem:[%s7 + $0x8] sm:$0xff] %vm3095, %v3064
    %3098 = vst.msk [vmem:[%s7 + $0x10] sm:$0xff] %vm3095, %v3065
    %3099 = vst.msk [vmem:[%s7 + $0x18] sm:$0xff] %vm3095, %v3066
    %3100 = vst.msk [vmem:[%s7 + $0x20] sm:$0xff] %vm3095, %v3067
    %3101 = vst.msk [vmem:[%s7 + $0x28] sm:$0xff] %vm3095, %v3068
    %3102 = vst.msk [vmem:[%s7 + $0x30] sm:$0xff] %vm3095, %v3069
    %3103 = vst.msk [vmem:[%s7 + $0x38] sm:$0xff] %vm3095, %v3070
    %3104 = vst.msk [vmem:[%s7 + $0x40] sm:$0xff] %vm3095, %v3071
    %3105 = vst.msk [vmem:[%s7 + $0x48] sm:$0xff] %vm3095, %v3072
    %3106 = vst.msk [vmem:[%s7 + $0x50] sm:$0xff] %vm3095, %v3073
    %3107 = vst.msk [vmem:[%s7 + $0x58] sm:$0xff] %vm3095, %v3074
    %3108 = vst.msk [vmem:[%s7 + $0x60] sm:$0xff] %vm3095, %v3075
    %3109 = vst.msk [vmem:[%s7 + $0x68] sm:$0xff] %vm3095, %v3076
    %3110 = vst.msk [vmem:[%s7 + $0x70] sm:$0xff] %vm3095, %v3077
    %3111 = vst.msk [vmem:[%s7 + $0x78] sm:$0xff] %vm3095, %v3078
    %3112 = vst.msk [vmem:[%s7 + $0x80] sm:$0xff] %vm3095, %v3079
    %3113 = vst.msk [vmem:[%s7 + $0x88] sm:$0xff] %vm3095, %v3080
    %3114 = vst.msk [vmem:[%s7 + $0x90] sm:$0xff] %vm3095, %v3081
    %3115 = vst.msk [vmem:[%s7 + $0x98] sm:$0xff] %vm3095, %v3082
    %3116 = vst.msk [vmem:[%s7 + $0xa0] sm:$0xff] %vm3095, %v3083
    %3117 = vst.msk [vmem:[%s7 + $0xa8] sm:$0xff] %vm3095, %v3084
    %3118 = vst.msk [vmem:[%s7 + $0xb0] sm:$0xff] %vm3095, %v3085
    %3119 = vst.msk [vmem:[%s7 + $0xb8] sm:$0xff] %vm3095, %v3086
    %3120 = vst.msk [vmem:[%s7 + $0xc0] sm:$0xff] %vm3095, %v3087
    %3121 = vst.msk [vmem:[%s7 + $0xc8] sm:$0xff] %vm3095, %v3088
    %3122 = vst.msk [vmem:[%s7 + $0xd0] sm:$0xff] %vm3095, %v3089
    %3123 = vst.msk [vmem:[%s7 + $0xd8] sm:$0xff] %vm3095, %v3090
    %3124 = vst.msk [vmem:[%s7 + $0xe0] sm:$0xff] %vm3095, %v3091
    %3125 = vst.msk [vmem:[%s7 + $0xe8] sm:$0xff] %vm3095, %v3092
    %3126 = vst.msk [vmem:[%s7 + $0xf0] sm:$0xff] %vm3095, %v3093
    %3127 = vst.msk [vmem:[%s7 + $0xf8] sm:$0xff] %vm3095, %v3094
    // Predicated region
    $region34: #{tpu_custom_call.1} parent=1 // pred_check
      _
    $region35: #{tpu_custom_call.1} parent=1 // pred_check_branch
      %3129 = sbr.rel (0) target = $region37
    $region36: #{tpu_custom_call.1} parent=1 // pred_region
      _
    $region37: #{tpu_custom_call.1} parent=1 // pred_fallthru
      _
    // Predicated region
    $region38: #{tpu_custom_call.1} parent=1 // pred_check
      _
    $region39: #{tpu_custom_call.1} parent=1 // pred_check_branch
      %3131 = sbr.rel (0) target = $region41
    $region40: #{tpu_custom_call.1} parent=1 // pred_region
      _
    $region41: #{tpu_custom_call.1} parent=1 // pred_fallthru
      _
    %3132 = vsyncpa [#allocation3], 1

</llo_original>
